<compile_context>
chip_gen: v6e
topology: v6e:2x2x1
jax: 0.10.0
libtpu: 0.0.40
codegen_flags: <defaults>
</compile_context>

<pallas_src>
import functools

import jax
import jax.numpy as jnp
import numpy as np
from jax.experimental import pallas as pl
from jax.experimental.pallas import tpu as pltpu


def _vae_kernel(x_ref, eps4_ref,
                w1_ref, b1_ref, w2_ref, b2_ref, w3_ref, b3_ref,
                wh_ref, bh_ref,
                d1w_ref, d1b_ref, d2w_ref, d2b_ref, d3w_ref, d3b_ref,
                out_ref):
    w1 = w1_ref[...]
    wdt = w1.dtype                                # weight/compute dtype (bf16)

    x = x_ref[...].astype(wdt)

    # ---- encoder: Linear(1280,512)+ReLU, Linear(512,128)+ReLU,
    #               Linear(128,32)+LeakyReLU(0.01) ----
    h = jnp.dot(x, w1, preferred_element_type=jnp.float32) + b1_ref[...]
    h = jnp.maximum(h, 0.0)
    h = jnp.dot(h.astype(wdt), w2_ref[...],
                preferred_element_type=jnp.float32) + b2_ref[...]
    h = jnp.maximum(h, 0.0)
    h = jnp.dot(h.astype(wdt), w3_ref[...],
                preferred_element_type=jnp.float32) + b3_ref[...]
    h = jnp.where(h >= 0.0, h, 0.01 * h)          # nn.LeakyReLU() default slope

    # ---- fused heads: columns = [mu0, mu1, log_var0, log_var1] ----
    head = jnp.dot(h.astype(wdt), wh_ref[...],
                   preferred_element_type=jnp.float32) + bh_ref[...]

    # ---- reparametrize folded into dec1:
    #      z = mu + exp(0.5*log_var) * eps
    #      z @ Wd1 == mu @ Wd1 + (exp(0.5*log_var)*eps) @ Wd1
    # t columns = [mu0, mu1, sigma0*eps0, sigma1*eps1];  d1w_ref == [Wd1; Wd1]
    lane = jax.lax.broadcasted_iota(jnp.int32, head.shape, dimension=1)
    t = jnp.where(lane < 2, head, jnp.exp(0.5 * head) * eps4_ref[...])

    # ---- decoder: Linear(2,128)+ReLU, Linear(128,512)+ReLU, Linear(512,1280) ----
    d = jnp.dot(t.astype(wdt), d1w_ref[...],
                preferred_element_type=jnp.float32) + d1b_ref[...]
    d = jnp.maximum(d, 0.0)
    d = jnp.dot(d.astype(wdt), d2w_ref[...],
                preferred_element_type=jnp.float32) + d2b_ref[...]
    d = jnp.maximum(d, 0.0)
    d = jnp.dot(d.astype(wdt), d3w_ref[...],
                preferred_element_type=jnp.float32) + d3b_ref[...]

    out_ref[...] = d.astype(out_ref.dtype)


_LAYER_DIMS = (
    ("enc1", 1280, 512), ("enc2", 512, 128), ("enc3", 128, 32),
    ("mu", 32, 2), ("lv", 32, 2),
    ("dec1", 2, 128), ("dec2", 128, 512), ("dec3", 512, 1280),
)


def init_vae_params(key, weight_dtype=jnp.bfloat16):
    """PyTorch nn.Linear-style init: U(-1/sqrt(fan_in), +1/sqrt(fan_in)).
    Weights stored transposed as (in, out) in `weight_dtype`; biases (1, out) f32."""
    params = {}
    for name, fan_in, fan_out in _LAYER_DIMS:
        key, kw, kb = jax.random.split(key, 3)
        bound = 1.0 / float(np.sqrt(fan_in))
        params[name + "_w"] = jax.random.uniform(
            kw, (fan_in, fan_out), jnp.float32, -bound, bound).astype(weight_dtype)
        params[name + "_b"] = jax.random.uniform(
            kb, (1, fan_out), jnp.float32, -bound, bound)
    return params


@functools.partial(jax.jit, static_argnames=("tile_b",))
def vae_forward(x, eps, params, *, tile_b=256):
    """Pallas TPU forward of the VAE.  x: (B, ...) -> flattened (B, 1280);
    eps: (B, 2) standard-normal draws (the torch.randn in reparametrize)."""
    batch = x.shape[0]
    x2d = x.reshape(batch, -1).astype(jnp.float32)   # == x.view(batch_size, -1)
    feat = x2d.shape[1]
    assert feat == 1280, "flattened feature dim must be 1280"

    # Batch tile: at least 8 sublanes, at most `tile_b`; pad batch to a multiple.
    tb = min(tile_b, int(pl.cdiv(batch, 8)) * 8)
    padded = int(pl.cdiv(batch, tb)) * tb

    eps4 = jnp.tile(eps.astype(jnp.float32), (1, 2))        # [e0, e1, e0, e1]
    if padded != batch:
        pad = ((0, padded - batch), (0, 0))
        x2d = jnp.pad(x2d, pad)
        eps4 = jnp.pad(eps4, pad)

    # Fuse the two heads; duplicate dec1 rows for the folded reparametrize matmul.
    head_w = jnp.concatenate([params["mu_w"], params["lv_w"]], axis=1)       # (32, 4)
    head_b = jnp.concatenate([params["mu_b"], params["lv_b"]], axis=1)       # (1, 4)
    dec1_w2 = jnp.concatenate([params["dec1_w"], params["dec1_w"]], axis=0)  # (4, 128)

    weights = (
        params["enc1_w"], params["enc1_b"],
        params["enc2_w"], params["enc2_b"],
        params["enc3_w"], params["enc3_b"],
        head_w, head_b,
        dec1_w2, params["dec1_b"],
        params["dec2_w"], params["dec2_b"],
        params["dec3_w"], params["dec3_b"],
    )

    batch_map = lambda i: (i, 0)   # x / eps / out blocks walk the batch axis
    const_map = lambda i: (0, 0)   # weights: same block each step -> VMEM-resident

    in_specs = [pl.BlockSpec((tb, feat), batch_map),
                pl.BlockSpec((tb, 4), batch_map)]
    in_specs += [pl.BlockSpec(w.shape, const_map) for w in weights]

    out = pl.pallas_call(
        _vae_kernel,
        grid=(padded // tb,),
        in_specs=in_specs,
        out_specs=pl.BlockSpec((tb, feat), batch_map),
        out_shape=jax.ShapeDtypeStruct((padded, feat), jnp.float32),
        compiler_params=pltpu.CompilerParams(
            dimension_semantics=("parallel",),
            vmem_limit_bytes=32 << 20),
    )(x2d, eps4, *weights)

    return out[:batch]


def vae_reference(x, eps, params):
    """Pure-JAX (XLA) f32 forward with the same stored parameters."""
    x2d = x.reshape(x.shape[0], -1).astype(jnp.float32)
    w = lambda n: params[n + "_w"].astype(jnp.float32)
    b = lambda n: params[n + "_b"]
    h = jnp.maximum(x2d @ w("enc1") + b("enc1"), 0.0)
    h = jnp.maximum(h @ w("enc2") + b("enc2"), 0.0)
    h = h @ w("enc3") + b("enc3")
    h = jnp.where(h >= 0.0, h, 0.01 * h)
    mu = h @ w("mu") + b("mu")
    log_var = h @ w("lv") + b("lv")
    z = mu + jnp.exp(0.5 * log_var) * eps
    d = jnp.maximum(z @ w("dec1") + b("dec1"), 0.0)
    d = jnp.maximum(d @ w("dec2") + b("dec2"), 0.0)
    return d @ w("dec3") + b("dec3")


if __name__ == "__main__":
    key = jax.random.PRNGKey(0)
    k_params, k_x, k_eps = jax.random.split(key, 3)

    # NCHW example input: (B=2, C=4, H=16, W=20) -> x.view(B, -1) == (2, 1280)
    x = jax.random.normal(k_x, (2, 4, 16, 20), dtype=jnp.float32)
    # eps replaces torch.randn(mu.size(0), mu.size(1)) inside reparametrize
    eps = jax.random.normal(k_eps, (2, 2), dtype=jnp.float32)

    params = init_vae_params(k_params)

    out = vae_forward(x, eps, params)
    jax.block_until_ready(out)
    assert out.shape == (2, 1280)
    assert bool(jnp.all(jnp.isfinite(out)))

    # Cross-check vs plain-XLA f32 forward (bf16 weight/activation rounding in
    # the kernel => loose tolerance).
    ref = vae_reference(x, eps, params)
    np.testing.assert_allclose(np.asarray(out), np.asarray(ref),
                               atol=5e-2, rtol=5e-2)

    print("KERNEL_OK")
</pallas_src>

<mosaic_0001>
module attributes {stable_mosaic.version = 11 : i64} {
  func.func @_vae_kernel(%arg0: i32, %arg1: memref<8x1280xf32, #tpu.memory_space<vmem>>, %arg2: memref<8x4xf32, #tpu.memory_space<vmem>>, %arg3: memref<1280x512xbf16, #tpu.memory_space<vmem>>, %arg4: memref<1x512xf32, #tpu.memory_space<vmem>>, %arg5: memref<512x128xbf16, #tpu.memory_space<vmem>>, %arg6: memref<1x128xf32, #tpu.memory_space<vmem>>, %arg7: memref<128x32xbf16, #tpu.memory_space<vmem>>, %arg8: memref<1x32xf32, #tpu.memory_space<vmem>>, %arg9: memref<32x4xbf16, #tpu.memory_space<vmem>>, %arg10: memref<1x4xf32, #tpu.memory_space<vmem>>, %arg11: memref<4x128xbf16, #tpu.memory_space<vmem>>, %arg12: memref<1x128xf32, #tpu.memory_space<vmem>>, %arg13: memref<128x512xbf16, #tpu.memory_space<vmem>>, %arg14: memref<1x512xf32, #tpu.memory_space<vmem>>, %arg15: memref<512x1280xbf16, #tpu.memory_space<vmem>>, %arg16: memref<1x1280xf32, #tpu.memory_space<vmem>>, %arg17: memref<8x1280xf32, #tpu.memory_space<vmem>>) attributes {dimension_semantics = [#tpu.dimension_semantics<parallel>], iteration_bounds = array<i64: 1>, scalar_prefetch = 0 : i64, scratch_operands = 0 : i64, tpu.core_type = #tpu.core_type<tc>, window_params = [{transform_indices = @transform_0, window_bounds = array<i64: 8, 1280>}, {transform_indices = @transform_1, window_bounds = array<i64: 8, 4>}, {pipeline_mode = #tpu.pipeline_mode<synchronous>, transform_indices = @transform_2, window_bounds = array<i64: 1280, 512>}, {pipeline_mode = #tpu.pipeline_mode<synchronous>, transform_indices = @transform_3, window_bounds = array<i64: 1, 512>}, {pipeline_mode = #tpu.pipeline_mode<synchronous>, transform_indices = @transform_4, window_bounds = array<i64: 512, 128>}, {pipeline_mode = #tpu.pipeline_mode<synchronous>, transform_indices = @transform_5, window_bounds = array<i64: 1, 128>}, {pipeline_mode = #tpu.pipeline_mode<synchronous>, transform_indices = @transform_6, window_bounds = array<i64: 128, 32>}, {pipeline_mode = #tpu.pipeline_mode<synchronous>, transform_indices = @transform_7, window_bounds = array<i64: 1, 32>}, {pipeline_mode = #tpu.pipeline_mode<synchronous>, transform_indices = @transform_8, window_bounds = array<i64: 32, 4>}, {pipeline_mode = #tpu.pipeline_mode<synchronous>, transform_indices = @transform_9, window_bounds = array<i64: 1, 4>}, {pipeline_mode = #tpu.pipeline_mode<synchronous>, transform_indices = @transform_10, window_bounds = array<i64: 4, 128>}, {pipeline_mode = #tpu.pipeline_mode<synchronous>, transform_indices = @transform_11, window_bounds = array<i64: 1, 128>}, {pipeline_mode = #tpu.pipeline_mode<synchronous>, transform_indices = @transform_12, window_bounds = array<i64: 128, 512>}, {pipeline_mode = #tpu.pipeline_mode<synchronous>, transform_indices = @transform_13, window_bounds = array<i64: 1, 512>}, {pipeline_mode = #tpu.pipeline_mode<synchronous>, transform_indices = @transform_14, window_bounds = array<i64: 512, 1280>}, {pipeline_mode = #tpu.pipeline_mode<synchronous>, transform_indices = @transform_15, window_bounds = array<i64: 1, 1280>}, {transform_indices = @transform_16, window_bounds = array<i64: 8, 1280>}]} {
    %c0 = arith.constant 0 : index
    %c0_0 = arith.constant 0 : index
    %0 = vector.load %arg3[%c0, %c0_0] : memref<1280x512xbf16, #tpu.memory_space<vmem>>, vector<1280x512xbf16>
    %c0_1 = arith.constant 0 : index
    %c0_2 = arith.constant 0 : index
    %1 = vector.load %arg1[%c0_1, %c0_2] : memref<8x1280xf32, #tpu.memory_space<vmem>>, vector<8x1280xf32>
    %2 = arith.truncf %1 : vector<8x1280xf32> to vector<8x1280xbf16>
    %cst = arith.constant dense<0.000000e+00> : vector<8x512xf32>
    %3 = tpu.matmul %2, %0, %cst {dimension_numbers = #tpu.dot_dimension_numbers<[1], [0], [0], [1], [0, 0, 1, 1], [], []>} : vector<8x1280xbf16>, vector<1280x512xbf16>, vector<8x512xf32> -> vector<8x512xf32>
    %c0_3 = arith.constant 0 : index
    %c0_4 = arith.constant 0 : index
    %4 = vector.load %arg4[%c0_3, %c0_4] : memref<1x512xf32, #tpu.memory_space<vmem>>, vector<1x512xf32>
    %5 = vector.broadcast %4 : vector<1x512xf32> to vector<8x512xf32>
    %6 = arith.addf %3, %5 : vector<8x512xf32>
    %cst_5 = arith.constant 0.000000e+00 : f32
    %7 = vector.broadcast %cst_5 : f32 to vector<8x512xf32>
    %8 = arith.maximumf %6, %7 : vector<8x512xf32>
    %9 = arith.truncf %8 : vector<8x512xf32> to vector<8x512xbf16>
    %c0_6 = arith.constant 0 : index
    %c0_7 = arith.constant 0 : index
    %10 = vector.load %arg5[%c0_6, %c0_7] : memref<512x128xbf16, #tpu.memory_space<vmem>>, vector<512x128xbf16>
    %cst_8 = arith.constant dense<0.000000e+00> : vector<8x128xf32>
    %11 = tpu.matmul %9, %10, %cst_8 {dimension_numbers = #tpu.dot_dimension_numbers<[1], [0], [0], [1], [0, 0, 1, 1], [], []>} : vector<8x512xbf16>, vector<512x128xbf16>, vector<8x128xf32> -> vector<8x128xf32>
    %c0_9 = arith.constant 0 : index
    %c0_10 = arith.constant 0 : index
    %12 = vector.load %arg6[%c0_9, %c0_10] : memref<1x128xf32, #tpu.memory_space<vmem>>, vector<1x128xf32>
    %13 = vector.broadcast %12 : vector<1x128xf32> to vector<8x128xf32>
    %14 = arith.addf %11, %13 : vector<8x128xf32>
    %cst_11 = arith.constant 0.000000e+00 : f32
    %15 = vector.broadcast %cst_11 : f32 to vector<8x128xf32>
    %16 = arith.maximumf %14, %15 : vector<8x128xf32>
    %17 = arith.truncf %16 : vector<8x128xf32> to vector<8x128xbf16>
    %c0_12 = arith.constant 0 : index
    %c0_13 = arith.constant 0 : index
    %18 = vector.load %arg7[%c0_12, %c0_13] : memref<128x32xbf16, #tpu.memory_space<vmem>>, vector<128x32xbf16>
    %cst_14 = arith.constant dense<0.000000e+00> : vector<8x32xf32>
    %19 = tpu.matmul %17, %18, %cst_14 {dimension_numbers = #tpu.dot_dimension_numbers<[1], [0], [0], [1], [0, 0, 1, 1], [], []>} : vector<8x128xbf16>, vector<128x32xbf16>, vector<8x32xf32> -> vector<8x32xf32>
    %c0_15 = arith.constant 0 : index
    %c0_16 = arith.constant 0 : index
    %20 = vector.load %arg8[%c0_15, %c0_16] : memref<1x32xf32, #tpu.memory_space<vmem>>, vector<1x32xf32>
    %21 = vector.broadcast %20 : vector<1x32xf32> to vector<8x32xf32>
    %22 = arith.addf %19, %21 : vector<8x32xf32>
    %cst_17 = arith.constant 0.000000e+00 : f32
    %23 = vector.broadcast %cst_17 : f32 to vector<8x32xf32>
    %24 = arith.cmpf oge, %22, %23 : vector<8x32xf32>
    %cst_18 = arith.constant 0.00999999977 : f32
    %25 = vector.broadcast %cst_18 : f32 to vector<8x32xf32>
    %26 = arith.mulf %25, %22 : vector<8x32xf32>
    %27 = arith.select %24, %22, %26 : vector<8x32xi1>, vector<8x32xf32>
    %28 = arith.truncf %27 : vector<8x32xf32> to vector<8x32xbf16>
    %c0_19 = arith.constant 0 : index
    %c0_20 = arith.constant 0 : index
    %29 = vector.load %arg9[%c0_19, %c0_20] : memref<32x4xbf16, #tpu.memory_space<vmem>>, vector<32x4xbf16>
    %cst_21 = arith.constant dense<0.000000e+00> : vector<8x4xf32>
    %30 = tpu.matmul %28, %29, %cst_21 {dimension_numbers = #tpu.dot_dimension_numbers<[1], [0], [0], [1], [0, 0, 1, 1], [], []>} : vector<8x32xbf16>, vector<32x4xbf16>, vector<8x4xf32> -> vector<8x4xf32>
    %c0_22 = arith.constant 0 : index
    %c0_23 = arith.constant 0 : index
    %31 = vector.load %arg10[%c0_22, %c0_23] : memref<1x4xf32, #tpu.memory_space<vmem>>, vector<1x4xf32>
    %32 = vector.broadcast %31 : vector<1x4xf32> to vector<8x4xf32>
    %33 = arith.addf %30, %32 : vector<8x4xf32>
    %34 = tpu.iota {dimensions = array<i32: 1>} : vector<8x4xi32>
    %c2_i32 = arith.constant 2 : i32
    %35 = vector.broadcast %c2_i32 : i32 to vector<8x4xi32>
    %36 = arith.cmpi slt, %34, %35 : vector<8x4xi32>
    %cst_24 = arith.constant 5.000000e-01 : f32
    %37 = vector.broadcast %cst_24 : f32 to vector<8x4xf32>
    %38 = arith.mulf %37, %33 : vector<8x4xf32>
    %39 = math.exp %38 : vector<8x4xf32>
    %c0_25 = arith.constant 0 : index
    %c0_26 = arith.constant 0 : index
    %40 = vector.load %arg2[%c0_25, %c0_26] : memref<8x4xf32, #tpu.memory_space<vmem>>, vector<8x4xf32>
    %41 = arith.mulf %39, %40 : vector<8x4xf32>
    %42 = arith.select %36, %33, %41 : vector<8x4xi1>, vector<8x4xf32>
    %43 = arith.truncf %42 : vector<8x4xf32> to vector<8x4xbf16>
    %c0_27 = arith.constant 0 : index
    %c0_28 = arith.constant 0 : index
    %44 = vector.load %arg11[%c0_27, %c0_28] : memref<4x128xbf16, #tpu.memory_space<vmem>>, vector<4x128xbf16>
    %cst_29 = arith.constant dense<0.000000e+00> : vector<8x128xf32>
    %45 = tpu.matmul %43, %44, %cst_29 {dimension_numbers = #tpu.dot_dimension_numbers<[1], [0], [0], [1], [0, 0, 1, 1], [], []>} : vector<8x4xbf16>, vector<4x128xbf16>, vector<8x128xf32> -> vector<8x128xf32>
    %c0_30 = arith.constant 0 : index
    %c0_31 = arith.constant 0 : index
    %46 = vector.load %arg12[%c0_30, %c0_31] : memref<1x128xf32, #tpu.memory_space<vmem>>, vector<1x128xf32>
    %47 = vector.broadcast %46 : vector<1x128xf32> to vector<8x128xf32>
    %48 = arith.addf %45, %47 : vector<8x128xf32>
    %cst_32 = arith.constant 0.000000e+00 : f32
    %49 = vector.broadcast %cst_32 : f32 to vector<8x128xf32>
    %50 = arith.maximumf %48, %49 : vector<8x128xf32>
    %51 = arith.truncf %50 : vector<8x128xf32> to vector<8x128xbf16>
    %c0_33 = arith.constant 0 : index
    %c0_34 = arith.constant 0 : index
    %52 = vector.load %arg13[%c0_33, %c0_34] : memref<128x512xbf16, #tpu.memory_space<vmem>>, vector<128x512xbf16>
    %cst_35 = arith.constant dense<0.000000e+00> : vector<8x512xf32>
    %53 = tpu.matmul %51, %52, %cst_35 {dimension_numbers = #tpu.dot_dimension_numbers<[1], [0], [0], [1], [0, 0, 1, 1], [], []>} : vector<8x128xbf16>, vector<128x512xbf16>, vector<8x512xf32> -> vector<8x512xf32>
    %c0_36 = arith.constant 0 : index
    %c0_37 = arith.constant 0 : index
    %54 = vector.load %arg14[%c0_36, %c0_37] : memref<1x512xf32, #tpu.memory_space<vmem>>, vector<1x512xf32>
    %55 = vector.broadcast %54 : vector<1x512xf32> to vector<8x512xf32>
    %56 = arith.addf %53, %55 : vector<8x512xf32>
    %cst_38 = arith.constant 0.000000e+00 : f32
    %57 = vector.broadcast %cst_38 : f32 to vector<8x512xf32>
    %58 = arith.maximumf %56, %57 : vector<8x512xf32>
    %59 = arith.truncf %58 : vector<8x512xf32> to vector<8x512xbf16>
    %c0_39 = arith.constant 0 : index
    %c0_40 = arith.constant 0 : index
    %60 = vector.load %arg15[%c0_39, %c0_40] : memref<512x1280xbf16, #tpu.memory_space<vmem>>, vector<512x1280xbf16>
    %cst_41 = arith.constant dense<0.000000e+00> : vector<8x1280xf32>
    %61 = tpu.matmul %59, %60, %cst_41 {dimension_numbers = #tpu.dot_dimension_numbers<[1], [0], [0], [1], [0, 0, 1, 1], [], []>} : vector<8x512xbf16>, vector<512x1280xbf16>, vector<8x1280xf32> -> vector<8x1280xf32>
    %c0_42 = arith.constant 0 : index
    %c0_43 = arith.constant 0 : index
    %62 = vector.load %arg16[%c0_42, %c0_43] : memref<1x1280xf32, #tpu.memory_space<vmem>>, vector<1x1280xf32>
    %63 = vector.broadcast %62 : vector<1x1280xf32> to vector<8x1280xf32>
    %64 = arith.addf %61, %63 : vector<8x1280xf32>
    %c0_44 = arith.constant 0 : index
    %c0_45 = arith.constant 0 : index
    %65 = vector.load %arg17[%c0_44, %c0_45] : memref<8x1280xf32, #tpu.memory_space<vmem>>, vector<8x1280xf32>
    tpu.vector_store %arg17[%c0_44, %c0_45], %64 {strides = array<i32>} : memref<8x1280xf32, #tpu.memory_space<vmem>>, vector<8x1280xf32>,
    return
  }
  func.func @transform_0(%arg0: i32) -> (i32, i32) {
    %c0_i32 = arith.constant 0 : i32
    %c0_i32_0 = arith.constant 0 : i32
    return %arg0, %c0_i32 : i32, i32
  }
  func.func @transform_1(%arg0: i32) -> (i32, i32) {
    %c0_i32 = arith.constant 0 : i32
    %c0_i32_0 = arith.constant 0 : i32
    return %arg0, %c0_i32 : i32, i32
  }
  func.func @transform_2(%arg0: i32) -> (i32, i32) {
    %c0_i32 = arith.constant 0 : i32
    %c0_i32_0 = arith.constant 0 : i32
    %c0_i32_1 = arith.constant 0 : i32
    return %c0_i32, %c0_i32_0 : i32, i32
  }
  func.func @transform_3(%arg0: i32) -> (i32, i32) {
    %c0_i32 = arith.constant 0 : i32
    %c0_i32_0 = arith.constant 0 : i32
    %c0_i32_1 = arith.constant 0 : i32
    return %c0_i32, %c0_i32_0 : i32, i32
  }
  func.func @transform_4(%arg0: i32) -> (i32, i32) {
    %c0_i32 = arith.constant 0 : i32
    %c0_i32_0 = arith.constant 0 : i32
    %c0_i32_1 = arith.constant 0 : i32
    return %c0_i32, %c0_i32_0 : i32, i32
  }
  func.func @transform_5(%arg0: i32) -> (i32, i32) {
    %c0_i32 = arith.constant 0 : i32
    %c0_i32_0 = arith.constant 0 : i32
    %c0_i32_1 = arith.constant 0 : i32
    return %c0_i32, %c0_i32_0 : i32, i32
  }
  func.func @transform_6(%arg0: i32) -> (i32, i32) {
    %c0_i32 = arith.constant 0 : i32
    %c0_i32_0 = arith.constant 0 : i32
    %c0_i32_1 = arith.constant 0 : i32
    return %c0_i32, %c0_i32_0 : i32, i32
  }
  func.func @transform_7(%arg0: i32) -> (i32, i32) {
    %c0_i32 = arith.constant 0 : i32
    %c0_i32_0 = arith.constant 0 : i32
    %c0_i32_1 = arith.constant 0 : i32
    return %c0_i32, %c0_i32_0 : i32, i32
  }
  func.func @transform_8(%arg0: i32) -> (i32, i32) {
    %c0_i32 = arith.constant 0 : i32
    %c0_i32_0 = arith.constant 0 : i32
    %c0_i32_1 = arith.constant 0 : i32
    return %c0_i32, %c0_i32_0 : i32, i32
  }
  func.func @transform_9(%arg0: i32) -> (i32, i32) {
    %c0_i32 = arith.constant 0 : i32
    %c0_i32_0 = arith.constant 0 : i32
    %c0_i32_1 = arith.constant 0 : i32
    return %c0_i32, %c0_i32_0 : i32, i32
  }
  func.func @transform_10(%arg0: i32) -> (i32, i32) {
    %c0_i32 = arith.constant 0 : i32
    %c0_i32_0 = arith.constant 0 : i32
    %c0_i32_1 = arith.constant 0 : i32
    return %c0_i32, %c0_i32_0 : i32, i32
  }
  func.func @transform_11(%arg0: i32) -> (i32, i32) {
    %c0_i32 = arith.constant 0 : i32
    %c0_i32_0 = arith.constant 0 : i32
    %c0_i32_1 = arith.constant 0 : i32
    return %c0_i32, %c0_i32_0 : i32, i32
  }
  func.func @transform_12(%arg0: i32) -> (i32, i32) {
    %c0_i32 = arith.constant 0 : i32
    %c0_i32_0 = arith.constant 0 : i32
    %c0_i32_1 = arith.constant 0 : i32
    return %c0_i32, %c0_i32_0 : i32, i32
  }
  func.func @transform_13(%arg0: i32) -> (i32, i32) {
    %c0_i32 = arith.constant 0 : i32
    %c0_i32_0 = arith.constant 0 : i32
    %c0_i32_1 = arith.constant 0 : i32
    return %c0_i32, %c0_i32_0 : i32, i32
  }
  func.func @transform_14(%arg0: i32) -> (i32, i32) {
    %c0_i32 = arith.constant 0 : i32
    %c0_i32_0 = arith.constant 0 : i32
    %c0_i32_1 = arith.constant 0 : i32
    return %c0_i32, %c0_i32_0 : i32, i32
  }
  func.func @transform_15(%arg0: i32) -> (i32, i32) {
    %c0_i32 = arith.constant 0 : i32
    %c0_i32_0 = arith.constant 0 : i32
    %c0_i32_1 = arith.constant 0 : i32
    return %c0_i32, %c0_i32_0 : i32, i32
  }
  func.func @transform_16(%arg0: i32) -> (i32, i32) {
    %c0_i32 = arith.constant 0 : i32
    %c0_i32_0 = arith.constant 0 : i32
    return %arg0, %c0_i32 : i32, i32
  }
}

</mosaic_0001>

<llo_original>
// kernel: tile.9
$region0: #{tile.9}
  %s0 = inlined_call_operand.vmem [shape: f32[2,2,2], index: 0, kind: input, shape index: {}]
  %s1 = inlined_call_operand.vmem [shape: f32[2,4], index: 1, kind: output, shape index: {}]
  $region1: #{tile.9} parent=0
    #allocation0 [shape = 'u8[4096]{0}', space=vmem, size = 0x1000, scoped, tag = 'scoped mem for output reshape']
    #allocation1 [shape = 'u8[8192]{0}', space=vmem, size = 0x2000, scoped, tag = 'scoped mem for input reshape']
    %s3 = sshll.u32 1, 2
    %s4 = ssub.s32 %s3, 1
    %s5 = scalar_lea.vmem %s0, 2
    %v6 = vld [vmem:[%s5] sm:%s4]
    %s7 = scalar_lea.vmem [#allocation1], 8
    %8 = vst [vmem:[%s7] sm:%s4] %v6
    %v9 = vld [vmem:[%s0] sm:%s4]
    %10 = vst [vmem:[#allocation1] sm:%s4] %v9
    %s11 = smov 3
    %v12 = vld [vmem:[#allocation1] ss:$8 sm:%s11]
    %vm13 = vcmask 15360
    %14 = vst.msk [vmem:[#allocation0] sm:$0x3] %vm13, %v12
    %s15 = scalar_lea.vmem [#allocation1], 1
    %s16 = smov 3
    %v17 = vld [vmem:[%s15] ss:$8 sm:%s16]
    %18 = vrot.lane.b32.xlu0 %v17, 2
    %v19 = vpop.permute.xlu0 %18
    %vm20 = vcmask 31760
    %21 = vst.msk [vmem:[#allocation0] sm:$0x3] %vm20, %v19
    %s23 = sshll.u32 1, 2
    %s24 = ssub.s32 %s23, 1
    %v26 = vld [vmem:[#allocation0] sm:%s24]
    %s27 = sshll.u32 1, 2
    %s28 = ssub.s32 %s27, 1
    %29 = vst [vmem:[%s1] sm:%s28] %v26

// kernel: vae_forward.1
$region0: #{vae_forward.1}
  #allocation0 [shape = 'u32[]', space=smem, size = 0x4, offset = 0x4, fixed_abs, tag = 'smem constant byte address 0x4 - core index']
  #allocation1 [shape = 'u32[144,128]{1,0:T(1,128)}', space=vmem, size = 0x12000, scoped, tag = 'internal scratch']
  %s0 = inlined_call_operand.vmem [shape: f32[8,1280], index: 0, kind: input, shape index: {}]
  %s1 = inlined_call_operand.vmem [shape: f32[8,4], index: 1, kind: input, shape index: {}]
  %s2 = inlined_call_operand.hbm [shape: bf16[1280,512], index: 2, kind: input, shape index: {}]
  %s3 = inlined_call_operand.hbm [shape: f32[1,512], index: 3, kind: input, shape index: {}]
  %s4 = inlined_call_operand.hbm [shape: bf16[512,128], index: 4, kind: input, shape index: {}]
  %s5 = inlined_call_operand.hbm [shape: f32[1,128], index: 5, kind: input, shape index: {}]
  %s6 = inlined_call_operand.vmem [shape: bf16[128,32], index: 6, kind: input, shape index: {}]
  %s7 = inlined_call_operand.hbm [shape: f32[1,32], index: 7, kind: input, shape index: {}]
  %s8 = inlined_call_operand.vmem [shape: bf16[32,4], index: 8, kind: input, shape index: {}]
  %s9 = inlined_call_operand.vmem [shape: f32[1,4], index: 9, kind: input, shape index: {}]
  %s10 = inlined_call_operand.vmem [shape: bf16[4,128], index: 10, kind: input, shape index: {}]
  %s11 = inlined_call_operand.hbm [shape: f32[1,128], index: 11, kind: input, shape index: {}]
  %s12 = inlined_call_operand.hbm [shape: bf16[128,512], index: 12, kind: input, shape index: {}]
  %s13 = inlined_call_operand.hbm [shape: f32[1,512], index: 13, kind: input, shape index: {}]
  %s14 = inlined_call_operand.hbm [shape: bf16[512,1280], index: 14, kind: input, shape index: {}]
  %s15 = inlined_call_operand.hbm [shape: f32[1,1280], index: 15, kind: input, shape index: {}]
  %s16 = inlined_call_operand.vmem [shape: f32[8,1280], index: 16, kind: output, shape index: {}]
  %s17 = sld [smem:[#allocation0]]
  $region114: #{vae_forward.1} parent=0
    _
  %s19 = ssub.s32 1, %s17
  %s20 = scalar_select 0, %s19, %s17
  $region1: #{vae_forward.1} parent=0
    #allocation2 [shape = 'u8[1310720]{0}', space=vmem, size = 0x140000, scoped, tag = 'input window, operand 2, single buffered']
    #allocation3 [shape = 's32[1]{0}', space=sflag, size = 0x4, scoped, tag = 'scoped memory for vae_forward.1']
    #allocation4 [shape = 'u8[2048]{0}', space=vmem, size = 0x800, scoped, tag = 'input window, operand 3, single buffered']
    #allocation5 [shape = 's32[1]{0}', space=sflag, size = 0x4, scoped, tag = 'scoped memory for vae_forward.1']
    #allocation6 [shape = 'u8[131072]{0}', space=vmem, size = 0x20000, scoped, tag = 'input window, operand 4, single buffered']
    #allocation7 [shape = 'u8[512]{0}', space=vmem, size = 0x400, scoped, tag = 'input window, operand 5, single buffered']
    #allocation8 [shape = 's32[1]{0}', space=sflag, size = 0x4, scoped, tag = 'scoped memory for vae_forward.1']
    #allocation9 [shape = 'u8[512]{0}', space=vmem, size = 0x400, scoped, tag = 'input window, operand 7, single buffered']
    #allocation10 [shape = 'u8[512]{0}', space=vmem, size = 0x400, scoped, tag = 'input window, operand 11, single buffered']
    #allocation11 [shape = 's32[1]{0}', space=sflag, size = 0x4, scoped, tag = 'scoped memory for vae_forward.1']
    #allocation12 [shape = 'u8[131072]{0}', space=vmem, size = 0x20000, scoped, tag = 'input window, operand 12, single buffered']
    #allocation13 [shape = 'u8[2048]{0}', space=vmem, size = 0x800, scoped, tag = 'input window, operand 13, single buffered']
    #allocation14 [shape = 's32[1]{0}', space=sflag, size = 0x4, scoped, tag = 'scoped memory for vae_forward.1']
    #allocation15 [shape = 'u8[1310720]{0}', space=vmem, size = 0x140000, scoped, tag = 'input window, operand 14, single buffered']
    #allocation16 [shape = 'u8[5120]{0}', space=vmem, size = 0x1400, scoped, tag = 'input window, operand 15, single buffered']
    #allocation17 [shape = 's32[1]{0}', space=sflag, size = 0x4, scoped, tag = 'scoped memory for vae_forward.1']
    %21 = vsyncpa [#allocation3], 0
    %22 = vsyncpa [#allocation5], 0
    %23 = vsyncpa [#allocation8], 0
    %24 = vsyncpa [#allocation11], 0
    %25 = vsyncpa [#allocation14], 0
    %26 = vsyncpa [#allocation17], 0
    // Predicated region
    $region2: #{vae_forward.1} parent=1 // pred_check
      _
    $region3: #{vae_forward.1} parent=1 // pred_check_branch
      %28 = sbr.rel (0) target = $region5
    $region4: #{vae_forward.1} parent=1 // pred_region
      _
    $region5: #{vae_forward.1} parent=1 // pred_fallthru
      _
    // Predicated region
    $region6: #{vae_forward.1} parent=1 // pred_check
      _
    $region7: #{vae_forward.1} parent=1 // pred_check_branch
      %30 = sbr.rel (0) target = $region9
    $region8: #{vae_forward.1} parent=1 // pred_region
      _
    $region9: #{vae_forward.1} parent=1 // pred_fallthru
      _
    // Predicated region
    $region10: #{vae_forward.1} parent=1 // pred_check
      _
    $region11: #{vae_forward.1} parent=1 // pred_check_branch
      %32 = sbr.rel (0) target = $region13
    $region12: #{vae_forward.1} parent=1 // pred_region
      %s34 = ssub.s32 40960, 40960
      %35 = vsyncadd [#allocation3], %s34
      %s36 = sshll.u32 [#allocation2], 4
      %s37 = int_to_ptr.vmem [resolvable:$true] %s36
      %42 = dma.hbm_to_vmem [thread:$0]  %s2, 40960, %s37, [#allocation3], 256, 256, 16
    $region13: #{vae_forward.1} parent=1 // pred_fallthru
      _
    // Predicated region
    $region14: #{vae_forward.1} parent=1 // pred_check
      _
    $region15: #{vae_forward.1} parent=1 // pred_check_branch
      %44 = sbr.rel (0) target = $region17
    $region16: #{vae_forward.1} parent=1 // pred_region
      %s46 = ssub.s32 64, 64
      %47 = vsyncadd [#allocation5], %s46
      %s49 = sshll.u32 [#allocation4], 4
      %s50 = int_to_ptr.vmem [resolvable:$true] %s49
      %52 = dma.hbm_to_vmem [thread:$0]  %s3, 64, %s50, [#allocation5]
    $region17: #{vae_forward.1} parent=1 // pred_fallthru
      _
    // Predicated region
    $region18: #{vae_forward.1} parent=1 // pred_check
      _
    $region19: #{vae_forward.1} parent=1 // pred_check_branch
      %54 = sbr.rel (0) target = $region21
    $region20: #{vae_forward.1} parent=1 // pred_region
      %s56 = ssub.s32 4096, 4096
      %57 = vsyncadd [#allocation5], %s56
      %s58 = sshll.u32 [#allocation6], 4
      %s59 = int_to_ptr.vmem [resolvable:$true] %s58
      %64 = dma.hbm_to_vmem [thread:$0]  %s4, 4096, %s59, [#allocation5], 64, 64, 4
    $region21: #{vae_forward.1} parent=1 // pred_fallthru
      _
    // Predicated region
    $region22: #{vae_forward.1} parent=1 // pred_check
      _
    $region23: #{vae_forward.1} parent=1 // pred_check_branch
      %66 = sbr.rel (0) target = $region25
    $region24: #{vae_forward.1} parent=1 // pred_region
      %s68 = ssub.s32 16, 16
      %69 = vsyncadd [#allocation8], %s68
      %s71 = sshll.u32 [#allocation7], 4
      %s72 = int_to_ptr.vmem [resolvable:$true] %s71
      %74 = dma.hbm_to_vmem [thread:$0]  %s5, 16, %s72, [#allocation8]
    $region25: #{vae_forward.1} parent=1 // pred_fallthru
      _
    // Predicated region
    $region26: #{vae_forward.1} parent=1 // pred_check
      _
    $region27: #{vae_forward.1} parent=1 // pred_check_branch
      %76 = sbr.rel (0) target = $region29
    $region28: #{vae_forward.1} parent=1 // pred_region
      _
    $region29: #{vae_forward.1} parent=1 // pred_fallthru
      _
    // Predicated region
    $region30: #{vae_forward.1} parent=1 // pred_check
      _
    $region31: #{vae_forward.1} parent=1 // pred_check_branch
      %78 = sbr.rel (0) target = $region33
    $region32: #{vae_forward.1} parent=1 // pred_region
      %s80 = ssub.s32 16, 16
      %81 = vsyncadd [#allocation8], %s80
      %s83 = sshll.u32 [#allocation9], 4
      %s84 = int_to_ptr.vmem [resolvable:$true] %s83
      %86 = dma.hbm_to_vmem [thread:$0]  %s7, 16, %s84, [#allocation8]
    $region33: #{vae_forward.1} parent=1 // pred_fallthru
      _
    // Predicated region
    $region34: #{vae_forward.1} parent=1 // pred_check
      _
    $region35: #{vae_forward.1} parent=1 // pred_check_branch
      %88 = sbr.rel (0) target = $region37
    $region36: #{vae_forward.1} parent=1 // pred_region
      _
    $region37: #{vae_forward.1} parent=1 // pred_fallthru
      _
    // Predicated region
    $region38: #{vae_forward.1} parent=1 // pred_check
      _
    $region39: #{vae_forward.1} parent=1 // pred_check_branch
      %90 = sbr.rel (0) target = $region41
    $region40: #{vae_forward.1} parent=1 // pred_region
      _
    $region41: #{vae_forward.1} parent=1 // pred_fallthru
      _
    // Predicated region
    $region42: #{vae_forward.1} parent=1 // pred_check
      _
    $region43: #{vae_forward.1} parent=1 // pred_check_branch
      %92 = sbr.rel (0) target = $region45
    $region44: #{vae_forward.1} parent=1 // pred_region
      _
    $region45: #{vae_forward.1} parent=1 // pred_fallthru
      _
    // Predicated region
    $region46: #{vae_forward.1} parent=1 // pred_check
      _
    $region47: #{vae_forward.1} parent=1 // pred_check_branch
      %94 = sbr.rel (0) target = $region49
    $region48: #{vae_forward.1} parent=1 // pred_region
      %s96 = ssub.s32 16, 16
      %97 = vsyncadd [#allocation11], %s96
      %s99 = sshll.u32 [#allocation10], 4
      %s100 = int_to_ptr.vmem [resolvable:$true] %s99
      %102 = dma.hbm_to_vmem [thread:$0]  %s11, 16, %s100, [#allocation11]
    $region49: #{vae_forward.1} parent=1 // pred_fallthru
      _
    // Predicated region
    $region50: #{vae_forward.1} parent=1 // pred_check
      _
    $region51: #{vae_forward.1} parent=1 // pred_check_branch
      %104 = sbr.rel (0) target = $region53
    $region52: #{vae_forward.1} parent=1 // pred_region
      %s106 = ssub.s32 4096, 4096
      %107 = vsyncadd [#allocation11], %s106
      %s108 = sshll.u32 [#allocation12], 4
      %s109 = int_to_ptr.vmem [resolvable:$true] %s108
      %114 = dma.hbm_to_vmem [thread:$0]  %s12, 4096, %s109, [#allocation11], 256, 256, 16
    $region53: #{vae_forward.1} parent=1 // pred_fallthru
      _
    // Predicated region
    $region54: #{vae_forward.1} parent=1 // pred_check
      _
    $region55: #{vae_forward.1} parent=1 // pred_check_branch
      %116 = sbr.rel (0) target = $region57
    $region56: #{vae_forward.1} parent=1 // pred_region
      %s118 = ssub.s32 64, 64
      %119 = vsyncadd [#allocation14], %s118
      %s121 = sshll.u32 [#allocation13], 4
      %s122 = int_to_ptr.vmem [resolvable:$true] %s121
      %124 = dma.hbm_to_vmem [thread:$0]  %s13, 64, %s122, [#allocation14]
    $region57: #{vae_forward.1} parent=1 // pred_fallthru
      _
    // Predicated region
    $region58: #{vae_forward.1} parent=1 // pred_check
      _
    $region59: #{vae_forward.1} parent=1 // pred_check_branch
      %126 = sbr.rel (0) target = $region61
    $region60: #{vae_forward.1} parent=1 // pred_region
      %s128 = ssub.s32 40960, 40960
      %129 = vsyncadd [#allocation14], %s128
      %s130 = sshll.u32 [#allocation15], 4
      %s131 = int_to_ptr.vmem [resolvable:$true] %s130
      %136 = dma.hbm_to_vmem [thread:$0]  %s14, 40960, %s131, [#allocation14], 640, 640, 40
    $region61: #{vae_forward.1} parent=1 // pred_fallthru
      _
    // Predicated region
    $region62: #{vae_forward.1} parent=1 // pred_check
      _
    $region63: #{vae_forward.1} parent=1 // pred_check_branch
      %138 = sbr.rel (0) target = $region65
    $region64: #{vae_forward.1} parent=1 // pred_region
      %s140 = ssub.s32 160, 160
      %141 = vsyncadd [#allocation17], %s140
      %s143 = sshll.u32 [#allocation16], 4
      %s144 = int_to_ptr.vmem [resolvable:$true] %s143
      %146 = dma.hbm_to_vmem [thread:$0]  %s15, 160, %s144, [#allocation17]
    $region65: #{vae_forward.1} parent=1 // pred_fallthru
      _
    // Predicated region
    $region66: #{vae_forward.1} parent=1 // pred_check
      _
    $region67: #{vae_forward.1} parent=1 // pred_check_branch
      %148 = sbr.rel (0) target = $region69
    $region68: #{vae_forward.1} parent=1 // pred_region
      %149 = dma.done [#allocation3], 40960
    $region69: #{vae_forward.1} parent=1 // pred_fallthru
      _
    // Predicated region
    $region70: #{vae_forward.1} parent=1 // pred_check
      _
    $region71: #{vae_forward.1} parent=1 // pred_check_branch
      %151 = sbr.rel (0) target = $region73
    $region72: #{vae_forward.1} parent=1 // pred_region
      %152 = dma.done [#allocation5], 64
    $region73: #{vae_forward.1} parent=1 // pred_fallthru
      _
    // Predicated region
    $region74: #{vae_forward.1} parent=1 // pred_check
      _
    $region75: #{vae_forward.1} parent=1 // pred_check_branch
      %154 = sbr.rel (0) target = $region77
    $region76: #{vae_forward.1} parent=1 // pred_region
      %155 = dma.done [#allocation5], 4096
    $region77: #{vae_forward.1} parent=1 // pred_fallthru
      _
    // Predicated region
    $region78: #{vae_forward.1} parent=1 // pred_check
      _
    $region79: #{vae_forward.1} parent=1 // pred_check_branch
      %157 = sbr.rel (0) target = $region81
    $region80: #{vae_forward.1} parent=1 // pred_region
      %158 = dma.done [#allocation8], 16
    $region81: #{vae_forward.1} parent=1 // pred_fallthru
      _
    // Predicated region
    $region82: #{vae_forward.1} parent=1 // pred_check
      _
    $region83: #{vae_forward.1} parent=1 // pred_check_branch
      %160 = sbr.rel (0) target = $region85
    $region84: #{vae_forward.1} parent=1 // pred_region
      %161 = dma.done [#allocation8], 16
    $region85: #{vae_forward.1} parent=1 // pred_fallthru
      _
    // Predicated region
    $region86: #{vae_forward.1} parent=1 // pred_check
      _
    $region87: #{vae_forward.1} parent=1 // pred_check_branch
      %163 = sbr.rel (0) target = $region89
    $region88: #{vae_forward.1} parent=1 // pred_region
      %164 = dma.done [#allocation11], 16
    $region89: #{vae_forward.1} parent=1 // pred_fallthru
      _
    // Predicated region
    $region90: #{vae_forward.1} parent=1 // pred_check
      _
    $region91: #{vae_forward.1} parent=1 // pred_check_branch
      %166 = sbr.rel (0) target = $region93
    $region92: #{vae_forward.1} parent=1 // pred_region
      %167 = dma.done [#allocation11], 4096
    $region93: #{vae_forward.1} parent=1 // pred_fallthru
      _
    // Predicated region
    $region94: #{vae_forward.1} parent=1 // pred_check
      _
    $region95: #{vae_forward.1} parent=1 // pred_check_branch
      %169 = sbr.rel (0) target = $region97
    $region96: #{vae_forward.1} parent=1 // pred_region
      %170 = dma.done [#allocation14], 64
    $region97: #{vae_forward.1} parent=1 // pred_fallthru
      _
    // Predicated region
    $region98: #{vae_forward.1} parent=1 // pred_check
      _
    $region99: #{vae_forward.1} parent=1 // pred_check_branch
      %172 = sbr.rel (0) target = $region101
    $region100: #{vae_forward.1} parent=1 // pred_region
      %173 = dma.done [#allocation14], 40960
    $region101: #{vae_forward.1} parent=1 // pred_fallthru
      _
    // Predicated region
    $region102: #{vae_forward.1} parent=1 // pred_check
      _
    $region103: #{vae_forward.1} parent=1 // pred_check_branch
      %175 = sbr.rel (0) target = $region105
    $region104: #{vae_forward.1} parent=1 // pred_region
      %176 = dma.done [#allocation17], 160
    $region105: #{vae_forward.1} parent=1 // pred_fallthru
      _
    %v178 = vld [vmem:[#allocation2] sm:$0xff]
    %v179 = vld [vmem:[#allocation2 + $0x8] sm:$0xff]
    %v180 = vld [vmem:[#allocation2 + $0x10] sm:$0xff]
    %v181 = vld [vmem:[#allocation2 + $0x18] sm:$0xff]
    %v182 = vld [vmem:[#allocation2 + $0x20] sm:$0xff]
    %v183 = vld [vmem:[#allocation2 + $0x28] sm:$0xff]
    %v184 = vld [vmem:[#allocation2 + $0x30] sm:$0xff]
    %v185 = vld [vmem:[#allocation2 + $0x38] sm:$0xff]
    %v186 = vld [vmem:[#allocation2 + $0x40] sm:$0xff]
    %v187 = vld [vmem:[#allocation2 + $0x48] sm:$0xff]
    %v188 = vld [vmem:[#allocation2 + $0x50] sm:$0xff]
    %v189 = vld [vmem:[#allocation2 + $0x58] sm:$0xff]
    %v190 = vld [vmem:[#allocation2 + $0x60] sm:$0xff]
    %v191 = vld [vmem:[#allocation2 + $0x68] sm:$0xff]
    %v192 = vld [vmem:[#allocation2 + $0x70] sm:$0xff]
    %v193 = vld [vmem:[#allocation2 + $0x78] sm:$0xff]
    %v194 = vld [vmem:[#allocation2 + $0x80] sm:$0xff]
    %v195 = vld [vmem:[#allocation2 + $0x88] sm:$0xff]
    %v196 = vld [vmem:[#allocation2 + $0x90] sm:$0xff]
    %v197 = vld [vmem:[#allocation2 + $0x98] sm:$0xff]
    %v198 = vld [vmem:[#allocation2 + $0xa0] sm:$0xff]
    %v199 = vld [vmem:[#allocation2 + $0xa8] sm:$0xff]
    %v200 = vld [vmem:[#allocation2 + $0xb0] sm:$0xff]
    %v201 = vld [vmem:[#allocation2 + $0xb8] sm:$0xff]
    %v202 = vld [vmem:[#allocation2 + $0xc0] sm:$0xff]
    %v203 = vld [vmem:[#allocation2 + $0xc8] sm:$0xff]
    %v204 = vld [vmem:[#allocation2 + $0xd0] sm:$0xff]
    %v205 = vld [vmem:[#allocation2 + $0xd8] sm:$0xff]
    %v206 = vld [vmem:[#allocation2 + $0xe0] sm:$0xff]
    %v207 = vld [vmem:[#allocation2 + $0xe8] sm:$0xff]
    %v208 = vld [vmem:[#allocation2 + $0xf0] sm:$0xff]
    %v209 = vld [vmem:[#allocation2 + $0xf8] sm:$0xff]
    %v210 = vld [vmem:[#allocation2 + $0x100] sm:$0xff]
    %v211 = vld [vmem:[#allocation2 + $0x108] sm:$0xff]
    %v212 = vld [vmem:[#allocation2 + $0x110] sm:$0xff]
    %v213 = vld [vmem:[#allocation2 + $0x118] sm:$0xff]
    %v214 = vld [vmem:[#allocation2 + $0x120] sm:$0xff]
    %v215 = vld [vmem:[#allocation2 + $0x128] sm:$0xff]
    %v216 = vld [vmem:[#allocation2 + $0x130] sm:$0xff]
    %v217 = vld [vmem:[#allocation2 + $0x138] sm:$0xff]
    %v218 = vld [vmem:[#allocation2 + $0x140] sm:$0xff]
    %v219 = vld [vmem:[#allocation2 + $0x148] sm:$0xff]
    %v220 = vld [vmem:[#allocation2 + $0x150] sm:$0xff]
    %v221 = vld [vmem:[#allocation2 + $0x158] sm:$0xff]
    %v222 = vld [vmem:[#allocation2 + $0x160] sm:$0xff]
    %v223 = vld [vmem:[#allocation2 + $0x168] sm:$0xff]
    %v224 = vld [vmem:[#allocation2 + $0x170] sm:$0xff]
    %v225 = vld [vmem:[#allocation2 + $0x178] sm:$0xff]
    %v226 = vld [vmem:[#allocation2 + $0x180] sm:$0xff]
    %v227 = vld [vmem:[#allocation2 + $0x188] sm:$0xff]
    %v228 = vld [vmem:[#allocation2 + $0x190] sm:$0xff]
    %v229 = vld [vmem:[#allocation2 + $0x198] sm:$0xff]
    %v230 = vld [vmem:[#allocation2 + $0x1a0] sm:$0xff]
    %v231 = vld [vmem:[#allocation2 + $0x1a8] sm:$0xff]
    %v232 = vld [vmem:[#allocation2 + $0x1b0] sm:$0xff]
    %v233 = vld [vmem:[#allocation2 + $0x1b8] sm:$0xff]
    %v234 = vld [vmem:[#allocation2 + $0x1c0] sm:$0xff]
    %v235 = vld [vmem:[#allocation2 + $0x1c8] sm:$0xff]
    %v236 = vld [vmem:[#allocation2 + $0x1d0] sm:$0xff]
    %v237 = vld [vmem:[#allocation2 + $0x1d8] sm:$0xff]
    %v238 = vld [vmem:[#allocation2 + $0x1e0] sm:$0xff]
    %v239 = vld [vmem:[#allocation2 + $0x1e8] sm:$0xff]
    %v240 = vld [vmem:[#allocation2 + $0x1f0] sm:$0xff]
    %v241 = vld [vmem:[#allocation2 + $0x1f8] sm:$0xff]
    %v242 = vld [vmem:[#allocation2 + $0x200] sm:$0xff]
    %v243 = vld [vmem:[#allocation2 + $0x208] sm:$0xff]
    %v244 = vld [vmem:[#allocation2 + $0x210] sm:$0xff]
    %v245 = vld [vmem:[#allocation2 + $0x218] sm:$0xff]
    %v246 = vld [vmem:[#allocation2 + $0x220] sm:$0xff]
    %v247 = vld [vmem:[#allocation2 + $0x228] sm:$0xff]
    %v248 = vld [vmem:[#allocation2 + $0x230] sm:$0xff]
    %v249 = vld [vmem:[#allocation2 + $0x238] sm:$0xff]
    %v250 = vld [vmem:[#allocation2 + $0x240] sm:$0xff]
    %v251 = vld [vmem:[#allocation2 + $0x248] sm:$0xff]
    %v252 = vld [vmem:[#allocation2 + $0x250] sm:$0xff]
    %v253 = vld [vmem:[#allocation2 + $0x258] sm:$0xff]
    %v254 = vld [vmem:[#allocation2 + $0x260] sm:$0xff]
    %v255 = vld [vmem:[#allocation2 + $0x268] sm:$0xff]
    %v256 = vld [vmem:[#allocation2 + $0x270] sm:$0xff]
    %v257 = vld [vmem:[#allocation2 + $0x278] sm:$0xff]
    %v258 = vld [vmem:[#allocation2 + $0x280] sm:$0xff]
    %v259 = vld [vmem:[#allocation2 + $0x288] sm:$0xff]
    %v260 = vld [vmem:[#allocation2 + $0x290] sm:$0xff]
    %v261 = vld [vmem:[#allocation2 + $0x298] sm:$0xff]
    %v262 = vld [vmem:[#allocation2 + $0x2a0] sm:$0xff]
    %v263 = vld [vmem:[#allocation2 + $0x2a8] sm:$0xff]
    %v264 = vld [vmem:[#allocation2 + $0x2b0] sm:$0xff]
    %v265 = vld [vmem:[#allocation2 + $0x2b8] sm:$0xff]
    %v266 = vld [vmem:[#allocation2 + $0x2c0] sm:$0xff]
    %v267 = vld [vmem:[#allocation2 + $0x2c8] sm:$0xff]
    %v268 = vld [vmem:[#allocation2 + $0x2d0] sm:$0xff]
    %v269 = vld [vmem:[#allocation2 + $0x2d8] sm:$0xff]
    %v270 = vld [vmem:[#allocation2 + $0x2e0] sm:$0xff]
    %v271 = vld [vmem:[#allocation2 + $0x2e8] sm:$0xff]
    %v272 = vld [vmem:[#allocation2 + $0x2f0] sm:$0xff]
    %v273 = vld [vmem:[#allocation2 + $0x2f8] sm:$0xff]
    %v274 = vld [vmem:[#allocation2 + $0x300] sm:$0xff]
    %v275 = vld [vmem:[#allocation2 + $0x308] sm:$0xff]
    %v276 = vld [vmem:[#allocation2 + $0x310] sm:$0xff]
    %v277 = vld [vmem:[#allocation2 + $0x318] sm:$0xff]
    %v278 = vld [vmem:[#allocation2 + $0x320] sm:$0xff]
    %v279 = vld [vmem:[#allocation2 + $0x328] sm:$0xff]
    %v280 = vld [vmem:[#allocation2 + $0x330] sm:$0xff]
    %v281 = vld [vmem:[#allocation2 + $0x338] sm:$0xff]
    %v282 = vld [vmem:[#allocation2 + $0x340] sm:$0xff]
    %v283 = vld [vmem:[#allocation2 + $0x348] sm:$0xff]
    %v284 = vld [vmem:[#allocation2 + $0x350] sm:$0xff]
    %v285 = vld [vmem:[#allocation2 + $0x358] sm:$0xff]
    %v286 = vld [vmem:[#allocation2 + $0x360] sm:$0xff]
    %v287 = vld [vmem:[#allocation2 + $0x368] sm:$0xff]
    %v288 = vld [vmem:[#allocation2 + $0x370] sm:$0xff]
    %v289 = vld [vmem:[#allocation2 + $0x378] sm:$0xff]
    %v290 = vld [vmem:[#allocation2 + $0x380] sm:$0xff]
    %v291 = vld [vmem:[#allocation2 + $0x388] sm:$0xff]
    %v292 = vld [vmem:[#allocation2 + $0x390] sm:$0xff]
    %v293 = vld [vmem:[#allocation2 + $0x398] sm:$0xff]
    %v294 = vld [vmem:[#allocation2 + $0x3a0] sm:$0xff]
    %v295 = vld [vmem:[#allocation2 + $0x3a8] sm:$0xff]
    %v296 = vld [vmem:[#allocation2 + $0x3b0] sm:$0xff]
    %v297 = vld [vmem:[#allocation2 + $0x3b8] sm:$0xff]
    %v298 = vld [vmem:[#allocation2 + $0x3c0] sm:$0xff]
    %v299 = vld [vmem:[#allocation2 + $0x3c8] sm:$0xff]
    %v300 = vld [vmem:[#allocation2 + $0x3d0] sm:$0xff]
    %v301 = vld [vmem:[#allocation2 + $0x3d8] sm:$0xff]
    %v302 = vld [vmem:[#allocation2 + $0x3e0] sm:$0xff]
    %v303 = vld [vmem:[#allocation2 + $0x3e8] sm:$0xff]
    %v304 = vld [vmem:[#allocation2 + $0x3f0] sm:$0xff]
    %v305 = vld [vmem:[#allocation2 + $0x3f8] sm:$0xff]
    %v306 = vld [vmem:[#allocation2 + $0x400] sm:$0xff]
    %v307 = vld [vmem:[#allocation2 + $0x408] sm:$0xff]
    %v308 = vld [vmem:[#allocation2 + $0x410] sm:$0xff]
    %v309 = vld [vmem:[#allocation2 + $0x418] sm:$0xff]
    %v310 = vld [vmem:[#allocation2 + $0x420] sm:$0xff]
    %v311 = vld [vmem:[#allocation2 + $0x428] sm:$0xff]
    %v312 = vld [vmem:[#allocation2 + $0x430] sm:$0xff]
    %v313 = vld [vmem:[#allocation2 + $0x438] sm:$0xff]
    %v314 = vld [vmem:[#allocation2 + $0x440] sm:$0xff]
    %v315 = vld [vmem:[#allocation2 + $0x448] sm:$0xff]
    %v316 = vld [vmem:[#allocation2 + $0x450] sm:$0xff]
    %v317 = vld [vmem:[#allocation2 + $0x458] sm:$0xff]
    %v318 = vld [vmem:[#allocation2 + $0x460] sm:$0xff]
    %v319 = vld [vmem:[#allocation2 + $0x468] sm:$0xff]
    %v320 = vld [vmem:[#allocation2 + $0x470] sm:$0xff]
    %v321 = vld [vmem:[#allocation2 + $0x478] sm:$0xff]
    %v322 = vld [vmem:[#allocation2 + $0x480] sm:$0xff]
    %v323 = vld [vmem:[#allocation2 + $0x488] sm:$0xff]
    %v324 = vld [vmem:[#allocation2 + $0x490] sm:$0xff]
    %v325 = vld [vmem:[#allocation2 + $0x498] sm:$0xff]
    %v326 = vld [vmem:[#allocation2 + $0x4a0] sm:$0xff]
    %v327 = vld [vmem:[#allocation2 + $0x4a8] sm:$0xff]
    %v328 = vld [vmem:[#allocation2 + $0x4b0] sm:$0xff]
    %v329 = vld [vmem:[#allocation2 + $0x4b8] sm:$0xff]
    %v330 = vld [vmem:[#allocation2 + $0x4c0] sm:$0xff]
    %v331 = vld [vmem:[#allocation2 + $0x4c8] sm:$0xff]
    %v332 = vld [vmem:[#allocation2 + $0x4d0] sm:$0xff]
    %v333 = vld [vmem:[#allocation2 + $0x4d8] sm:$0xff]
    %v334 = vld [vmem:[#allocation2 + $0x4e0] sm:$0xff]
    %v335 = vld [vmem:[#allocation2 + $0x4e8] sm:$0xff]
    %v336 = vld [vmem:[#allocation2 + $0x4f0] sm:$0xff]
    %v337 = vld [vmem:[#allocation2 + $0x4f8] sm:$0xff]
    %v338 = vld [vmem:[#allocation2 + $0x500] sm:$0xff]
    %v339 = vld [vmem:[#allocation2 + $0x508] sm:$0xff]
    %v340 = vld [vmem:[#allocation2 + $0x510] sm:$0xff]
    %v341 = vld [vmem:[#allocation2 + $0x518] sm:$0xff]
    %v342 = vld [vmem:[#allocation2 + $0x520] sm:$0xff]
    %v343 = vld [vmem:[#allocation2 + $0x528] sm:$0xff]
    %v344 = vld [vmem:[#allocation2 + $0x530] sm:$0xff]
    %v345 = vld [vmem:[#allocation2 + $0x538] sm:$0xff]
    %v346 = vld [vmem:[#allocation2 + $0x540] sm:$0xff]
    %v347 = vld [vmem:[#allocation2 + $0x548] sm:$0xff]
    %v348 = vld [vmem:[#allocation2 + $0x550] sm:$0xff]
    %v349 = vld [vmem:[#allocation2 + $0x558] sm:$0xff]
    %v350 = vld [vmem:[#allocation2 + $0x560] sm:$0xff]
    %v351 = vld [vmem:[#allocation2 + $0x568] sm:$0xff]
    %v352 = vld [vmem:[#allocation2 + $0x570] sm:$0xff]
    %v353 = vld [vmem:[#allocation2 + $0x578] sm:$0xff]
    %v354 = vld [vmem:[#allocation2 + $0x580] sm:$0xff]
    %v355 = vld [vmem:[#allocation2 + $0x588] sm:$0xff]
    %v356 = vld [vmem:[#allocation2 + $0x590] sm:$0xff]
    %v357 = vld [vmem:[#allocation2 + $0x598] sm:$0xff]
    %v358 = vld [vmem:[#allocation2 + $0x5a0] sm:$0xff]
    %v359 = vld [vmem:[#allocation2 + $0x5a8] sm:$0xff]
    %v360 = vld [vmem:[#allocation2 + $0x5b0] sm:$0xff]
    %v361 = vld [vmem:[#allocation2 + $0x5b8] sm:$0xff]
    %v362 = vld [vmem:[#allocation2 + $0x5c0] sm:$0xff]
    %v363 = vld [vmem:[#allocation2 + $0x5c8] sm:$0xff]
    %v364 = vld [vmem:[#allocation2 + $0x5d0] sm:$0xff]
    %v365 = vld [vmem:[#allocation2 + $0x5d8] sm:$0xff]
    %v366 = vld [vmem:[#allocation2 + $0x5e0] sm:$0xff]
    %v367 = vld [vmem:[#allocation2 + $0x5e8] sm:$0xff]
    %v368 = vld [vmem:[#allocation2 + $0x5f0] sm:$0xff]
    %v369 = vld [vmem:[#allocation2 + $0x5f8] sm:$0xff]
    %v370 = vld [vmem:[#allocation2 + $0x600] sm:$0xff]
    %v371 = vld [vmem:[#allocation2 + $0x608] sm:$0xff]
    %v372 = vld [vmem:[#allocation2 + $0x610] sm:$0xff]
    %v373 = vld [vmem:[#allocation2 + $0x618] sm:$0xff]
    %v374 = vld [vmem:[#allocation2 + $0x620] sm:$0xff]
    %v375 = vld [vmem:[#allocation2 + $0x628] sm:$0xff]
    %v376 = vld [vmem:[#allocation2 + $0x630] sm:$0xff]
    %v377 = vld [vmem:[#allocation2 + $0x638] sm:$0xff]
    %v378 = vld [vmem:[#allocation2 + $0x640] sm:$0xff]
    %v379 = vld [vmem:[#allocation2 + $0x648] sm:$0xff]
    %v380 = vld [vmem:[#allocation2 + $0x650] sm:$0xff]
    %v381 = vld [vmem:[#allocation2 + $0x658] sm:$0xff]
    %v382 = vld [vmem:[#allocation2 + $0x660] sm:$0xff]
    %v383 = vld [vmem:[#allocation2 + $0x668] sm:$0xff]
    %v384 = vld [vmem:[#allocation2 + $0x670] sm:$0xff]
    %v385 = vld [vmem:[#allocation2 + $0x678] sm:$0xff]
    %v386 = vld [vmem:[#allocation2 + $0x680] sm:$0xff]
    %v387 = vld [vmem:[#allocation2 + $0x688] sm:$0xff]
    %v388 = vld [vmem:[#allocation2 + $0x690] sm:$0xff]
    %v389 = vld [vmem:[#allocation2 + $0x698] sm:$0xff]
    %v390 = vld [vmem:[#allocation2 + $0x6a0] sm:$0xff]
    %v391 = vld [vmem:[#allocation2 + $0x6a8] sm:$0xff]
    %v392 = vld [vmem:[#allocation2 + $0x6b0] sm:$0xff]
    %v393 = vld [vmem:[#allocation2 + $0x6b8] sm:$0xff]
    %v394 = vld [vmem:[#allocation2 + $0x6c0] sm:$0xff]
    %v395 = vld [vmem:[#allocation2 + $0x6c8] sm:$0xff]
    %v396 = vld [vmem:[#allocation2 + $0x6d0] sm:$0xff]
    %v397 = vld [vmem:[#allocation2 + $0x6d8] sm:$0xff]
    %v398 = vld [vmem:[#allocation2 + $0x6e0] sm:$0xff]
    %v399 = vld [vmem:[#allocation2 + $0x6e8] sm:$0xff]
    %v400 = vld [vmem:[#allocation2 + $0x6f0] sm:$0xff]
    %v401 = vld [vmem:[#allocation2 + $0x6f8] sm:$0xff]
    %v402 = vld [vmem:[#allocation2 + $0x700] sm:$0xff]
    %v403 = vld [vmem:[#allocation2 + $0x708] sm:$0xff]
    %v404 = vld [vmem:[#allocation2 + $0x710] sm:$0xff]
    %v405 = vld [vmem:[#allocation2 + $0x718] sm:$0xff]
    %v406 = vld [vmem:[#allocation2 + $0x720] sm:$0xff]
    %v407 = vld [vmem:[#allocation2 + $0x728] sm:$0xff]
    %v408 = vld [vmem:[#allocation2 + $0x730] sm:$0xff]
    %v409 = vld [vmem:[#allocation2 + $0x738] sm:$0xff]
    %v410 = vld [vmem:[#allocation2 + $0x740] sm:$0xff]
    %v411 = vld [vmem:[#allocation2 + $0x748] sm:$0xff]
    %v412 = vld [vmem:[#allocation2 + $0x750] sm:$0xff]
    %v413 = vld [vmem:[#allocation2 + $0x758] sm:$0xff]
    %v414 = vld [vmem:[#allocation2 + $0x760] sm:$0xff]
    %v415 = vld [vmem:[#allocation2 + $0x768] sm:$0xff]
    %v416 = vld [vmem:[#allocation2 + $0x770] sm:$0xff]
    %v417 = vld [vmem:[#allocation2 + $0x778] sm:$0xff]
    %v418 = vld [vmem:[#allocation2 + $0x780] sm:$0xff]
    %v419 = vld [vmem:[#allocation2 + $0x788] sm:$0xff]
    %v420 = vld [vmem:[#allocation2 + $0x790] sm:$0xff]
    %v421 = vld [vmem:[#allocation2 + $0x798] sm:$0xff]
    %v422 = vld [vmem:[#allocation2 + $0x7a0] sm:$0xff]
    %v423 = vld [vmem:[#allocation2 + $0x7a8] sm:$0xff]
    %v424 = vld [vmem:[#allocation2 + $0x7b0] sm:$0xff]
    %v425 = vld [vmem:[#allocation2 + $0x7b8] sm:$0xff]
    %v426 = vld [vmem:[#allocation2 + $0x7c0] sm:$0xff]
    %v427 = vld [vmem:[#allocation2 + $0x7c8] sm:$0xff]
    %v428 = vld [vmem:[#allocation2 + $0x7d0] sm:$0xff]
    %v429 = vld [vmem:[#allocation2 + $0x7d8] sm:$0xff]
    %v430 = vld [vmem:[#allocation2 + $0x7e0] sm:$0xff]
    %v431 = vld [vmem:[#allocation2 + $0x7e8] sm:$0xff]
    %v432 = vld [vmem:[#allocation2 + $0x7f0] sm:$0xff]
    %v433 = vld [vmem:[#allocation2 + $0x7f8] sm:$0xff]
    %v434 = vld [vmem:[#allocation2 + $0x800] sm:$0xff]
    %v435 = vld [vmem:[#allocation2 + $0x808] sm:$0xff]
    %v436 = vld [vmem:[#allocation2 + $0x810] sm:$0xff]
    %v437 = vld [vmem:[#allocation2 + $0x818] sm:$0xff]
    %v438 = vld [vmem:[#allocation2 + $0x820] sm:$0xff]
    %v439 = vld [vmem:[#allocation2 + $0x828] sm:$0xff]
    %v440 = vld [vmem:[#allocation2 + $0x830] sm:$0xff]
    %v441 = vld [vmem:[#allocation2 + $0x838] sm:$0xff]
    %v442 = vld [vmem:[#allocation2 + $0x840] sm:$0xff]
    %v443 = vld [vmem:[#allocation2 + $0x848] sm:$0xff]
    %v444 = vld [vmem:[#allocation2 + $0x850] sm:$0xff]
    %v445 = vld [vmem:[#allocation2 + $0x858] sm:$0xff]
    %v446 = vld [vmem:[#allocation2 + $0x860] sm:$0xff]
    %v447 = vld [vmem:[#allocation2 + $0x868] sm:$0xff]
    %v448 = vld [vmem:[#allocation2 + $0x870] sm:$0xff]
    %v449 = vld [vmem:[#allocation2 + $0x878] sm:$0xff]
    %v450 = vld [vmem:[#allocation2 + $0x880] sm:$0xff]
    %v451 = vld [vmem:[#allocation2 + $0x888] sm:$0xff]
    %v452 = vld [vmem:[#allocation2 + $0x890] sm:$0xff]
    %v453 = vld [vmem:[#allocation2 + $0x898] sm:$0xff]
    %v454 = vld [vmem:[#allocation2 + $0x8a0] sm:$0xff]
    %v455 = vld [vmem:[#allocation2 + $0x8a8] sm:$0xff]
    %v456 = vld [vmem:[#allocation2 + $0x8b0] sm:$0xff]
    %v457 = vld [vmem:[#allocation2 + $0x8b8] sm:$0xff]
    %v458 = vld [vmem:[#allocation2 + $0x8c0] sm:$0xff]
    %v459 = vld [vmem:[#allocation2 + $0x8c8] sm:$0xff]
    %v460 = vld [vmem:[#allocation2 + $0x8d0] sm:$0xff]
    %v461 = vld [vmem:[#allocation2 + $0x8d8] sm:$0xff]
    %v462 = vld [vmem:[#allocation2 + $0x8e0] sm:$0xff]
    %v463 = vld [vmem:[#allocation2 + $0x8e8] sm:$0xff]
    %v464 = vld [vmem:[#allocation2 + $0x8f0] sm:$0xff]
    %v465 = vld [vmem:[#allocation2 + $0x8f8] sm:$0xff]
    %v466 = vld [vmem:[#allocation2 + $0x900] sm:$0xff]
    %v467 = vld [vmem:[#allocation2 + $0x908] sm:$0xff]
    %v468 = vld [vmem:[#allocation2 + $0x910] sm:$0xff]
    %v469 = vld [vmem:[#allocation2 + $0x918] sm:$0xff]
    %v470 = vld [vmem:[#allocation2 + $0x920] sm:$0xff]
    %v471 = vld [vmem:[#allocation2 + $0x928] sm:$0xff]
    %v472 = vld [vmem:[#allocation2 + $0x930] sm:$0xff]
    %v473 = vld [vmem:[#allocation2 + $0x938] sm:$0xff]
    %v474 = vld [vmem:[#allocation2 + $0x940] sm:$0xff]
    %v475 = vld [vmem:[#allocation2 + $0x948] sm:$0xff]
    %v476 = vld [vmem:[#allocation2 + $0x950] sm:$0xff]
    %v477 = vld [vmem:[#allocation2 + $0x958] sm:$0xff]
    %v478 = vld [vmem:[#allocation2 + $0x960] sm:$0xff]
    %v479 = vld [vmem:[#allocation2 + $0x968] sm:$0xff]
    %v480 = vld [vmem:[#allocation2 + $0x970] sm:$0xff]
    %v481 = vld [vmem:[#allocation2 + $0x978] sm:$0xff]
    %v482 = vld [vmem:[#allocation2 + $0x980] sm:$0xff]
    %v483 = vld [vmem:[#allocation2 + $0x988] sm:$0xff]
    %v484 = vld [vmem:[#allocation2 + $0x990] sm:$0xff]
    %v485 = vld [vmem:[#allocation2 + $0x998] sm:$0xff]
    %v486 = vld [vmem:[#allocation2 + $0x9a0] sm:$0xff]
    %v487 = vld [vmem:[#allocation2 + $0x9a8] sm:$0xff]
    %v488 = vld [vmem:[#allocation2 + $0x9b0] sm:$0xff]
    %v489 = vld [vmem:[#allocation2 + $0x9b8] sm:$0xff]
    %v490 = vld [vmem:[#allocation2 + $0x9c0] sm:$0xff]
    %v491 = vld [vmem:[#allocation2 + $0x9c8] sm:$0xff]
    %v492 = vld [vmem:[#allocation2 + $0x9d0] sm:$0xff]
    %v493 = vld [vmem:[#allocation2 + $0x9d8] sm:$0xff]
    %v494 = vld [vmem:[#allocation2 + $0x9e0] sm:$0xff]
    %v495 = vld [vmem:[#allocation2 + $0x9e8] sm:$0xff]
    %v496 = vld [vmem:[#allocation2 + $0x9f0] sm:$0xff]
    %v497 = vld [vmem:[#allocation2 + $0x9f8] sm:$0xff]
    %v498 = vld [vmem:[%s0] sm:$0xff]
    %v499 = vld [vmem:[%s0 + $0x8] sm:$0xff]
    %v500 = vld [vmem:[%s0 + $0x10] sm:$0xff]
    %v501 = vld [vmem:[%s0 + $0x18] sm:$0xff]
    %v502 = vld [vmem:[%s0 + $0x20] sm:$0xff]
    %v503 = vld [vmem:[%s0 + $0x28] sm:$0xff]
    %v504 = vld [vmem:[%s0 + $0x30] sm:$0xff]
    %v505 = vld [vmem:[%s0 + $0x38] sm:$0xff]
    %v506 = vld [vmem:[%s0 + $0x40] sm:$0xff]
    %v507 = vld [vmem:[%s0 + $0x48] sm:$0xff]
    %v508 = vpack.c.bf16 %v498, %v498
    %v509 = vpack.c.bf16 %v499, %v499
    %v510 = vpack.c.bf16 %v500, %v500
    %v511 = vpack.c.bf16 %v501, %v501
    %v512 = vpack.c.bf16 %v502, %v502
    %v513 = vpack.c.bf16 %v503, %v503
    %v514 = vpack.c.bf16 %v504, %v504
    %v515 = vpack.c.bf16 %v505, %v505
    %v516 = vpack.c.bf16 %v506, %v506
    %v517 = vpack.c.bf16 %v507, %v507
    %v518 = vld [vmem:[#allocation4] sm:$0xf]
    %v520 = vlaneseq
    %v521 = vshrl.u32 %v520, 7
    %v522 = vsub.s32 0, %v521
    %v523 = vrot.slane %v518, %v522
    %v524 = vlaneseq
    %v525 = vshrl.u32 %v524, 7
    %v526 = vsub.s32 1, %v525
    %v527 = vrot.slane %v518, %v526
    %v528 = vlaneseq
    %v529 = vshrl.u32 %v528, 7
    %v530 = vsub.s32 2, %v529
    %v531 = vrot.slane %v518, %v530
    %v532 = vlaneseq
    %v533 = vshrl.u32 %v532, 7
    %v534 = vsub.s32 3, %v533
    %v535 = vrot.slane %v518, %v534
    %v860 = vunpack.c.l.b16 %v178
    %v861 = vunpack.c.h.b16 %v178
    %v862 = vunpack.c.l.b16 %v179
    %v863 = vunpack.c.h.b16 %v179
    %v864 = vunpack.c.l.b16 %v180
    %v865 = vunpack.c.h.b16 %v180
    %v866 = vunpack.c.l.b16 %v181
    %v867 = vunpack.c.h.b16 %v181
    %v868 = vunpack.c.l.b16 %v182
    %v869 = vunpack.c.h.b16 %v182
    %v870 = vunpack.c.l.b16 %v183
    %v871 = vunpack.c.h.b16 %v183
    %v872 = vunpack.c.l.b16 %v184
    %v873 = vunpack.c.h.b16 %v184
    %v874 = vunpack.c.l.b16 %v185
    %v875 = vunpack.c.h.b16 %v185
    %v876 = vunpack.c.l.b16 %v186
    %v877 = vunpack.c.h.b16 %v186
    %v878 = vunpack.c.l.b16 %v187
    %v879 = vunpack.c.h.b16 %v187
    %v880 = vunpack.c.l.b16 %v188
    %v881 = vunpack.c.h.b16 %v188
    %v882 = vunpack.c.l.b16 %v189
    %v883 = vunpack.c.h.b16 %v189
    %v884 = vunpack.c.l.b16 %v190
    %v885 = vunpack.c.h.b16 %v190
    %v886 = vunpack.c.l.b16 %v191
    %v887 = vunpack.c.h.b16 %v191
    %v888 = vunpack.c.l.b16 %v192
    %v889 = vunpack.c.h.b16 %v192
    %v890 = vunpack.c.l.b16 %v193
    %v891 = vunpack.c.h.b16 %v193
    %v892 = vunpack.c.l.b16 %v194
    %v893 = vunpack.c.h.b16 %v194
    %v894 = vunpack.c.l.b16 %v195
    %v895 = vunpack.c.h.b16 %v195
    %v896 = vunpack.c.l.b16 %v196
    %v897 = vunpack.c.h.b16 %v196
    %v898 = vunpack.c.l.b16 %v197
    %v899 = vunpack.c.h.b16 %v197
    %v900 = vunpack.c.l.b16 %v198
    %v901 = vunpack.c.h.b16 %v198
    %v902 = vunpack.c.l.b16 %v199
    %v903 = vunpack.c.h.b16 %v199
    %v904 = vunpack.c.l.b16 %v200
    %v905 = vunpack.c.h.b16 %v200
    %v906 = vunpack.c.l.b16 %v201
    %v907 = vunpack.c.h.b16 %v201
    %v908 = vunpack.c.l.b16 %v202
    %v909 = vunpack.c.h.b16 %v202
    %v910 = vunpack.c.l.b16 %v203
    %v911 = vunpack.c.h.b16 %v203
    %v912 = vunpack.c.l.b16 %v204
    %v913 = vunpack.c.h.b16 %v204
    %v914 = vunpack.c.l.b16 %v205
    %v915 = vunpack.c.h.b16 %v205
    %v916 = vunpack.c.l.b16 %v206
    %v917 = vunpack.c.h.b16 %v206
    %v918 = vunpack.c.l.b16 %v207
    %v919 = vunpack.c.h.b16 %v207
    %v920 = vunpack.c.l.b16 %v208
    %v921 = vunpack.c.h.b16 %v208
    %v922 = vunpack.c.l.b16 %v209
    %v923 = vunpack.c.h.b16 %v209
    %v924 = vunpack.c.l.b16 %v210
    %v925 = vunpack.c.h.b16 %v210
    %v926 = vunpack.c.l.b16 %v211
    %v927 = vunpack.c.h.b16 %v211
    %v928 = vunpack.c.l.b16 %v212
    %v929 = vunpack.c.h.b16 %v212
    %v930 = vunpack.c.l.b16 %v213
    %v931 = vunpack.c.h.b16 %v213
    %v932 = vunpack.c.l.b16 %v214
    %v933 = vunpack.c.h.b16 %v214
    %v934 = vunpack.c.l.b16 %v215
    %v935 = vunpack.c.h.b16 %v215
    %v936 = vunpack.c.l.b16 %v216
    %v937 = vunpack.c.h.b16 %v216
    %v938 = vunpack.c.l.b16 %v217
    %v939 = vunpack.c.h.b16 %v217
    %v940 = vunpack.c.l.b16 %v218
    %v941 = vunpack.c.h.b16 %v218
    %v942 = vunpack.c.l.b16 %v219
    %v943 = vunpack.c.h.b16 %v219
    %v944 = vunpack.c.l.b16 %v220
    %v945 = vunpack.c.h.b16 %v220
    %v946 = vunpack.c.l.b16 %v221
    %v947 = vunpack.c.h.b16 %v221
    %v948 = vunpack.c.l.b16 %v222
    %v949 = vunpack.c.h.b16 %v222
    %v950 = vunpack.c.l.b16 %v223
    %v951 = vunpack.c.h.b16 %v223
    %v952 = vunpack.c.l.b16 %v224
    %v953 = vunpack.c.h.b16 %v224
    %v954 = vunpack.c.l.b16 %v225
    %v955 = vunpack.c.h.b16 %v225
    %v956 = vunpack.c.l.b16 %v226
    %v957 = vunpack.c.h.b16 %v226
    %v958 = vunpack.c.l.b16 %v227
    %v959 = vunpack.c.h.b16 %v227
    %v960 = vunpack.c.l.b16 %v228
    %v961 = vunpack.c.h.b16 %v228
    %v962 = vunpack.c.l.b16 %v229
    %v963 = vunpack.c.h.b16 %v229
    %v964 = vunpack.c.l.b16 %v230
    %v965 = vunpack.c.h.b16 %v230
    %v966 = vunpack.c.l.b16 %v231
    %v967 = vunpack.c.h.b16 %v231
    %v968 = vunpack.c.l.b16 %v232
    %v969 = vunpack.c.h.b16 %v232
    %v970 = vunpack.c.l.b16 %v233
    %v971 = vunpack.c.h.b16 %v233
    %v972 = vunpack.c.l.b16 %v234
    %v973 = vunpack.c.h.b16 %v234
    %v974 = vunpack.c.l.b16 %v235
    %v975 = vunpack.c.h.b16 %v235
    %v976 = vunpack.c.l.b16 %v236
    %v977 = vunpack.c.h.b16 %v236
    %v978 = vunpack.c.l.b16 %v237
    %v979 = vunpack.c.h.b16 %v237
    %v980 = vunpack.c.l.b16 %v238
    %v981 = vunpack.c.h.b16 %v238
    %v982 = vunpack.c.l.b16 %v239
    %v983 = vunpack.c.h.b16 %v239
    %v984 = vunpack.c.l.b16 %v240
    %v985 = vunpack.c.h.b16 %v240
    %v986 = vunpack.c.l.b16 %v241
    %v987 = vunpack.c.h.b16 %v241
    %v988 = vunpack.c.l.b16 %v242
    %v989 = vunpack.c.h.b16 %v242
    %v990 = vunpack.c.l.b16 %v243
    %v991 = vunpack.c.h.b16 %v243
    %v992 = vunpack.c.l.b16 %v244
    %v993 = vunpack.c.h.b16 %v244
    %v994 = vunpack.c.l.b16 %v245
    %v995 = vunpack.c.h.b16 %v245
    %v996 = vunpack.c.l.b16 %v246
    %v997 = vunpack.c.h.b16 %v246
    %v998 = vunpack.c.l.b16 %v247
    %v999 = vunpack.c.h.b16 %v247
    %v1000 = vunpack.c.l.b16 %v248
    %v1001 = vunpack.c.h.b16 %v248
    %v1002 = vunpack.c.l.b16 %v249
    %v1003 = vunpack.c.h.b16 %v249
    %v1004 = vunpack.c.l.b16 %v250
    %v1005 = vunpack.c.h.b16 %v250
    %v1006 = vunpack.c.l.b16 %v251
    %v1007 = vunpack.c.h.b16 %v251
    %v1008 = vunpack.c.l.b16 %v252
    %v1009 = vunpack.c.h.b16 %v252
    %v1010 = vunpack.c.l.b16 %v253
    %v1011 = vunpack.c.h.b16 %v253
    %v1012 = vunpack.c.l.b16 %v254
    %v1013 = vunpack.c.h.b16 %v254
    %v1014 = vunpack.c.l.b16 %v255
    %v1015 = vunpack.c.h.b16 %v255
    %v1016 = vunpack.c.l.b16 %v256
    %v1017 = vunpack.c.h.b16 %v256
    %v1018 = vunpack.c.l.b16 %v257
    %v1019 = vunpack.c.h.b16 %v257
    %v1020 = vunpack.c.l.b16 %v258
    %v1021 = vunpack.c.h.b16 %v258
    %v1022 = vunpack.c.l.b16 %v259
    %v1023 = vunpack.c.h.b16 %v259
    %v1024 = vunpack.c.l.b16 %v260
    %v1025 = vunpack.c.h.b16 %v260
    %v1026 = vunpack.c.l.b16 %v261
    %v1027 = vunpack.c.h.b16 %v261
    %v1028 = vunpack.c.l.b16 %v262
    %v1029 = vunpack.c.h.b16 %v262
    %v1030 = vunpack.c.l.b16 %v263
    %v1031 = vunpack.c.h.b16 %v263
    %v1032 = vunpack.c.l.b16 %v264
    %v1033 = vunpack.c.h.b16 %v264
    %v1034 = vunpack.c.l.b16 %v265
    %v1035 = vunpack.c.h.b16 %v265
    %v1036 = vunpack.c.l.b16 %v266
    %v1037 = vunpack.c.h.b16 %v266
    %v1038 = vunpack.c.l.b16 %v267
    %v1039 = vunpack.c.h.b16 %v267
    %v1040 = vunpack.c.l.b16 %v268
    %v1041 = vunpack.c.h.b16 %v268
    %v1042 = vunpack.c.l.b16 %v269
    %v1043 = vunpack.c.h.b16 %v269
    %v1044 = vunpack.c.l.b16 %v270
    %v1045 = vunpack.c.h.b16 %v270
    %v1046 = vunpack.c.l.b16 %v271
    %v1047 = vunpack.c.h.b16 %v271
    %v1048 = vunpack.c.l.b16 %v272
    %v1049 = vunpack.c.h.b16 %v272
    %v1050 = vunpack.c.l.b16 %v273
    %v1051 = vunpack.c.h.b16 %v273
    %v1052 = vunpack.c.l.b16 %v274
    %v1053 = vunpack.c.h.b16 %v274
    %v1054 = vunpack.c.l.b16 %v275
    %v1055 = vunpack.c.h.b16 %v275
    %v1056 = vunpack.c.l.b16 %v276
    %v1057 = vunpack.c.h.b16 %v276
    %v1058 = vunpack.c.l.b16 %v277
    %v1059 = vunpack.c.h.b16 %v277
    %v1060 = vunpack.c.l.b16 %v278
    %v1061 = vunpack.c.h.b16 %v278
    %v1062 = vunpack.c.l.b16 %v279
    %v1063 = vunpack.c.h.b16 %v279
    %v1064 = vunpack.c.l.b16 %v280
    %v1065 = vunpack.c.h.b16 %v280
    %v1066 = vunpack.c.l.b16 %v281
    %v1067 = vunpack.c.h.b16 %v281
    %v1068 = vunpack.c.l.b16 %v282
    %v1069 = vunpack.c.h.b16 %v282
    %v1070 = vunpack.c.l.b16 %v283
    %v1071 = vunpack.c.h.b16 %v283
    %v1072 = vunpack.c.l.b16 %v284
    %v1073 = vunpack.c.h.b16 %v284
    %v1074 = vunpack.c.l.b16 %v285
    %v1075 = vunpack.c.h.b16 %v285
    %v1076 = vunpack.c.l.b16 %v286
    %v1077 = vunpack.c.h.b16 %v286
    %v1078 = vunpack.c.l.b16 %v287
    %v1079 = vunpack.c.h.b16 %v287
    %v1080 = vunpack.c.l.b16 %v288
    %v1081 = vunpack.c.h.b16 %v288
    %v1082 = vunpack.c.l.b16 %v289
    %v1083 = vunpack.c.h.b16 %v289
    %v1084 = vunpack.c.l.b16 %v290
    %v1085 = vunpack.c.h.b16 %v290
    %v1086 = vunpack.c.l.b16 %v291
    %v1087 = vunpack.c.h.b16 %v291
    %v1088 = vunpack.c.l.b16 %v292
    %v1089 = vunpack.c.h.b16 %v292
    %v1090 = vunpack.c.l.b16 %v293
    %v1091 = vunpack.c.h.b16 %v293
    %v1092 = vunpack.c.l.b16 %v294
    %v1093 = vunpack.c.h.b16 %v294
    %v1094 = vunpack.c.l.b16 %v295
    %v1095 = vunpack.c.h.b16 %v295
    %v1096 = vunpack.c.l.b16 %v296
    %v1097 = vunpack.c.h.b16 %v296
    %v1098 = vunpack.c.l.b16 %v297
    %v1099 = vunpack.c.h.b16 %v297
    %v1100 = vunpack.c.l.b16 %v298
    %v1101 = vunpack.c.h.b16 %v298
    %v1102 = vunpack.c.l.b16 %v299
    %v1103 = vunpack.c.h.b16 %v299
    %v1104 = vunpack.c.l.b16 %v300
    %v1105 = vunpack.c.h.b16 %v300
    %v1106 = vunpack.c.l.b16 %v301
    %v1107 = vunpack.c.h.b16 %v301
    %v1108 = vunpack.c.l.b16 %v302
    %v1109 = vunpack.c.h.b16 %v302
    %v1110 = vunpack.c.l.b16 %v303
    %v1111 = vunpack.c.h.b16 %v303
    %v1112 = vunpack.c.l.b16 %v304
    %v1113 = vunpack.c.h.b16 %v304
    %v1114 = vunpack.c.l.b16 %v305
    %v1115 = vunpack.c.h.b16 %v305
    %v1116 = vunpack.c.l.b16 %v306
    %v1117 = vunpack.c.h.b16 %v306
    %v1118 = vunpack.c.l.b16 %v307
    %v1119 = vunpack.c.h.b16 %v307
    %v1120 = vunpack.c.l.b16 %v308
    %v1121 = vunpack.c.h.b16 %v308
    %v1122 = vunpack.c.l.b16 %v309
    %v1123 = vunpack.c.h.b16 %v309
    %v1124 = vunpack.c.l.b16 %v310
    %v1125 = vunpack.c.h.b16 %v310
    %v1126 = vunpack.c.l.b16 %v311
    %v1127 = vunpack.c.h.b16 %v311
    %v1128 = vunpack.c.l.b16 %v312
    %v1129 = vunpack.c.h.b16 %v312
    %v1130 = vunpack.c.l.b16 %v313
    %v1131 = vunpack.c.h.b16 %v313
    %v1132 = vunpack.c.l.b16 %v314
    %v1133 = vunpack.c.h.b16 %v314
    %v1134 = vunpack.c.l.b16 %v315
    %v1135 = vunpack.c.h.b16 %v315
    %v1136 = vunpack.c.l.b16 %v316
    %v1137 = vunpack.c.h.b16 %v316
    %v1138 = vunpack.c.l.b16 %v317
    %v1139 = vunpack.c.h.b16 %v317
    %v1140 = vunpack.c.l.b16 %v318
    %v1141 = vunpack.c.h.b16 %v318
    %v1142 = vunpack.c.l.b16 %v319
    %v1143 = vunpack.c.h.b16 %v319
    %v1144 = vunpack.c.l.b16 %v320
    %v1145 = vunpack.c.h.b16 %v320
    %v1146 = vunpack.c.l.b16 %v321
    %v1147 = vunpack.c.h.b16 %v321
    %v1148 = vunpack.c.l.b16 %v322
    %v1149 = vunpack.c.h.b16 %v322
    %v1150 = vunpack.c.l.b16 %v323
    %v1151 = vunpack.c.h.b16 %v323
    %v1152 = vunpack.c.l.b16 %v324
    %v1153 = vunpack.c.h.b16 %v324
    %v1154 = vunpack.c.l.b16 %v325
    %v1155 = vunpack.c.h.b16 %v325
    %v1156 = vunpack.c.l.b16 %v326
    %v1157 = vunpack.c.h.b16 %v326
    %v1158 = vunpack.c.l.b16 %v327
    %v1159 = vunpack.c.h.b16 %v327
    %v1160 = vunpack.c.l.b16 %v328
    %v1161 = vunpack.c.h.b16 %v328
    %v1162 = vunpack.c.l.b16 %v329
    %v1163 = vunpack.c.h.b16 %v329
    %v1164 = vunpack.c.l.b16 %v330
    %v1165 = vunpack.c.h.b16 %v330
    %v1166 = vunpack.c.l.b16 %v331
    %v1167 = vunpack.c.h.b16 %v331
    %v1168 = vunpack.c.l.b16 %v332
    %v1169 = vunpack.c.h.b16 %v332
    %v1170 = vunpack.c.l.b16 %v333
    %v1171 = vunpack.c.h.b16 %v333
    %v1172 = vunpack.c.l.b16 %v334
    %v1173 = vunpack.c.h.b16 %v334
    %v1174 = vunpack.c.l.b16 %v335
    %v1175 = vunpack.c.h.b16 %v335
    %v1176 = vunpack.c.l.b16 %v336
    %v1177 = vunpack.c.h.b16 %v336
    %v1178 = vunpack.c.l.b16 %v337
    %v1179 = vunpack.c.h.b16 %v337
    %v1180 = vunpack.c.l.b16 %v338
    %v1181 = vunpack.c.h.b16 %v338
    %v1182 = vunpack.c.l.b16 %v339
    %v1183 = vunpack.c.h.b16 %v339
    %v1184 = vunpack.c.l.b16 %v340
    %v1185 = vunpack.c.h.b16 %v340
    %v1186 = vunpack.c.l.b16 %v341
    %v1187 = vunpack.c.h.b16 %v341
    %v1188 = vunpack.c.l.b16 %v342
    %v1189 = vunpack.c.h.b16 %v342
    %v1190 = vunpack.c.l.b16 %v343
    %v1191 = vunpack.c.h.b16 %v343
    %v1192 = vunpack.c.l.b16 %v344
    %v1193 = vunpack.c.h.b16 %v344
    %v1194 = vunpack.c.l.b16 %v345
    %v1195 = vunpack.c.h.b16 %v345
    %v1196 = vunpack.c.l.b16 %v346
    %v1197 = vunpack.c.h.b16 %v346
    %v1198 = vunpack.c.l.b16 %v347
    %v1199 = vunpack.c.h.b16 %v347
    %v1200 = vunpack.c.l.b16 %v348
    %v1201 = vunpack.c.h.b16 %v348
    %v1202 = vunpack.c.l.b16 %v349
    %v1203 = vunpack.c.h.b16 %v349
    %v1204 = vunpack.c.l.b16 %v350
    %v1205 = vunpack.c.h.b16 %v350
    %v1206 = vunpack.c.l.b16 %v351
    %v1207 = vunpack.c.h.b16 %v351
    %v1208 = vunpack.c.l.b16 %v352
    %v1209 = vunpack.c.h.b16 %v352
    %v1210 = vunpack.c.l.b16 %v353
    %v1211 = vunpack.c.h.b16 %v353
    %v1212 = vunpack.c.l.b16 %v354
    %v1213 = vunpack.c.h.b16 %v354
    %v1214 = vunpack.c.l.b16 %v355
    %v1215 = vunpack.c.h.b16 %v355
    %v1216 = vunpack.c.l.b16 %v356
    %v1217 = vunpack.c.h.b16 %v356
    %v1218 = vunpack.c.l.b16 %v357
    %v1219 = vunpack.c.h.b16 %v357
    %v1220 = vunpack.c.l.b16 %v358
    %v1221 = vunpack.c.h.b16 %v358
    %v1222 = vunpack.c.l.b16 %v359
    %v1223 = vunpack.c.h.b16 %v359
    %v1224 = vunpack.c.l.b16 %v360
    %v1225 = vunpack.c.h.b16 %v360
    %v1226 = vunpack.c.l.b16 %v361
    %v1227 = vunpack.c.h.b16 %v361
    %v1228 = vunpack.c.l.b16 %v362
    %v1229 = vunpack.c.h.b16 %v362
    %v1230 = vunpack.c.l.b16 %v363
    %v1231 = vunpack.c.h.b16 %v363
    %v1232 = vunpack.c.l.b16 %v364
    %v1233 = vunpack.c.h.b16 %v364
    %v1234 = vunpack.c.l.b16 %v365
    %v1235 = vunpack.c.h.b16 %v365
    %v1236 = vunpack.c.l.b16 %v366
    %v1237 = vunpack.c.h.b16 %v366
    %v1238 = vunpack.c.l.b16 %v367
    %v1239 = vunpack.c.h.b16 %v367
    %v1240 = vunpack.c.l.b16 %v368
    %v1241 = vunpack.c.h.b16 %v368
    %v1242 = vunpack.c.l.b16 %v369
    %v1243 = vunpack.c.h.b16 %v369
    %v1244 = vunpack.c.l.b16 %v370
    %v1245 = vunpack.c.h.b16 %v370
    %v1246 = vunpack.c.l.b16 %v371
    %v1247 = vunpack.c.h.b16 %v371
    %v1248 = vunpack.c.l.b16 %v372
    %v1249 = vunpack.c.h.b16 %v372
    %v1250 = vunpack.c.l.b16 %v373
    %v1251 = vunpack.c.h.b16 %v373
    %v1252 = vunpack.c.l.b16 %v374
    %v1253 = vunpack.c.h.b16 %v374
    %v1254 = vunpack.c.l.b16 %v375
    %v1255 = vunpack.c.h.b16 %v375
    %v1256 = vunpack.c.l.b16 %v376
    %v1257 = vunpack.c.h.b16 %v376
    %v1258 = vunpack.c.l.b16 %v377
    %v1259 = vunpack.c.h.b16 %v377
    %v1260 = vunpack.c.l.b16 %v378
    %v1261 = vunpack.c.h.b16 %v378
    %v1262 = vunpack.c.l.b16 %v379
    %v1263 = vunpack.c.h.b16 %v379
    %v1264 = vunpack.c.l.b16 %v380
    %v1265 = vunpack.c.h.b16 %v380
    %v1266 = vunpack.c.l.b16 %v381
    %v1267 = vunpack.c.h.b16 %v381
    %v1268 = vunpack.c.l.b16 %v382
    %v1269 = vunpack.c.h.b16 %v382
    %v1270 = vunpack.c.l.b16 %v383
    %v1271 = vunpack.c.h.b16 %v383
    %v1272 = vunpack.c.l.b16 %v384
    %v1273 = vunpack.c.h.b16 %v384
    %v1274 = vunpack.c.l.b16 %v385
    %v1275 = vunpack.c.h.b16 %v385
    %v1276 = vunpack.c.l.b16 %v386
    %v1277 = vunpack.c.h.b16 %v386
    %v1278 = vunpack.c.l.b16 %v387
    %v1279 = vunpack.c.h.b16 %v387
    %v1280 = vunpack.c.l.b16 %v388
    %v1281 = vunpack.c.h.b16 %v388
    %v1282 = vunpack.c.l.b16 %v389
    %v1283 = vunpack.c.h.b16 %v389
    %v1284 = vunpack.c.l.b16 %v390
    %v1285 = vunpack.c.h.b16 %v390
    %v1286 = vunpack.c.l.b16 %v391
    %v1287 = vunpack.c.h.b16 %v391
    %v1288 = vunpack.c.l.b16 %v392
    %v1289 = vunpack.c.h.b16 %v392
    %v1290 = vunpack.c.l.b16 %v393
    %v1291 = vunpack.c.h.b16 %v393
    %v1292 = vunpack.c.l.b16 %v394
    %v1293 = vunpack.c.h.b16 %v394
    %v1294 = vunpack.c.l.b16 %v395
    %v1295 = vunpack.c.h.b16 %v395
    %v1296 = vunpack.c.l.b16 %v396
    %v1297 = vunpack.c.h.b16 %v396
    %v1298 = vunpack.c.l.b16 %v397
    %v1299 = vunpack.c.h.b16 %v397
    %v1300 = vunpack.c.l.b16 %v398
    %v1301 = vunpack.c.h.b16 %v398
    %v1302 = vunpack.c.l.b16 %v399
    %v1303 = vunpack.c.h.b16 %v399
    %v1304 = vunpack.c.l.b16 %v400
    %v1305 = vunpack.c.h.b16 %v400
    %v1306 = vunpack.c.l.b16 %v401
    %v1307 = vunpack.c.h.b16 %v401
    %v1308 = vunpack.c.l.b16 %v402
    %v1309 = vunpack.c.h.b16 %v402
    %v1310 = vunpack.c.l.b16 %v403
    %v1311 = vunpack.c.h.b16 %v403
    %v1312 = vunpack.c.l.b16 %v404
    %v1313 = vunpack.c.h.b16 %v404
    %v1314 = vunpack.c.l.b16 %v405
    %v1315 = vunpack.c.h.b16 %v405
    %v1316 = vunpack.c.l.b16 %v406
    %v1317 = vunpack.c.h.b16 %v406
    %v1318 = vunpack.c.l.b16 %v407
    %v1319 = vunpack.c.h.b16 %v407
    %v1320 = vunpack.c.l.b16 %v408
    %v1321 = vunpack.c.h.b16 %v408
    %v1322 = vunpack.c.l.b16 %v409
    %v1323 = vunpack.c.h.b16 %v409
    %v1324 = vunpack.c.l.b16 %v410
    %v1325 = vunpack.c.h.b16 %v410
    %v1326 = vunpack.c.l.b16 %v411
    %v1327 = vunpack.c.h.b16 %v411
    %v1328 = vunpack.c.l.b16 %v412
    %v1329 = vunpack.c.h.b16 %v412
    %v1330 = vunpack.c.l.b16 %v413
    %v1331 = vunpack.c.h.b16 %v413
    %v1332 = vunpack.c.l.b16 %v414
    %v1333 = vunpack.c.h.b16 %v414
    %v1334 = vunpack.c.l.b16 %v415
    %v1335 = vunpack.c.h.b16 %v415
    %v1336 = vunpack.c.l.b16 %v416
    %v1337 = vunpack.c.h.b16 %v416
    %v1338 = vunpack.c.l.b16 %v417
    %v1339 = vunpack.c.h.b16 %v417
    %v1340 = vunpack.c.l.b16 %v418
    %v1341 = vunpack.c.h.b16 %v418
    %v1342 = vunpack.c.l.b16 %v419
    %v1343 = vunpack.c.h.b16 %v419
    %v1344 = vunpack.c.l.b16 %v420
    %v1345 = vunpack.c.h.b16 %v420
    %v1346 = vunpack.c.l.b16 %v421
    %v1347 = vunpack.c.h.b16 %v421
    %v1348 = vunpack.c.l.b16 %v422
    %v1349 = vunpack.c.h.b16 %v422
    %v1350 = vunpack.c.l.b16 %v423
    %v1351 = vunpack.c.h.b16 %v423
    %v1352 = vunpack.c.l.b16 %v424
    %v1353 = vunpack.c.h.b16 %v424
    %v1354 = vunpack.c.l.b16 %v425
    %v1355 = vunpack.c.h.b16 %v425
    %v1356 = vunpack.c.l.b16 %v426
    %v1357 = vunpack.c.h.b16 %v426
    %v1358 = vunpack.c.l.b16 %v427
    %v1359 = vunpack.c.h.b16 %v427
    %v1360 = vunpack.c.l.b16 %v428
    %v1361 = vunpack.c.h.b16 %v428
    %v1362 = vunpack.c.l.b16 %v429
    %v1363 = vunpack.c.h.b16 %v429
    %v1364 = vunpack.c.l.b16 %v430
    %v1365 = vunpack.c.h.b16 %v430
    %v1366 = vunpack.c.l.b16 %v431
    %v1367 = vunpack.c.h.b16 %v431
    %v1368 = vunpack.c.l.b16 %v432
    %v1369 = vunpack.c.h.b16 %v432
    %v1370 = vunpack.c.l.b16 %v433
    %v1371 = vunpack.c.h.b16 %v433
    %v1372 = vunpack.c.l.b16 %v434
    %v1373 = vunpack.c.h.b16 %v434
    %v1374 = vunpack.c.l.b16 %v435
    %v1375 = vunpack.c.h.b16 %v435
    %v1376 = vunpack.c.l.b16 %v436
    %v1377 = vunpack.c.h.b16 %v436
    %v1378 = vunpack.c.l.b16 %v437
    %v1379 = vunpack.c.h.b16 %v437
    %v1380 = vunpack.c.l.b16 %v438
    %v1381 = vunpack.c.h.b16 %v438
    %v1382 = vunpack.c.l.b16 %v439
    %v1383 = vunpack.c.h.b16 %v439
    %v1384 = vunpack.c.l.b16 %v440
    %v1385 = vunpack.c.h.b16 %v440
    %v1386 = vunpack.c.l.b16 %v441
    %v1387 = vunpack.c.h.b16 %v441
    %v1388 = vunpack.c.l.b16 %v442
    %v1389 = vunpack.c.h.b16 %v442
    %v1390 = vunpack.c.l.b16 %v443
    %v1391 = vunpack.c.h.b16 %v443
    %v1392 = vunpack.c.l.b16 %v444
    %v1393 = vunpack.c.h.b16 %v444
    %v1394 = vunpack.c.l.b16 %v445
    %v1395 = vunpack.c.h.b16 %v445
    %v1396 = vunpack.c.l.b16 %v446
    %v1397 = vunpack.c.h.b16 %v446
    %v1398 = vunpack.c.l.b16 %v447
    %v1399 = vunpack.c.h.b16 %v447
    %v1400 = vunpack.c.l.b16 %v448
    %v1401 = vunpack.c.h.b16 %v448
    %v1402 = vunpack.c.l.b16 %v449
    %v1403 = vunpack.c.h.b16 %v449
    %v1404 = vunpack.c.l.b16 %v450
    %v1405 = vunpack.c.h.b16 %v450
    %v1406 = vunpack.c.l.b16 %v451
    %v1407 = vunpack.c.h.b16 %v451
    %v1408 = vunpack.c.l.b16 %v452
    %v1409 = vunpack.c.h.b16 %v452
    %v1410 = vunpack.c.l.b16 %v453
    %v1411 = vunpack.c.h.b16 %v453
    %v1412 = vunpack.c.l.b16 %v454
    %v1413 = vunpack.c.h.b16 %v454
    %v1414 = vunpack.c.l.b16 %v455
    %v1415 = vunpack.c.h.b16 %v455
    %v1416 = vunpack.c.l.b16 %v456
    %v1417 = vunpack.c.h.b16 %v456
    %v1418 = vunpack.c.l.b16 %v457
    %v1419 = vunpack.c.h.b16 %v457
    %v1420 = vunpack.c.l.b16 %v458
    %v1421 = vunpack.c.h.b16 %v458
    %v1422 = vunpack.c.l.b16 %v459
    %v1423 = vunpack.c.h.b16 %v459
    %v1424 = vunpack.c.l.b16 %v460
    %v1425 = vunpack.c.h.b16 %v460
    %v1426 = vunpack.c.l.b16 %v461
    %v1427 = vunpack.c.h.b16 %v461
    %v1428 = vunpack.c.l.b16 %v462
    %v1429 = vunpack.c.h.b16 %v462
    %v1430 = vunpack.c.l.b16 %v463
    %v1431 = vunpack.c.h.b16 %v463
    %v1432 = vunpack.c.l.b16 %v464
    %v1433 = vunpack.c.h.b16 %v464
    %v1434 = vunpack.c.l.b16 %v465
    %v1435 = vunpack.c.h.b16 %v465
    %v1436 = vunpack.c.l.b16 %v466
    %v1437 = vunpack.c.h.b16 %v466
    %v1438 = vunpack.c.l.b16 %v467
    %v1439 = vunpack.c.h.b16 %v467
    %v1440 = vunpack.c.l.b16 %v468
    %v1441 = vunpack.c.h.b16 %v468
    %v1442 = vunpack.c.l.b16 %v469
    %v1443 = vunpack.c.h.b16 %v469
    %v1444 = vunpack.c.l.b16 %v470
    %v1445 = vunpack.c.h.b16 %v470
    %v1446 = vunpack.c.l.b16 %v471
    %v1447 = vunpack.c.h.b16 %v471
    %v1448 = vunpack.c.l.b16 %v472
    %v1449 = vunpack.c.h.b16 %v472
    %v1450 = vunpack.c.l.b16 %v473
    %v1451 = vunpack.c.h.b16 %v473
    %v1452 = vunpack.c.l.b16 %v474
    %v1453 = vunpack.c.h.b16 %v474
    %v1454 = vunpack.c.l.b16 %v475
    %v1455 = vunpack.c.h.b16 %v475
    %v1456 = vunpack.c.l.b16 %v476
    %v1457 = vunpack.c.h.b16 %v476
    %v1458 = vunpack.c.l.b16 %v477
    %v1459 = vunpack.c.h.b16 %v477
    %v1460 = vunpack.c.l.b16 %v478
    %v1461 = vunpack.c.h.b16 %v478
    %v1462 = vunpack.c.l.b16 %v479
    %v1463 = vunpack.c.h.b16 %v479
    %v1464 = vunpack.c.l.b16 %v480
    %v1465 = vunpack.c.h.b16 %v480
    %v1466 = vunpack.c.l.b16 %v481
    %v1467 = vunpack.c.h.b16 %v481
    %v1468 = vunpack.c.l.b16 %v482
    %v1469 = vunpack.c.h.b16 %v482
    %v1470 = vunpack.c.l.b16 %v483
    %v1471 = vunpack.c.h.b16 %v483
    %v1472 = vunpack.c.l.b16 %v484
    %v1473 = vunpack.c.h.b16 %v484
    %v1474 = vunpack.c.l.b16 %v485
    %v1475 = vunpack.c.h.b16 %v485
    %v1476 = vunpack.c.l.b16 %v486
    %v1477 = vunpack.c.h.b16 %v486
    %v1478 = vunpack.c.l.b16 %v487
    %v1479 = vunpack.c.h.b16 %v487
    %v1480 = vunpack.c.l.b16 %v488
    %v1481 = vunpack.c.h.b16 %v488
    %v1482 = vunpack.c.l.b16 %v489
    %v1483 = vunpack.c.h.b16 %v489
    %v1484 = vunpack.c.l.b16 %v490
    %v1485 = vunpack.c.h.b16 %v490
    %v1486 = vunpack.c.l.b16 %v491
    %v1487 = vunpack.c.h.b16 %v491
    %v1488 = vunpack.c.l.b16 %v492
    %v1489 = vunpack.c.h.b16 %v492
    %v1490 = vunpack.c.l.b16 %v493
    %v1491 = vunpack.c.h.b16 %v493
    %v1492 = vunpack.c.l.b16 %v494
    %v1493 = vunpack.c.h.b16 %v494
    %v1494 = vunpack.c.l.b16 %v495
    %v1495 = vunpack.c.h.b16 %v495
    %v1496 = vunpack.c.l.b16 %v496
    %v1497 = vunpack.c.h.b16 %v496
    %v1498 = vunpack.c.l.b16 %v497
    %v1499 = vunpack.c.h.b16 %v497
    %v1500 = vpack.c.b16 %v864, %v860
    %v1501 = vpack.c.b16 %v865, %v861
    %v1502 = vpack.c.b16 %v866, %v862
    %v1503 = vpack.c.b16 %v867, %v863
    %v1504 = vpack.c.b16 %v872, %v868
    %v1505 = vpack.c.b16 %v873, %v869
    %v1506 = vpack.c.b16 %v874, %v870
    %v1507 = vpack.c.b16 %v875, %v871
    %v1508 = vpack.c.b16 %v880, %v876
    %v1509 = vpack.c.b16 %v881, %v877
    %v1510 = vpack.c.b16 %v882, %v878
    %v1511 = vpack.c.b16 %v883, %v879
    %v1512 = vpack.c.b16 %v888, %v884
    %v1513 = vpack.c.b16 %v889, %v885
    %v1514 = vpack.c.b16 %v890, %v886
    %v1515 = vpack.c.b16 %v891, %v887
    %v1516 = vpack.c.b16 %v896, %v892
    %v1517 = vpack.c.b16 %v897, %v893
    %v1518 = vpack.c.b16 %v898, %v894
    %v1519 = vpack.c.b16 %v899, %v895
    %v1520 = vpack.c.b16 %v904, %v900
    %v1521 = vpack.c.b16 %v905, %v901
    %v1522 = vpack.c.b16 %v906, %v902
    %v1523 = vpack.c.b16 %v907, %v903
    %v1524 = vpack.c.b16 %v912, %v908
    %v1525 = vpack.c.b16 %v913, %v909
    %v1526 = vpack.c.b16 %v914, %v910
    %v1527 = vpack.c.b16 %v915, %v911
    %v1528 = vpack.c.b16 %v920, %v916
    %v1529 = vpack.c.b16 %v921, %v917
    %v1530 = vpack.c.b16 %v922, %v918
    %v1531 = vpack.c.b16 %v923, %v919
    %v1532 = vpack.c.b16 %v928, %v924
    %v1533 = vpack.c.b16 %v929, %v925
    %v1534 = vpack.c.b16 %v930, %v926
    %v1535 = vpack.c.b16 %v931, %v927
    %v1536 = vpack.c.b16 %v936, %v932
    %v1537 = vpack.c.b16 %v937, %v933
    %v1538 = vpack.c.b16 %v938, %v934
    %v1539 = vpack.c.b16 %v939, %v935
    %v1540 = vpack.c.b16 %v944, %v940
    %v1541 = vpack.c.b16 %v945, %v941
    %v1542 = vpack.c.b16 %v946, %v942
    %v1543 = vpack.c.b16 %v947, %v943
    %v1544 = vpack.c.b16 %v952, %v948
    %v1545 = vpack.c.b16 %v953, %v949
    %v1546 = vpack.c.b16 %v954, %v950
    %v1547 = vpack.c.b16 %v955, %v951
    %v1548 = vpack.c.b16 %v960, %v956
    %v1549 = vpack.c.b16 %v961, %v957
    %v1550 = vpack.c.b16 %v962, %v958
    %v1551 = vpack.c.b16 %v963, %v959
    %v1552 = vpack.c.b16 %v968, %v964
    %v1553 = vpack.c.b16 %v969, %v965
    %v1554 = vpack.c.b16 %v970, %v966
    %v1555 = vpack.c.b16 %v971, %v967
    %v1556 = vpack.c.b16 %v976, %v972
    %v1557 = vpack.c.b16 %v977, %v973
    %v1558 = vpack.c.b16 %v978, %v974
    %v1559 = vpack.c.b16 %v979, %v975
    %v1560 = vpack.c.b16 %v984, %v980
    %v1561 = vpack.c.b16 %v985, %v981
    %v1562 = vpack.c.b16 %v986, %v982
    %v1563 = vpack.c.b16 %v987, %v983
    %v1564 = vpack.c.b16 %v992, %v988
    %v1565 = vpack.c.b16 %v993, %v989
    %v1566 = vpack.c.b16 %v994, %v990
    %v1567 = vpack.c.b16 %v995, %v991
    %v1568 = vpack.c.b16 %v1000, %v996
    %v1569 = vpack.c.b16 %v1001, %v997
    %v1570 = vpack.c.b16 %v1002, %v998
    %v1571 = vpack.c.b16 %v1003, %v999
    %v1572 = vpack.c.b16 %v1008, %v1004
    %v1573 = vpack.c.b16 %v1009, %v1005
    %v1574 = vpack.c.b16 %v1010, %v1006
    %v1575 = vpack.c.b16 %v1011, %v1007
    %v1576 = vpack.c.b16 %v1016, %v1012
    %v1577 = vpack.c.b16 %v1017, %v1013
    %v1578 = vpack.c.b16 %v1018, %v1014
    %v1579 = vpack.c.b16 %v1019, %v1015
    %v1580 = vpack.c.b16 %v1024, %v1020
    %v1581 = vpack.c.b16 %v1025, %v1021
    %v1582 = vpack.c.b16 %v1026, %v1022
    %v1583 = vpack.c.b16 %v1027, %v1023
    %v1584 = vpack.c.b16 %v1032, %v1028
    %v1585 = vpack.c.b16 %v1033, %v1029
    %v1586 = vpack.c.b16 %v1034, %v1030
    %v1587 = vpack.c.b16 %v1035, %v1031
    %v1588 = vpack.c.b16 %v1040, %v1036
    %v1589 = vpack.c.b16 %v1041, %v1037
    %v1590 = vpack.c.b16 %v1042, %v1038
    %v1591 = vpack.c.b16 %v1043, %v1039
    %v1592 = vpack.c.b16 %v1048, %v1044
    %v1593 = vpack.c.b16 %v1049, %v1045
    %v1594 = vpack.c.b16 %v1050, %v1046
    %v1595 = vpack.c.b16 %v1051, %v1047
    %v1596 = vpack.c.b16 %v1056, %v1052
    %v1597 = vpack.c.b16 %v1057, %v1053
    %v1598 = vpack.c.b16 %v1058, %v1054
    %v1599 = vpack.c.b16 %v1059, %v1055
    %v1600 = vpack.c.b16 %v1064, %v1060
    %v1601 = vpack.c.b16 %v1065, %v1061
    %v1602 = vpack.c.b16 %v1066, %v1062
    %v1603 = vpack.c.b16 %v1067, %v1063
    %v1604 = vpack.c.b16 %v1072, %v1068
    %v1605 = vpack.c.b16 %v1073, %v1069
    %v1606 = vpack.c.b16 %v1074, %v1070
    %v1607 = vpack.c.b16 %v1075, %v1071
    %v1608 = vpack.c.b16 %v1080, %v1076
    %v1609 = vpack.c.b16 %v1081, %v1077
    %v1610 = vpack.c.b16 %v1082, %v1078
    %v1611 = vpack.c.b16 %v1083, %v1079
    %v1612 = vpack.c.b16 %v1088, %v1084
    %v1613 = vpack.c.b16 %v1089, %v1085
    %v1614 = vpack.c.b16 %v1090, %v1086
    %v1615 = vpack.c.b16 %v1091, %v1087
    %v1616 = vpack.c.b16 %v1096, %v1092
    %v1617 = vpack.c.b16 %v1097, %v1093
    %v1618 = vpack.c.b16 %v1098, %v1094
    %v1619 = vpack.c.b16 %v1099, %v1095
    %v1620 = vpack.c.b16 %v1104, %v1100
    %v1621 = vpack.c.b16 %v1105, %v1101
    %v1622 = vpack.c.b16 %v1106, %v1102
    %v1623 = vpack.c.b16 %v1107, %v1103
    %v1624 = vpack.c.b16 %v1112, %v1108
    %v1625 = vpack.c.b16 %v1113, %v1109
    %v1626 = vpack.c.b16 %v1114, %v1110
    %v1627 = vpack.c.b16 %v1115, %v1111
    %v1628 = vpack.c.b16 %v1120, %v1116
    %v1629 = vpack.c.b16 %v1121, %v1117
    %v1630 = vpack.c.b16 %v1122, %v1118
    %v1631 = vpack.c.b16 %v1123, %v1119
    %v1632 = vpack.c.b16 %v1128, %v1124
    %v1633 = vpack.c.b16 %v1129, %v1125
    %v1634 = vpack.c.b16 %v1130, %v1126
    %v1635 = vpack.c.b16 %v1131, %v1127
    %v1636 = vpack.c.b16 %v1136, %v1132
    %v1637 = vpack.c.b16 %v1137, %v1133
    %v1638 = vpack.c.b16 %v1138, %v1134
    %v1639 = vpack.c.b16 %v1139, %v1135
    %v1640 = vpack.c.b16 %v1144, %v1140
    %v1641 = vpack.c.b16 %v1145, %v1141
    %v1642 = vpack.c.b16 %v1146, %v1142
    %v1643 = vpack.c.b16 %v1147, %v1143
    %v1644 = vpack.c.b16 %v1152, %v1148
    %v1645 = vpack.c.b16 %v1153, %v1149
    %v1646 = vpack.c.b16 %v1154, %v1150
    %v1647 = vpack.c.b16 %v1155, %v1151
    %v1648 = vpack.c.b16 %v1160, %v1156
    %v1649 = vpack.c.b16 %v1161, %v1157
    %v1650 = vpack.c.b16 %v1162, %v1158
    %v1651 = vpack.c.b16 %v1163, %v1159
    %v1652 = vpack.c.b16 %v1168, %v1164
    %v1653 = vpack.c.b16 %v1169, %v1165
    %v1654 = vpack.c.b16 %v1170, %v1166
    %v1655 = vpack.c.b16 %v1171, %v1167
    %v1656 = vpack.c.b16 %v1176, %v1172
    %v1657 = vpack.c.b16 %v1177, %v1173
    %v1658 = vpack.c.b16 %v1178, %v1174
    %v1659 = vpack.c.b16 %v1179, %v1175
    %v1660 = vpack.c.b16 %v1184, %v1180
    %v1661 = vpack.c.b16 %v1185, %v1181
    %v1662 = vpack.c.b16 %v1186, %v1182
    %v1663 = vpack.c.b16 %v1187, %v1183
    %v1664 = vpack.c.b16 %v1192, %v1188
    %v1665 = vpack.c.b16 %v1193, %v1189
    %v1666 = vpack.c.b16 %v1194, %v1190
    %v1667 = vpack.c.b16 %v1195, %v1191
    %v1668 = vpack.c.b16 %v1200, %v1196
    %v1669 = vpack.c.b16 %v1201, %v1197
    %v1670 = vpack.c.b16 %v1202, %v1198
    %v1671 = vpack.c.b16 %v1203, %v1199
    %v1672 = vpack.c.b16 %v1208, %v1204
    %v1673 = vpack.c.b16 %v1209, %v1205
    %v1674 = vpack.c.b16 %v1210, %v1206
    %v1675 = vpack.c.b16 %v1211, %v1207
    %v1676 = vpack.c.b16 %v1216, %v1212
    %v1677 = vpack.c.b16 %v1217, %v1213
    %v1678 = vpack.c.b16 %v1218, %v1214
    %v1679 = vpack.c.b16 %v1219, %v1215
    %v1680 = vpack.c.b16 %v1224, %v1220
    %v1681 = vpack.c.b16 %v1225, %v1221
    %v1682 = vpack.c.b16 %v1226, %v1222
    %v1683 = vpack.c.b16 %v1227, %v1223
    %v1684 = vpack.c.b16 %v1232, %v1228
    %v1685 = vpack.c.b16 %v1233, %v1229
    %v1686 = vpack.c.b16 %v1234, %v1230
    %v1687 = vpack.c.b16 %v1235, %v1231
    %v1688 = vpack.c.b16 %v1240, %v1236
    %v1689 = vpack.c.b16 %v1241, %v1237
    %v1690 = vpack.c.b16 %v1242, %v1238
    %v1691 = vpack.c.b16 %v1243, %v1239
    %v1692 = vpack.c.b16 %v1248, %v1244
    %v1693 = vpack.c.b16 %v1249, %v1245
    %v1694 = vpack.c.b16 %v1250, %v1246
    %v1695 = vpack.c.b16 %v1251, %v1247
    %v1696 = vpack.c.b16 %v1256, %v1252
    %v1697 = vpack.c.b16 %v1257, %v1253
    %v1698 = vpack.c.b16 %v1258, %v1254
    %v1699 = vpack.c.b16 %v1259, %v1255
    %v1700 = vpack.c.b16 %v1264, %v1260
    %v1701 = vpack.c.b16 %v1265, %v1261
    %v1702 = vpack.c.b16 %v1266, %v1262
    %v1703 = vpack.c.b16 %v1267, %v1263
    %v1704 = vpack.c.b16 %v1272, %v1268
    %v1705 = vpack.c.b16 %v1273, %v1269
    %v1706 = vpack.c.b16 %v1274, %v1270
    %v1707 = vpack.c.b16 %v1275, %v1271
    %v1708 = vpack.c.b16 %v1280, %v1276
    %v1709 = vpack.c.b16 %v1281, %v1277
    %v1710 = vpack.c.b16 %v1282, %v1278
    %v1711 = vpack.c.b16 %v1283, %v1279
    %v1712 = vpack.c.b16 %v1288, %v1284
    %v1713 = vpack.c.b16 %v1289, %v1285
    %v1714 = vpack.c.b16 %v1290, %v1286
    %v1715 = vpack.c.b16 %v1291, %v1287
    %v1716 = vpack.c.b16 %v1296, %v1292
    %v1717 = vpack.c.b16 %v1297, %v1293
    %v1718 = vpack.c.b16 %v1298, %v1294
    %v1719 = vpack.c.b16 %v1299, %v1295
    %v1720 = vpack.c.b16 %v1304, %v1300
    %v1721 = vpack.c.b16 %v1305, %v1301
    %v1722 = vpack.c.b16 %v1306, %v1302
    %v1723 = vpack.c.b16 %v1307, %v1303
    %v1724 = vpack.c.b16 %v1312, %v1308
    %v1725 = vpack.c.b16 %v1313, %v1309
    %v1726 = vpack.c.b16 %v1314, %v1310
    %v1727 = vpack.c.b16 %v1315, %v1311
    %v1728 = vpack.c.b16 %v1320, %v1316
    %v1729 = vpack.c.b16 %v1321, %v1317
    %v1730 = vpack.c.b16 %v1322, %v1318
    %v1731 = vpack.c.b16 %v1323, %v1319
    %v1732 = vpack.c.b16 %v1328, %v1324
    %v1733 = vpack.c.b16 %v1329, %v1325
    %v1734 = vpack.c.b16 %v1330, %v1326
    %v1735 = vpack.c.b16 %v1331, %v1327
    %v1736 = vpack.c.b16 %v1336, %v1332
    %v1737 = vpack.c.b16 %v1337, %v1333
    %v1738 = vpack.c.b16 %v1338, %v1334
    %v1739 = vpack.c.b16 %v1339, %v1335
    %v1740 = vpack.c.b16 %v1344, %v1340
    %v1741 = vpack.c.b16 %v1345, %v1341
    %v1742 = vpack.c.b16 %v1346, %v1342
    %v1743 = vpack.c.b16 %v1347, %v1343
    %v1744 = vpack.c.b16 %v1352, %v1348
    %v1745 = vpack.c.b16 %v1353, %v1349
    %v1746 = vpack.c.b16 %v1354, %v1350
    %v1747 = vpack.c.b16 %v1355, %v1351
    %v1748 = vpack.c.b16 %v1360, %v1356
    %v1749 = vpack.c.b16 %v1361, %v1357
    %v1750 = vpack.c.b16 %v1362, %v1358
    %v1751 = vpack.c.b16 %v1363, %v1359
    %v1752 = vpack.c.b16 %v1368, %v1364
    %v1753 = vpack.c.b16 %v1369, %v1365
    %v1754 = vpack.c.b16 %v1370, %v1366
    %v1755 = vpack.c.b16 %v1371, %v1367
    %v1756 = vpack.c.b16 %v1376, %v1372
    %v1757 = vpack.c.b16 %v1377, %v1373
    %v1758 = vpack.c.b16 %v1378, %v1374
    %v1759 = vpack.c.b16 %v1379, %v1375
    %v1760 = vpack.c.b16 %v1384, %v1380
    %v1761 = vpack.c.b16 %v1385, %v1381
    %v1762 = vpack.c.b16 %v1386, %v1382
    %v1763 = vpack.c.b16 %v1387, %v1383
    %v1764 = vpack.c.b16 %v1392, %v1388
    %v1765 = vpack.c.b16 %v1393, %v1389
    %v1766 = vpack.c.b16 %v1394, %v1390
    %v1767 = vpack.c.b16 %v1395, %v1391
    %v1768 = vpack.c.b16 %v1400, %v1396
    %v1769 = vpack.c.b16 %v1401, %v1397
    %v1770 = vpack.c.b16 %v1402, %v1398
    %v1771 = vpack.c.b16 %v1403, %v1399
    %v1772 = vpack.c.b16 %v1408, %v1404
    %v1773 = vpack.c.b16 %v1409, %v1405
    %v1774 = vpack.c.b16 %v1410, %v1406
    %v1775 = vpack.c.b16 %v1411, %v1407
    %v1776 = vpack.c.b16 %v1416, %v1412
    %v1777 = vpack.c.b16 %v1417, %v1413
    %v1778 = vpack.c.b16 %v1418, %v1414
    %v1779 = vpack.c.b16 %v1419, %v1415
    %v1780 = vpack.c.b16 %v1424, %v1420
    %v1781 = vpack.c.b16 %v1425, %v1421
    %v1782 = vpack.c.b16 %v1426, %v1422
    %v1783 = vpack.c.b16 %v1427, %v1423
    %v1784 = vpack.c.b16 %v1432, %v1428
    %v1785 = vpack.c.b16 %v1433, %v1429
    %v1786 = vpack.c.b16 %v1434, %v1430
    %v1787 = vpack.c.b16 %v1435, %v1431
    %v1788 = vpack.c.b16 %v1440, %v1436
    %v1789 = vpack.c.b16 %v1441, %v1437
    %v1790 = vpack.c.b16 %v1442, %v1438
    %v1791 = vpack.c.b16 %v1443, %v1439
    %v1792 = vpack.c.b16 %v1448, %v1444
    %v1793 = vpack.c.b16 %v1449, %v1445
    %v1794 = vpack.c.b16 %v1450, %v1446
    %v1795 = vpack.c.b16 %v1451, %v1447
    %v1796 = vpack.c.b16 %v1456, %v1452
    %v1797 = vpack.c.b16 %v1457, %v1453
    %v1798 = vpack.c.b16 %v1458, %v1454
    %v1799 = vpack.c.b16 %v1459, %v1455
    %v1800 = vpack.c.b16 %v1464, %v1460
    %v1801 = vpack.c.b16 %v1465, %v1461
    %v1802 = vpack.c.b16 %v1466, %v1462
    %v1803 = vpack.c.b16 %v1467, %v1463
    %v1804 = vpack.c.b16 %v1472, %v1468
    %v1805 = vpack.c.b16 %v1473, %v1469
    %v1806 = vpack.c.b16 %v1474, %v1470
    %v1807 = vpack.c.b16 %v1475, %v1471
    %v1808 = vpack.c.b16 %v1480, %v1476
    %v1809 = vpack.c.b16 %v1481, %v1477
    %v1810 = vpack.c.b16 %v1482, %v1478
    %v1811 = vpack.c.b16 %v1483, %v1479
    %v1812 = vpack.c.b16 %v1488, %v1484
    %v1813 = vpack.c.b16 %v1489, %v1485
    %v1814 = vpack.c.b16 %v1490, %v1486
    %v1815 = vpack.c.b16 %v1491, %v1487
    %v1816 = vpack.c.b16 %v1496, %v1492
    %v1817 = vpack.c.b16 %v1497, %v1493
    %v1818 = vpack.c.b16 %v1498, %v1494
    %v1819 = vpack.c.b16 %v1499, %v1495
    %2140 = vmatprep.subr.bf16.mxu0 %v1529
    %2141 = vmatpush1.bf16.msra.mxu0 %v1528
    %2142 = vmatprep.subr.bf16.mxu0 %v1525
    %2143 = vmatpush1.bf16.msra.mxu0 %v1524
    %2144 = vmatprep.subr.bf16.mxu0 %v1521
    %2145 = vmatpush1.bf16.msra.mxu0 %v1520
    %2146 = vmatprep.subr.bf16.mxu0 %v1517
    %2147 = vmatpush1.bf16.msra.mxu0 %v1516
    %2148 = vmatprep.subr.bf16.mxu0 %v1513
    %2149 = vmatpush1.bf16.msra.mxu0 %v1512
    %2150 = vmatprep.subr.bf16.mxu0 %v1509
    %2151 = vmatpush1.bf16.msra.mxu0 %v1508
    %2152 = vmatprep.subr.bf16.mxu0 %v1505
    %2153 = vmatpush1.bf16.msra.mxu0 %v1504
    %2154 = vmatprep.subr.bf16.mxu0 %v1501
    %2155 = vmatpush1.bf16.msra.mxu0 %v1500
    %2156 = vmatprep.subr.bf16.mxu0 %v1561
    %2157 = vmatpush2.bf16.msra.mxu0 %v1560
    %2158 = vmatprep.subr.bf16.mxu0 %v1557
    %2159 = vmatpush2.bf16.msra.mxu0 %v1556
    %2160 = vmatprep.subr.bf16.mxu0 %v1553
    %2161 = vmatpush2.bf16.msra.mxu0 %v1552
    %2162 = vmatprep.subr.bf16.mxu0 %v1549
    %2163 = vmatpush2.bf16.msra.mxu0 %v1548
    %2164 = vmatprep.subr.bf16.mxu0 %v1545
    %2165 = vmatpush2.bf16.msra.mxu0 %v1544
    %2166 = vmatprep.subr.bf16.mxu0 %v1541
    %2167 = vmatpush2.bf16.msra.mxu0 %v1540
    %2168 = vmatprep.subr.bf16.mxu0 %v1537
    %2169 = vmatpush2.bf16.msra.mxu0 %v1536
    %2170 = vmatprep.subr.bf16.mxu0 %v1533
    %2171 = vmatpush2.bf16.msra.mxu0 %v1532
    %2172 = vmatprep.mubr.bf16.mxu0 %v509
    %2173 = vmatmul.mubr.bf16.gmra.mxu0 %v508
    %v2174 = vpop.f32.mrf.mxu0
    %v2175 = vadd.f32 %v523, %v2174
    %v2176 = vpop.f32.mrf.mxu0
    %v2177 = vadd.f32 %v527, %v2176
    %v2178 = vpop.f32.mrf.mxu0
    %v2179 = vpop.f32.mrf.mxu0
    %2180 = vdwg.mxu0
    %2181 = vmatprep.subr.bf16.mxu0 %v1593
    %2182 = vmatpush1.bf16.msra.mxu0 %v1592
    %2183 = vmatprep.subr.bf16.mxu0 %v1589
    %2184 = vmatpush1.bf16.msra.mxu0 %v1588
    %2185 = vmatprep.subr.bf16.mxu0 %v1585
    %2186 = vmatpush1.bf16.msra.mxu0 %v1584
    %2187 = vmatprep.subr.bf16.mxu0 %v1581
    %2188 = vmatpush1.bf16.msra.mxu0 %v1580
    %2189 = vmatprep.subr.bf16.mxu0 %v1577
    %2190 = vmatpush1.bf16.msra.mxu0 %v1576
    %2191 = vmatprep.subr.bf16.mxu0 %v1573
    %2192 = vmatpush1.bf16.msra.mxu0 %v1572
    %2193 = vmatprep.subr.bf16.mxu0 %v1569
    %2194 = vmatpush1.bf16.msra.mxu0 %v1568
    %2195 = vmatprep.subr.bf16.mxu0 %v1565
    %2196 = vmatpush1.bf16.msra.mxu0 %v1564
    %2197 = vmatprep.subr.bf16.mxu0 %v1625
    %2198 = vmatpush2.bf16.msra.mxu0 %v1624
    %2199 = vmatprep.subr.bf16.mxu0 %v1621
    %2200 = vmatpush2.bf16.msra.mxu0 %v1620
    %2201 = vmatprep.subr.bf16.mxu0 %v1617
    %2202 = vmatpush2.bf16.msra.mxu0 %v1616
    %2203 = vmatprep.subr.bf16.mxu0 %v1613
    %2204 = vmatpush2.bf16.msra.mxu0 %v1612
    %2205 = vmatprep.subr.bf16.mxu0 %v1609
    %2206 = vmatpush2.bf16.msra.mxu0 %v1608
    %2207 = vmatprep.subr.bf16.mxu0 %v1605
    %2208 = vmatpush2.bf16.msra.mxu0 %v1604
    %2209 = vmatprep.subr.bf16.mxu0 %v1601
    %2210 = vmatpush2.bf16.msra.mxu0 %v1600
    %2211 = vmatprep.subr.bf16.mxu0 %v1597
    %2212 = vmatpush2.bf16.msra.mxu0 %v1596
    %2213 = vmatprep.mubr.bf16.mxu0 %v511
    %2214 = vmatmul.mubr.bf16.gmra.mxu0 %v510
    %v2215 = vpop.f32.mrf.mxu0
    %v2216 = vadd.f32 %v2175, %v2215
    %v2217 = vpop.f32.mrf.mxu0
    %v2218 = vadd.f32 %v2177, %v2217
    %v2219 = vpop.f32.mrf.mxu0
    %v2220 = vpop.f32.mrf.mxu0
    %2221 = vdwg.mxu0
    %2222 = vmatprep.subr.bf16.mxu0 %v1657
    %2223 = vmatpush1.bf16.msra.mxu0 %v1656
    %2224 = vmatprep.subr.bf16.mxu0 %v1653
    %2225 = vmatpush1.bf16.msra.mxu0 %v1652
    %2226 = vmatprep.subr.bf16.mxu0 %v1649
    %2227 = vmatpush1.bf16.msra.mxu0 %v1648
    %2228 = vmatprep.subr.bf16.mxu0 %v1645
    %2229 = vmatpush1.bf16.msra.mxu0 %v1644
    %2230 = vmatprep.subr.bf16.mxu0 %v1641
    %2231 = vmatpush1.bf16.msra.mxu0 %v1640
    %2232 = vmatprep.subr.bf16.mxu0 %v1637
    %2233 = vmatpush1.bf16.msra.mxu0 %v1636
    %2234 = vmatprep.subr.bf16.mxu0 %v1633
    %2235 = vmatpush1.bf16.msra.mxu0 %v1632
    %2236 = vmatprep.subr.bf16.mxu0 %v1629
    %2237 = vmatpush1.bf16.msra.mxu0 %v1628
    %2238 = vmatprep.subr.bf16.mxu0 %v1689
    %2239 = vmatpush2.bf16.msra.mxu0 %v1688
    %2240 = vmatprep.subr.bf16.mxu0 %v1685
    %2241 = vmatpush2.bf16.msra.mxu0 %v1684
    %2242 = vmatprep.subr.bf16.mxu0 %v1681
    %2243 = vmatpush2.bf16.msra.mxu0 %v1680
    %2244 = vmatprep.subr.bf16.mxu0 %v1677
    %2245 = vmatpush2.bf16.msra.mxu0 %v1676
    %2246 = vmatprep.subr.bf16.mxu0 %v1673
    %2247 = vmatpush2.bf16.msra.mxu0 %v1672
    %2248 = vmatprep.subr.bf16.mxu0 %v1669
    %2249 = vmatpush2.bf16.msra.mxu0 %v1668
    %2250 = vmatprep.subr.bf16.mxu0 %v1665
    %2251 = vmatpush2.bf16.msra.mxu0 %v1664
    %2252 = vmatprep.subr.bf16.mxu0 %v1661
    %2253 = vmatpush2.bf16.msra.mxu0 %v1660
    %2254 = vmatprep.mubr.bf16.mxu0 %v513
    %2255 = vmatmul.mubr.bf16.gmra.mxu0 %v512
    %v2256 = vpop.f32.mrf.mxu0
    %v2257 = vadd.f32 %v2216, %v2256
    %v2258 = vpop.f32.mrf.mxu0
    %v2259 = vadd.f32 %v2218, %v2258
    %v2260 = vpop.f32.mrf.mxu0
    %v2261 = vpop.f32.mrf.mxu0
    %2262 = vdwg.mxu0
    %2263 = vmatprep.subr.bf16.mxu0 %v1721
    %2264 = vmatpush1.bf16.msra.mxu0 %v1720
    %2265 = vmatprep.subr.bf16.mxu0 %v1717
    %2266 = vmatpush1.bf16.msra.mxu0 %v1716
    %2267 = vmatprep.subr.bf16.mxu0 %v1713
    %2268 = vmatpush1.bf16.msra.mxu0 %v1712
    %2269 = vmatprep.subr.bf16.mxu0 %v1709
    %2270 = vmatpush1.bf16.msra.mxu0 %v1708
    %2271 = vmatprep.subr.bf16.mxu0 %v1705
    %2272 = vmatpush1.bf16.msra.mxu0 %v1704
    %2273 = vmatprep.subr.bf16.mxu0 %v1701
    %2274 = vmatpush1.bf16.msra.mxu0 %v1700
    %2275 = vmatprep.subr.bf16.mxu0 %v1697
    %2276 = vmatpush1.bf16.msra.mxu0 %v1696
    %2277 = vmatprep.subr.bf16.mxu0 %v1693
    %2278 = vmatpush1.bf16.msra.mxu0 %v1692
    %2279 = vmatprep.subr.bf16.mxu0 %v1753
    %2280 = vmatpush2.bf16.msra.mxu0 %v1752
    %2281 = vmatprep.subr.bf16.mxu0 %v1749
    %2282 = vmatpush2.bf16.msra.mxu0 %v1748
    %2283 = vmatprep.subr.bf16.mxu0 %v1745
    %2284 = vmatpush2.bf16.msra.mxu0 %v1744
    %2285 = vmatprep.subr.bf16.mxu0 %v1741
    %2286 = vmatpush2.bf16.msra.mxu0 %v1740
    %2287 = vmatprep.subr.bf16.mxu0 %v1737
    %2288 = vmatpush2.bf16.msra.mxu0 %v1736
    %2289 = vmatprep.subr.bf16.mxu0 %v1733
    %2290 = vmatpush2.bf16.msra.mxu0 %v1732
    %2291 = vmatprep.subr.bf16.mxu0 %v1729
    %2292 = vmatpush2.bf16.msra.mxu0 %v1728
    %2293 = vmatprep.subr.bf16.mxu0 %v1725
    %2294 = vmatpush2.bf16.msra.mxu0 %v1724
    %2295 = vmatprep.mubr.bf16.mxu0 %v515
    %2296 = vmatmul.mubr.bf16.gmra.mxu0 %v514
    %v2297 = vpop.f32.mrf.mxu0
    %v2298 = vadd.f32 %v2257, %v2297
    %v2299 = vpop.f32.mrf.mxu0
    %v2300 = vadd.f32 %v2259, %v2299
    %v2301 = vpop.f32.mrf.mxu0
    %v2302 = vpop.f32.mrf.mxu0
    %2303 = vdwg.mxu0
    %2304 = vmatprep.subr.bf16.mxu0 %v1785
    %2305 = vmatpush1.bf16.msra.mxu0 %v1784
    %2306 = vmatprep.subr.bf16.mxu0 %v1781
    %2307 = vmatpush1.bf16.msra.mxu0 %v1780
    %2308 = vmatprep.subr.bf16.mxu0 %v1777
    %2309 = vmatpush1.bf16.msra.mxu0 %v1776
    %2310 = vmatprep.subr.bf16.mxu0 %v1773
    %2311 = vmatpush1.bf16.msra.mxu0 %v1772
    %2312 = vmatprep.subr.bf16.mxu0 %v1769
    %2313 = vmatpush1.bf16.msra.mxu0 %v1768
    %2314 = vmatprep.subr.bf16.mxu0 %v1765
    %2315 = vmatpush1.bf16.msra.mxu0 %v1764
    %2316 = vmatprep.subr.bf16.mxu0 %v1761
    %2317 = vmatpush1.bf16.msra.mxu0 %v1760
    %2318 = vmatprep.subr.bf16.mxu0 %v1757
    %2319 = vmatpush1.bf16.msra.mxu0 %v1756
    %2320 = vmatprep.subr.bf16.mxu0 %v1817
    %2321 = vmatpush2.bf16.msra.mxu0 %v1816
    %2322 = vmatprep.subr.bf16.mxu0 %v1813
    %2323 = vmatpush2.bf16.msra.mxu0 %v1812
    %2324 = vmatprep.subr.bf16.mxu0 %v1809
    %2325 = vmatpush2.bf16.msra.mxu0 %v1808
    %2326 = vmatprep.subr.bf16.mxu0 %v1805
    %2327 = vmatpush2.bf16.msra.mxu0 %v1804
    %2328 = vmatprep.subr.bf16.mxu0 %v1801
    %2329 = vmatpush2.bf16.msra.mxu0 %v1800
    %2330 = vmatprep.subr.bf16.mxu0 %v1797
    %2331 = vmatpush2.bf16.msra.mxu0 %v1796
    %2332 = vmatprep.subr.bf16.mxu0 %v1793
    %2333 = vmatpush2.bf16.msra.mxu0 %v1792
    %2334 = vmatprep.subr.bf16.mxu0 %v1789
    %2335 = vmatpush2.bf16.msra.mxu0 %v1788
    %2336 = vmatprep.mubr.bf16.mxu0 %v517
    %2337 = vmatmul.mubr.bf16.gmra.mxu0 %v516
    %v2338 = vpop.f32.mrf.mxu0
    %v2339 = vadd.f32 %v2298, %v2338
    %v2340 = vpop.f32.mrf.mxu0
    %v2341 = vadd.f32 %v2300, %v2340
    %v2342 = vpop.f32.mrf.mxu0
    %v2343 = vpop.f32.mrf.mxu0
    %2344 = vdwg.mxu0
    %2345 = vmatprep.subr.bf16.mxu0 %v1531
    %2346 = vmatpush1.bf16.msra.mxu0 %v1530
    %2347 = vmatprep.subr.bf16.mxu0 %v1527
    %2348 = vmatpush1.bf16.msra.mxu0 %v1526
    %2349 = vmatprep.subr.bf16.mxu0 %v1523
    %2350 = vmatpush1.bf16.msra.mxu0 %v1522
    %2351 = vmatprep.subr.bf16.mxu0 %v1519
    %2352 = vmatpush1.bf16.msra.mxu0 %v1518
    %2353 = vmatprep.subr.bf16.mxu0 %v1515
    %2354 = vmatpush1.bf16.msra.mxu0 %v1514
    %2355 = vmatprep.subr.bf16.mxu0 %v1511
    %2356 = vmatpush1.bf16.msra.mxu0 %v1510
    %2357 = vmatprep.subr.bf16.mxu0 %v1507
    %2358 = vmatpush1.bf16.msra.mxu0 %v1506
    %2359 = vmatprep.subr.bf16.mxu0 %v1503
    %2360 = vmatpush1.bf16.msra.mxu0 %v1502
    %2361 = vmatprep.subr.bf16.mxu0 %v1563
    %2362 = vmatpush2.bf16.msra.mxu0 %v1562
    %2363 = vmatprep.subr.bf16.mxu0 %v1559
    %2364 = vmatpush2.bf16.msra.mxu0 %v1558
    %2365 = vmatprep.subr.bf16.mxu0 %v1555
    %2366 = vmatpush2.bf16.msra.mxu0 %v1554
    %2367 = vmatprep.subr.bf16.mxu0 %v1551
    %2368 = vmatpush2.bf16.msra.mxu0 %v1550
    %2369 = vmatprep.subr.bf16.mxu0 %v1547
    %2370 = vmatpush2.bf16.msra.mxu0 %v1546
    %2371 = vmatprep.subr.bf16.mxu0 %v1543
    %2372 = vmatpush2.bf16.msra.mxu0 %v1542
    %2373 = vmatprep.subr.bf16.mxu0 %v1539
    %2374 = vmatpush2.bf16.msra.mxu0 %v1538
    %2375 = vmatprep.subr.bf16.mxu0 %v1535
    %2376 = vmatpush2.bf16.msra.mxu0 %v1534
    %2377 = vmatprep.mubr.bf16.mxu0 %v509
    %2378 = vmatmul.mubr.bf16.gmra.mxu0 %v508
    %v2379 = vpop.f32.mrf.mxu0
    %v2380 = vadd.f32 %v531, %v2379
    %v2381 = vpop.f32.mrf.mxu0
    %v2382 = vadd.f32 %v535, %v2381
    %v2383 = vpop.f32.mrf.mxu0
    %v2384 = vpop.f32.mrf.mxu0
    %2385 = vdwg.mxu0
    %2386 = vmatprep.subr.bf16.mxu0 %v1595
    %2387 = vmatpush1.bf16.msra.mxu0 %v1594
    %2388 = vmatprep.subr.bf16.mxu0 %v1591
    %2389 = vmatpush1.bf16.msra.mxu0 %v1590
    %2390 = vmatprep.subr.bf16.mxu0 %v1587
    %2391 = vmatpush1.bf16.msra.mxu0 %v1586
    %2392 = vmatprep.subr.bf16.mxu0 %v1583
    %2393 = vmatpush1.bf16.msra.mxu0 %v1582
    %2394 = vmatprep.subr.bf16.mxu0 %v1579
    %2395 = vmatpush1.bf16.msra.mxu0 %v1578
    %2396 = vmatprep.subr.bf16.mxu0 %v1575
    %2397 = vmatpush1.bf16.msra.mxu0 %v1574
    %2398 = vmatprep.subr.bf16.mxu0 %v1571
    %2399 = vmatpush1.bf16.msra.mxu0 %v1570
    %2400 = vmatprep.subr.bf16.mxu0 %v1567
    %2401 = vmatpush1.bf16.msra.mxu0 %v1566
    %2402 = vmatprep.subr.bf16.mxu0 %v1627
    %2403 = vmatpush2.bf16.msra.mxu0 %v1626
    %2404 = vmatprep.subr.bf16.mxu0 %v1623
    %2405 = vmatpush2.bf16.msra.mxu0 %v1622
    %2406 = vmatprep.subr.bf16.mxu0 %v1619
    %2407 = vmatpush2.bf16.msra.mxu0 %v1618
    %2408 = vmatprep.subr.bf16.mxu0 %v1615
    %2409 = vmatpush2.bf16.msra.mxu0 %v1614
    %2410 = vmatprep.subr.bf16.mxu0 %v1611
    %2411 = vmatpush2.bf16.msra.mxu0 %v1610
    %2412 = vmatprep.subr.bf16.mxu0 %v1607
    %2413 = vmatpush2.bf16.msra.mxu0 %v1606
    %2414 = vmatprep.subr.bf16.mxu0 %v1603
    %2415 = vmatpush2.bf16.msra.mxu0 %v1602
    %2416 = vmatprep.subr.bf16.mxu0 %v1599
    %2417 = vmatpush2.bf16.msra.mxu0 %v1598
    %2418 = vmatprep.mubr.bf16.mxu0 %v511
    %2419 = vmatmul.mubr.bf16.gmra.mxu0 %v510
    %v2420 = vpop.f32.mrf.mxu0
    %v2421 = vadd.f32 %v2380, %v2420
    %v2422 = vpop.f32.mrf.mxu0
    %v2423 = vadd.f32 %v2382, %v2422
    %v2424 = vpop.f32.mrf.mxu0
    %v2425 = vpop.f32.mrf.mxu0
    %2426 = vdwg.mxu0
    %2427 = vmatprep.subr.bf16.mxu0 %v1659
    %2428 = vmatpush1.bf16.msra.mxu0 %v1658
    %2429 = vmatprep.subr.bf16.mxu0 %v1655
    %2430 = vmatpush1.bf16.msra.mxu0 %v1654
    %2431 = vmatprep.subr.bf16.mxu0 %v1651
    %2432 = vmatpush1.bf16.msra.mxu0 %v1650
    %2433 = vmatprep.subr.bf16.mxu0 %v1647
    %2434 = vmatpush1.bf16.msra.mxu0 %v1646
    %2435 = vmatprep.subr.bf16.mxu0 %v1643
    %2436 = vmatpush1.bf16.msra.mxu0 %v1642
    %2437 = vmatprep.subr.bf16.mxu0 %v1639
    %2438 = vmatpush1.bf16.msra.mxu0 %v1638
    %2439 = vmatprep.subr.bf16.mxu0 %v1635
    %2440 = vmatpush1.bf16.msra.mxu0 %v1634
    %2441 = vmatprep.subr.bf16.mxu0 %v1631
    %2442 = vmatpush1.bf16.msra.mxu0 %v1630
    %2443 = vmatprep.subr.bf16.mxu0 %v1691
    %2444 = vmatpush2.bf16.msra.mxu0 %v1690
    %2445 = vmatprep.subr.bf16.mxu0 %v1687
    %2446 = vmatpush2.bf16.msra.mxu0 %v1686
    %2447 = vmatprep.subr.bf16.mxu0 %v1683
    %2448 = vmatpush2.bf16.msra.mxu0 %v1682
    %2449 = vmatprep.subr.bf16.mxu0 %v1679
    %2450 = vmatpush2.bf16.msra.mxu0 %v1678
    %2451 = vmatprep.subr.bf16.mxu0 %v1675
    %2452 = vmatpush2.bf16.msra.mxu0 %v1674
    %2453 = vmatprep.subr.bf16.mxu0 %v1671
    %2454 = vmatpush2.bf16.msra.mxu0 %v1670
    %2455 = vmatprep.subr.bf16.mxu0 %v1667
    %2456 = vmatpush2.bf16.msra.mxu0 %v1666
    %2457 = vmatprep.subr.bf16.mxu0 %v1663
    %2458 = vmatpush2.bf16.msra.mxu0 %v1662
    %2459 = vmatprep.mubr.bf16.mxu0 %v513
    %2460 = vmatmul.mubr.bf16.gmra.mxu0 %v512
    %v2461 = vpop.f32.mrf.mxu0
    %v2462 = vadd.f32 %v2421, %v2461
    %v2463 = vpop.f32.mrf.mxu0
    %v2464 = vadd.f32 %v2423, %v2463
    %v2465 = vpop.f32.mrf.mxu0
    %v2466 = vpop.f32.mrf.mxu0
    %2467 = vdwg.mxu0
    %2468 = vmatprep.subr.bf16.mxu0 %v1723
    %2469 = vmatpush1.bf16.msra.mxu0 %v1722
    %2470 = vmatprep.subr.bf16.mxu0 %v1719
    %2471 = vmatpush1.bf16.msra.mxu0 %v1718
    %2472 = vmatprep.subr.bf16.mxu0 %v1715
    %2473 = vmatpush1.bf16.msra.mxu0 %v1714
    %2474 = vmatprep.subr.bf16.mxu0 %v1711
    %2475 = vmatpush1.bf16.msra.mxu0 %v1710
    %2476 = vmatprep.subr.bf16.mxu0 %v1707
    %2477 = vmatpush1.bf16.msra.mxu0 %v1706
    %2478 = vmatprep.subr.bf16.mxu0 %v1703
    %2479 = vmatpush1.bf16.msra.mxu0 %v1702
    %2480 = vmatprep.subr.bf16.mxu0 %v1699
    %2481 = vmatpush1.bf16.msra.mxu0 %v1698
    %2482 = vmatprep.subr.bf16.mxu0 %v1695
    %2483 = vmatpush1.bf16.msra.mxu0 %v1694
    %2484 = vmatprep.subr.bf16.mxu0 %v1755
    %2485 = vmatpush2.bf16.msra.mxu0 %v1754
    %2486 = vmatprep.subr.bf16.mxu0 %v1751
    %2487 = vmatpush2.bf16.msra.mxu0 %v1750
    %2488 = vmatprep.subr.bf16.mxu0 %v1747
    %2489 = vmatpush2.bf16.msra.mxu0 %v1746
    %2490 = vmatprep.subr.bf16.mxu0 %v1743
    %2491 = vmatpush2.bf16.msra.mxu0 %v1742
    %2492 = vmatprep.subr.bf16.mxu0 %v1739
    %2493 = vmatpush2.bf16.msra.mxu0 %v1738
    %2494 = vmatprep.subr.bf16.mxu0 %v1735
    %2495 = vmatpush2.bf16.msra.mxu0 %v1734
    %2496 = vmatprep.subr.bf16.mxu0 %v1731
    %2497 = vmatpush2.bf16.msra.mxu0 %v1730
    %2498 = vmatprep.subr.bf16.mxu0 %v1727
    %2499 = vmatpush2.bf16.msra.mxu0 %v1726
    %2500 = vmatprep.mubr.bf16.mxu0 %v515
    %2501 = vmatmul.mubr.bf16.gmra.mxu0 %v514
    %v2502 = vpop.f32.mrf.mxu0
    %v2503 = vadd.f32 %v2462, %v2502
    %v2504 = vpop.f32.mrf.mxu0
    %v2505 = vadd.f32 %v2464, %v2504
    %v2506 = vpop.f32.mrf.mxu0
    %v2507 = vpop.f32.mrf.mxu0
    %2508 = vdwg.mxu0
    %2509 = vmatprep.subr.bf16.mxu0 %v1787
    %2510 = vmatpush1.bf16.msra.mxu0 %v1786
    %2511 = vmatprep.subr.bf16.mxu0 %v1783
    %2512 = vmatpush1.bf16.msra.mxu0 %v1782
    %2513 = vmatprep.subr.bf16.mxu0 %v1779
    %2514 = vmatpush1.bf16.msra.mxu0 %v1778
    %2515 = vmatprep.subr.bf16.mxu0 %v1775
    %2516 = vmatpush1.bf16.msra.mxu0 %v1774
    %2517 = vmatprep.subr.bf16.mxu0 %v1771
    %2518 = vmatpush1.bf16.msra.mxu0 %v1770
    %2519 = vmatprep.subr.bf16.mxu0 %v1767
    %2520 = vmatpush1.bf16.msra.mxu0 %v1766
    %2521 = vmatprep.subr.bf16.mxu0 %v1763
    %2522 = vmatpush1.bf16.msra.mxu0 %v1762
    %2523 = vmatprep.subr.bf16.mxu0 %v1759
    %2524 = vmatpush1.bf16.msra.mxu0 %v1758
    %2525 = vmatprep.subr.bf16.mxu0 %v1819
    %2526 = vmatpush2.bf16.msra.mxu0 %v1818
    %2527 = vmatprep.subr.bf16.mxu0 %v1815
    %2528 = vmatpush2.bf16.msra.mxu0 %v1814
    %2529 = vmatprep.subr.bf16.mxu0 %v1811
    %2530 = vmatpush2.bf16.msra.mxu0 %v1810
    %2531 = vmatprep.subr.bf16.mxu0 %v1807
    %2532 = vmatpush2.bf16.msra.mxu0 %v1806
    %2533 = vmatprep.subr.bf16.mxu0 %v1803
    %2534 = vmatpush2.bf16.msra.mxu0 %v1802
    %2535 = vmatprep.subr.bf16.mxu0 %v1799
    %2536 = vmatpush2.bf16.msra.mxu0 %v1798
    %2537 = vmatprep.subr.bf16.mxu0 %v1795
    %2538 = vmatpush2.bf16.msra.mxu0 %v1794
    %2539 = vmatprep.subr.bf16.mxu0 %v1791
    %2540 = vmatpush2.bf16.msra.mxu0 %v1790
    %2541 = vmatprep.mubr.bf16.mxu0 %v517
    %2542 = vmatmul.mubr.bf16.gmra.mxu0 %v516
    %v2543 = vpop.f32.mrf.mxu0
    %v2544 = vadd.f32 %v2503, %v2543
    %v2545 = vpop.f32.mrf.mxu0
    %v2546 = vadd.f32 %v2505, %v2545
    %v2547 = vpop.f32.mrf.mxu0
    %v2548 = vpop.f32.mrf.mxu0
    %2549 = vdwg.mxu0
    %v2550 = vmax.f32 %v2339, 0.0
    %v2551 = vmax.f32 %v2341, 0.0
    %v2552 = vmax.f32 %v2544, 0.0
    %v2553 = vmax.f32 %v2546, 0.0
    %v2554 = vpack.c.bf16 %v2550, %v2550
    %v2555 = vpack.c.bf16 %v2551, %v2551
    %v2556 = vpack.c.bf16 %v2552, %v2552
    %v2557 = vpack.c.bf16 %v2553, %v2553
    %v2558 = vld [vmem:[#allocation6] sm:$0xf]
    %v2559 = vld [vmem:[#allocation6 + $0x4] sm:$0xf]
    %v2560 = vld [vmem:[#allocation6 + $0x8] sm:$0xf]
    %v2561 = vld [vmem:[#allocation6 + $0xc] sm:$0xf]
    %v2562 = vld [vmem:[#allocation6 + $0x10] sm:$0xf]
    %v2563 = vld [vmem:[#allocation6 + $0x14] sm:$0xf]
    %v2564 = vld [vmem:[#allocation6 + $0x18] sm:$0xf]
    %v2565 = vld [vmem:[#allocation6 + $0x1c] sm:$0xf]
    %v2566 = vld [vmem:[#allocation6 + $0x20] sm:$0xf]
    %v2567 = vld [vmem:[#allocation6 + $0x24] sm:$0xf]
    %v2568 = vld [vmem:[#allocation6 + $0x28] sm:$0xf]
    %v2569 = vld [vmem:[#allocation6 + $0x2c] sm:$0xf]
    %v2570 = vld [vmem:[#allocation6 + $0x30] sm:$0xf]
    %v2571 = vld [vmem:[#allocation6 + $0x34] sm:$0xf]
    %v2572 = vld [vmem:[#allocation6 + $0x38] sm:$0xf]
    %v2573 = vld [vmem:[#allocation6 + $0x3c] sm:$0xf]
    %v2574 = vld [vmem:[#allocation6 + $0x40] sm:$0xf]
    %v2575 = vld [vmem:[#allocation6 + $0x44] sm:$0xf]
    %v2576 = vld [vmem:[#allocation6 + $0x48] sm:$0xf]
    %v2577 = vld [vmem:[#allocation6 + $0x4c] sm:$0xf]
    %v2578 = vld [vmem:[#allocation6 + $0x50] sm:$0xf]
    %v2579 = vld [vmem:[#allocation6 + $0x54] sm:$0xf]
    %v2580 = vld [vmem:[#allocation6 + $0x58] sm:$0xf]
    %v2581 = vld [vmem:[#allocation6 + $0x5c] sm:$0xf]
    %v2582 = vld [vmem:[#allocation6 + $0x60] sm:$0xf]
    %v2583 = vld [vmem:[#allocation6 + $0x64] sm:$0xf]
    %v2584 = vld [vmem:[#allocation6 + $0x68] sm:$0xf]
    %v2585 = vld [vmem:[#allocation6 + $0x6c] sm:$0xf]
    %v2586 = vld [vmem:[#allocation6 + $0x70] sm:$0xf]
    %v2587 = vld [vmem:[#allocation6 + $0x74] sm:$0xf]
    %v2588 = vld [vmem:[#allocation6 + $0x78] sm:$0xf]
    %v2589 = vld [vmem:[#allocation6 + $0x7c] sm:$0xf]
    %v2590 = vld [vmem:[#allocation6 + $0x80] sm:$0xf]
    %v2591 = vld [vmem:[#allocation6 + $0x84] sm:$0xf]
    %v2592 = vld [vmem:[#allocation6 + $0x88] sm:$0xf]
    %v2593 = vld [vmem:[#allocation6 + $0x8c] sm:$0xf]
    %v2594 = vld [vmem:[#allocation6 + $0x90] sm:$0xf]
    %v2595 = vld [vmem:[#allocation6 + $0x94] sm:$0xf]
    %v2596 = vld [vmem:[#allocation6 + $0x98] sm:$0xf]
    %v2597 = vld [vmem:[#allocation6 + $0x9c] sm:$0xf]
    %v2598 = vld [vmem:[#allocation6 + $0xa0] sm:$0xf]
    %v2599 = vld [vmem:[#allocation6 + $0xa4] sm:$0xf]
    %v2600 = vld [vmem:[#allocation6 + $0xa8] sm:$0xf]
    %v2601 = vld [vmem:[#allocation6 + $0xac] sm:$0xf]
    %v2602 = vld [vmem:[#allocation6 + $0xb0] sm:$0xf]
    %v2603 = vld [vmem:[#allocation6 + $0xb4] sm:$0xf]
    %v2604 = vld [vmem:[#allocation6 + $0xb8] sm:$0xf]
    %v2605 = vld [vmem:[#allocation6 + $0xbc] sm:$0xf]
    %v2606 = vld [vmem:[#allocation6 + $0xc0] sm:$0xf]
    %v2607 = vld [vmem:[#allocation6 + $0xc4] sm:$0xf]
    %v2608 = vld [vmem:[#allocation6 + $0xc8] sm:$0xf]
    %v2609 = vld [vmem:[#allocation6 + $0xcc] sm:$0xf]
    %v2610 = vld [vmem:[#allocation6 + $0xd0] sm:$0xf]
    %v2611 = vld [vmem:[#allocation6 + $0xd4] sm:$0xf]
    %v2612 = vld [vmem:[#allocation6 + $0xd8] sm:$0xf]
    %v2613 = vld [vmem:[#allocation6 + $0xdc] sm:$0xf]
    %v2614 = vld [vmem:[#allocation6 + $0xe0] sm:$0xf]
    %v2615 = vld [vmem:[#allocation6 + $0xe4] sm:$0xf]
    %v2616 = vld [vmem:[#allocation6 + $0xe8] sm:$0xf]
    %v2617 = vld [vmem:[#allocation6 + $0xec] sm:$0xf]
    %v2618 = vld [vmem:[#allocation6 + $0xf0] sm:$0xf]
    %v2619 = vld [vmem:[#allocation6 + $0xf4] sm:$0xf]
    %v2620 = vld [vmem:[#allocation6 + $0xf8] sm:$0xf]
    %v2621 = vld [vmem:[#allocation6 + $0xfc] sm:$0xf]
    %v2622 = vld [vmem:[#allocation7] sm:$0x1]
    %v2624 = vlaneseq
    %v2625 = vshrl.u32 %v2624, 7
    %v2626 = vsub.s32 0, %v2625
    %v2627 = vrot.slane %v2622, %v2626
    %v2693 = vunpack.c.l.b16 %v2558
    %v2694 = vunpack.c.l.b16 %v2559
    %v2695 = vunpack.c.l.b16 %v2560
    %v2696 = vunpack.c.l.b16 %v2561
    %v2697 = vunpack.c.l.b16 %v2562
    %v2698 = vunpack.c.l.b16 %v2563
    %v2699 = vunpack.c.l.b16 %v2564
    %v2700 = vunpack.c.l.b16 %v2565
    %v2701 = vunpack.c.l.b16 %v2566
    %v2702 = vunpack.c.l.b16 %v2567
    %v2703 = vunpack.c.l.b16 %v2568
    %v2704 = vunpack.c.l.b16 %v2569
    %v2705 = vunpack.c.l.b16 %v2570
    %v2706 = vunpack.c.l.b16 %v2571
    %v2707 = vunpack.c.l.b16 %v2572
    %v2708 = vunpack.c.l.b16 %v2573
    %v2709 = vunpack.c.l.b16 %v2574
    %v2710 = vunpack.c.l.b16 %v2575
    %v2711 = vunpack.c.l.b16 %v2576
    %v2712 = vunpack.c.l.b16 %v2577
    %v2713 = vunpack.c.l.b16 %v2578
    %v2714 = vunpack.c.l.b16 %v2579
    %v2715 = vunpack.c.l.b16 %v2580
    %v2716 = vunpack.c.l.b16 %v2581
    %v2717 = vunpack.c.l.b16 %v2582
    %v2718 = vunpack.c.l.b16 %v2583
    %v2719 = vunpack.c.l.b16 %v2584
    %v2720 = vunpack.c.l.b16 %v2585
    %v2721 = vunpack.c.l.b16 %v2586
    %v2722 = vunpack.c.l.b16 %v2587
    %v2723 = vunpack.c.l.b16 %v2588
    %v2724 = vunpack.c.l.b16 %v2589
    %v2725 = vunpack.c.l.b16 %v2590
    %v2726 = vunpack.c.l.b16 %v2591
    %v2727 = vunpack.c.l.b16 %v2592
    %v2728 = vunpack.c.l.b16 %v2593
    %v2729 = vunpack.c.l.b16 %v2594
    %v2730 = vunpack.c.l.b16 %v2595
    %v2731 = vunpack.c.l.b16 %v2596
    %v2732 = vunpack.c.l.b16 %v2597
    %v2733 = vunpack.c.l.b16 %v2598
    %v2734 = vunpack.c.l.b16 %v2599
    %v2735 = vunpack.c.l.b16 %v2600
    %v2736 = vunpack.c.l.b16 %v2601
    %v2737 = vunpack.c.l.b16 %v2602
    %v2738 = vunpack.c.l.b16 %v2603
    %v2739 = vunpack.c.l.b16 %v2604
    %v2740 = vunpack.c.l.b16 %v2605
    %v2741 = vunpack.c.l.b16 %v2606
    %v2742 = vunpack.c.l.b16 %v2607
    %v2743 = vunpack.c.l.b16 %v2608
    %v2744 = vunpack.c.l.b16 %v2609
    %v2745 = vunpack.c.l.b16 %v2610
    %v2746 = vunpack.c.l.b16 %v2611
    %v2747 = vunpack.c.l.b16 %v2612
    %v2748 = vunpack.c.l.b16 %v2613
    %v2749 = vunpack.c.l.b16 %v2614
    %v2750 = vunpack.c.l.b16 %v2615
    %v2751 = vunpack.c.l.b16 %v2616
    %v2752 = vunpack.c.l.b16 %v2617
    %v2753 = vunpack.c.l.b16 %v2618
    %v2754 = vunpack.c.l.b16 %v2619
    %v2755 = vunpack.c.l.b16 %v2620
    %v2756 = vunpack.c.l.b16 %v2621
    %v2757 = vpack.c.b16 %v2694, %v2693
    %v2758 = vpack.c.b16 %v2696, %v2695
    %v2759 = vpack.c.b16 %v2698, %v2697
    %v2760 = vpack.c.b16 %v2700, %v2699
    %v2761 = vpack.c.b16 %v2702, %v2701
    %v2762 = vpack.c.b16 %v2704, %v2703
    %v2763 = vpack.c.b16 %v2706, %v2705
    %v2764 = vpack.c.b16 %v2708, %v2707
    %v2765 = vpack.c.b16 %v2710, %v2709
    %v2766 = vpack.c.b16 %v2712, %v2711
    %v2767 = vpack.c.b16 %v2714, %v2713
    %v2768 = vpack.c.b16 %v2716, %v2715
    %v2769 = vpack.c.b16 %v2718, %v2717
    %v2770 = vpack.c.b16 %v2720, %v2719
    %v2771 = vpack.c.b16 %v2722, %v2721
    %v2772 = vpack.c.b16 %v2724, %v2723
    %v2773 = vpack.c.b16 %v2726, %v2725
    %v2774 = vpack.c.b16 %v2728, %v2727
    %v2775 = vpack.c.b16 %v2730, %v2729
    %v2776 = vpack.c.b16 %v2732, %v2731
    %v2777 = vpack.c.b16 %v2734, %v2733
    %v2778 = vpack.c.b16 %v2736, %v2735
    %v2779 = vpack.c.b16 %v2738, %v2737
    %v2780 = vpack.c.b16 %v2740, %v2739
    %v2781 = vpack.c.b16 %v2742, %v2741
    %v2782 = vpack.c.b16 %v2744, %v2743
    %v2783 = vpack.c.b16 %v2746, %v2745
    %v2784 = vpack.c.b16 %v2748, %v2747
    %v2785 = vpack.c.b16 %v2750, %v2749
    %v2786 = vpack.c.b16 %v2752, %v2751
    %v2787 = vpack.c.b16 %v2754, %v2753
    %v2788 = vpack.c.b16 %v2756, %v2755
    %2821 = vmatprep.subr.bf16.mxu0 0
    %2822 = vmatpush1.bf16.msra.mxu0 %v2764
    %2823 = vmatprep.subr.bf16.mxu0 0
    %2824 = vmatpush1.bf16.msra.mxu0 %v2763
    %2825 = vmatprep.subr.bf16.mxu0 0
    %2826 = vmatpush1.bf16.msra.mxu0 %v2762
    %2827 = vmatprep.subr.bf16.mxu0 0
    %2828 = vmatpush1.bf16.msra.mxu0 %v2761
    %2829 = vmatprep.subr.bf16.mxu0 0
    %2830 = vmatpush1.bf16.msra.mxu0 %v2760
    %2831 = vmatprep.subr.bf16.mxu0 0
    %2832 = vmatpush1.bf16.msra.mxu0 %v2759
    %2833 = vmatprep.subr.bf16.mxu0 0
    %2834 = vmatpush1.bf16.msra.mxu0 %v2758
    %2835 = vmatprep.subr.bf16.mxu0 0
    %2836 = vmatpush1.bf16.msra.mxu0 %v2757
    %2837 = vmatprep.subr.bf16.mxu0 0
    %2838 = vmatpush2.bf16.msra.mxu0 %v2772
    %2839 = vmatprep.subr.bf16.mxu0 0
    %2840 = vmatpush2.bf16.msra.mxu0 %v2771
    %2841 = vmatprep.subr.bf16.mxu0 0
    %2842 = vmatpush2.bf16.msra.mxu0 %v2770
    %2843 = vmatprep.subr.bf16.mxu0 0
    %2844 = vmatpush2.bf16.msra.mxu0 %v2769
    %2845 = vmatprep.subr.bf16.mxu0 0
    %2846 = vmatpush2.bf16.msra.mxu0 %v2768
    %2847 = vmatprep.subr.bf16.mxu0 0
    %2848 = vmatpush2.bf16.msra.mxu0 %v2767
    %2849 = vmatprep.subr.bf16.mxu0 0
    %2850 = vmatpush2.bf16.msra.mxu0 %v2766
    %2851 = vmatprep.subr.bf16.mxu0 0
    %2852 = vmatpush2.bf16.msra.mxu0 %v2765
    %2853 = vmatprep.mubr.bf16.mxu0 %v2555
    %2854 = vmatmul.mubr.bf16.gmra.mxu0 %v2554
    %v2855 = vpop.f32.mrf.mxu0
    %v2856 = vadd.f32 %v2627, %v2855
    %v2857 = vpop.f32.mrf.mxu0
    %v2858 = vpop.f32.mrf.mxu0
    %v2859 = vpop.f32.mrf.mxu0
    %2860 = vdwg.mxu0
    %2861 = vmatprep.subr.bf16.mxu0 0
    %2862 = vmatpush1.bf16.msra.mxu0 %v2780
    %2863 = vmatprep.subr.bf16.mxu0 0
    %2864 = vmatpush1.bf16.msra.mxu0 %v2779
    %2865 = vmatprep.subr.bf16.mxu0 0
    %2866 = vmatpush1.bf16.msra.mxu0 %v2778
    %2867 = vmatprep.subr.bf16.mxu0 0
    %2868 = vmatpush1.bf16.msra.mxu0 %v2777
    %2869 = vmatprep.subr.bf16.mxu0 0
    %2870 = vmatpush1.bf16.msra.mxu0 %v2776
    %2871 = vmatprep.subr.bf16.mxu0 0
    %2872 = vmatpush1.bf16.msra.mxu0 %v2775
    %2873 = vmatprep.subr.bf16.mxu0 0
    %2874 = vmatpush1.bf16.msra.mxu0 %v2774
    %2875 = vmatprep.subr.bf16.mxu0 0
    %2876 = vmatpush1.bf16.msra.mxu0 %v2773
    %2877 = vmatprep.subr.bf16.mxu0 0
    %2878 = vmatpush2.bf16.msra.mxu0 %v2788
    %2879 = vmatprep.subr.bf16.mxu0 0
    %2880 = vmatpush2.bf16.msra.mxu0 %v2787
    %2881 = vmatprep.subr.bf16.mxu0 0
    %2882 = vmatpush2.bf16.msra.mxu0 %v2786
    %2883 = vmatprep.subr.bf16.mxu0 0
    %2884 = vmatpush2.bf16.msra.mxu0 %v2785
    %2885 = vmatprep.subr.bf16.mxu0 0
    %2886 = vmatpush2.bf16.msra.mxu0 %v2784
    %2887 = vmatprep.subr.bf16.mxu0 0
    %2888 = vmatpush2.bf16.msra.mxu0 %v2783
    %2889 = vmatprep.subr.bf16.mxu0 0
    %2890 = vmatpush2.bf16.msra.mxu0 %v2782
    %2891 = vmatprep.subr.bf16.mxu0 0
    %2892 = vmatpush2.bf16.msra.mxu0 %v2781
    %2893 = vmatprep.mubr.bf16.mxu0 %v2557
    %2894 = vmatmul.mubr.bf16.gmra.mxu0 %v2556
    %v2895 = vpop.f32.mrf.mxu0
    %v2896 = vadd.f32 %v2856, %v2895
    %v2897 = vpop.f32.mrf.mxu0
    %v2898 = vpop.f32.mrf.mxu0
    %v2899 = vpop.f32.mrf.mxu0
    %2900 = vdwg.mxu0
    %v2901 = vmax.f32 %v2896, 0.0
    %v2902 = vpack.c.bf16 %v2901, %v2901
    %v2903 = vld [vmem:[%s6] sm:$0xf]
    %v2904 = vld [vmem:[%s6 + $0x4] sm:$0xf]
    %v2905 = vld [vmem:[%s6 + $0x8] sm:$0xf]
    %v2906 = vld [vmem:[%s6 + $0xc] sm:$0xf]
    %v2907 = vld [vmem:[%s6 + $0x10] sm:$0xf]
    %v2908 = vld [vmem:[%s6 + $0x14] sm:$0xf]
    %v2909 = vld [vmem:[%s6 + $0x18] sm:$0xf]
    %v2910 = vld [vmem:[%s6 + $0x1c] sm:$0xf]
    %v2911 = vld [vmem:[%s6 + $0x20] sm:$0xf]
    %v2912 = vld [vmem:[%s6 + $0x24] sm:$0xf]
    %v2913 = vld [vmem:[%s6 + $0x28] sm:$0xf]
    %v2914 = vld [vmem:[%s6 + $0x2c] sm:$0xf]
    %v2915 = vld [vmem:[%s6 + $0x30] sm:$0xf]
    %v2916 = vld [vmem:[%s6 + $0x34] sm:$0xf]
    %v2917 = vld [vmem:[%s6 + $0x38] sm:$0xf]
    %v2918 = vld [vmem:[%s6 + $0x3c] sm:$0xf]
    %v2919 = vld [vmem:[#allocation9] sm:$0x1]
    %v2921 = vlaneseq
    %v2922 = vshrl.u32 %v2921, 7
    %v2923 = vsub.s32 0, %v2922
    %v2924 = vrot.slane %v2919, %v2923
    %v2942 = vunpack.c.l.b16 %v2903
    %v2943 = vunpack.c.l.b16 %v2904
    %v2944 = vunpack.c.l.b16 %v2905
    %v2945 = vunpack.c.l.b16 %v2906
    %v2946 = vunpack.c.l.b16 %v2907
    %v2947 = vunpack.c.l.b16 %v2908
    %v2948 = vunpack.c.l.b16 %v2909
    %v2949 = vunpack.c.l.b16 %v2910
    %v2950 = vunpack.c.l.b16 %v2911
    %v2951 = vunpack.c.l.b16 %v2912
    %v2952 = vunpack.c.l.b16 %v2913
    %v2953 = vunpack.c.l.b16 %v2914
    %v2954 = vunpack.c.l.b16 %v2915
    %v2955 = vunpack.c.l.b16 %v2916
    %v2956 = vunpack.c.l.b16 %v2917
    %v2957 = vunpack.c.l.b16 %v2918
    %v2958 = vpack.c.b16 %v2943, %v2942
    %v2959 = vpack.c.b16 %v2945, %v2944
    %v2960 = vpack.c.b16 %v2947, %v2946
    %v2961 = vpack.c.b16 %v2949, %v2948
    %v2962 = vpack.c.b16 %v2951, %v2950
    %v2963 = vpack.c.b16 %v2953, %v2952
    %v2964 = vpack.c.b16 %v2955, %v2954
    %v2965 = vpack.c.b16 %v2957, %v2956
    %2974 = vmatprep.subr.bf16.mxu0 0
    %2975 = vmatpush1.bf16.msra.mxu0 %v2965
    %2976 = vmatprep.subr.bf16.mxu0 0
    %2977 = vmatpush1.bf16.msra.mxu0 %v2964
    %2978 = vmatprep.subr.bf16.mxu0 0
    %2979 = vmatpush1.bf16.msra.mxu0 %v2963
    %2980 = vmatprep.subr.bf16.mxu0 0
    %2981 = vmatpush1.bf16.msra.mxu0 %v2962
    %2982 = vmatprep.subr.bf16.mxu0 0
    %2983 = vmatpush1.bf16.msra.mxu0 %v2961
    %2984 = vmatprep.subr.bf16.mxu0 0
    %2985 = vmatpush1.bf16.msra.mxu0 %v2960
    %2986 = vmatprep.subr.bf16.mxu0 0
    %2987 = vmatpush1.bf16.msra.mxu0 %v2959
    %2988 = vmatprep.subr.bf16.mxu0 0
    %2989 = vmatpush1.bf16.msra.mxu0 %v2958
    %2990 = vmatprep.subr.bf16.mxu0 0
    %2991 = vmatpush2.bf16.msra.mxu0 0
    %2992 = vmatprep.subr.bf16.mxu0 0
    %2993 = vmatpush2.bf16.msra.mxu0 0
    %2994 = vmatprep.subr.bf16.mxu0 0
    %2995 = vmatpush2.bf16.msra.mxu0 0
    %2996 = vmatprep.subr.bf16.mxu0 0
    %2997 = vmatpush2.bf16.msra.mxu0 0
    %2998 = vmatprep.subr.bf16.mxu0 0
    %2999 = vmatpush2.bf16.msra.mxu0 0
    %3000 = vmatprep.subr.bf16.mxu0 0
    %3001 = vmatpush2.bf16.msra.mxu0 0
    %3002 = vmatprep.subr.bf16.mxu0 0
    %3003 = vmatpush2.bf16.msra.mxu0 0
    %3004 = vmatprep.subr.bf16.mxu0 0
    %3005 = vmatpush2.bf16.msra.mxu0 0
    %3006 = vmatprep.mubr.bf16.mxu0 0
    %3007 = vmatmul.mubr.bf16.gmra.mxu0 %v2902
    %v3008 = vpop.f32.mrf.mxu0
    %v3009 = vadd.f32 %v2924, %v3008
    %v3010 = vpop.f32.mrf.mxu0
    %v3011 = vpop.f32.mrf.mxu0
    %v3012 = vpop.f32.mrf.mxu0
    %3013 = vdwg.mxu0
    %vm3014 = vcmp.ge.f32.partialorder %v3009, 0.0
    %v3015 = vmul.f32 %v3009, 0.01
    %v3016 = vsel %vm3014, %v3009, %v3015
    %v3017 = vpack.c.bf16 %v3016, %v3016
    %v3018 = vld [vmem:[%s8] sm:$0xf]
    %v3019 = vld [vmem:[%s8 + $0x4] sm:$0xf]
    %v3020 = vld [vmem:[%s8 + $0x8] sm:$0xf]
    %v3021 = vld [vmem:[%s8 + $0xc] sm:$0xf]
    %v3022 = vld [vmem:[%s9] sm:$0x1]
    %v3024 = vlaneseq
    %v3025 = vshrl.u32 %v3024, 7
    %v3026 = vsub.s32 0, %v3025
    %v3027 = vrot.slane %v3022, %v3026
    %v3033 = vunpack.c.l.b16 %v3018
    %v3034 = vunpack.c.l.b16 %v3019
    %v3035 = vunpack.c.l.b16 %v3020
    %v3036 = vunpack.c.l.b16 %v3021
    %v3037 = vpack.c.b16 %v3034, %v3033
    %v3038 = vpack.c.b16 %v3036, %v3035
    %vm3041 = vcmask 261120
    %v3043 = vsel %vm3041, %v3017, 0
    %3045 = vmatprep.subr.bf16.mxu0 0
    %3046 = vmatpush1.bf16.msra.mxu0 0
    %3047 = vmatprep.subr.bf16.mxu0 0
    %3048 = vmatpush1.bf16.msra.mxu0 0
    %3049 = vmatprep.subr.bf16.mxu0 0
    %3050 = vmatpush1.bf16.msra.mxu0 0
    %3051 = vmatprep.subr.bf16.mxu0 0
    %3052 = vmatpush1.bf16.msra.mxu0 0
    %3053 = vmatprep.subr.bf16.mxu0 0
    %3054 = vmatpush1.bf16.msra.mxu0 0
    %3055 = vmatprep.subr.bf16.mxu0 0
    %3056 = vmatpush1.bf16.msra.mxu0 0
    %3057 = vmatprep.subr.bf16.mxu0 0
    %3058 = vmatpush1.bf16.msra.mxu0 %v3038
    %3059 = vmatprep.subr.bf16.mxu0 0
    %3060 = vmatpush1.bf16.msra.mxu0 %v3037
    %3061 = vmatprep.subr.bf16.mxu0 0
    %3062 = vmatpush2.bf16.msra.mxu0 0
    %3063 = vmatprep.subr.bf16.mxu0 0
    %3064 = vmatpush2.bf16.msra.mxu0 0
    %3065 = vmatprep.subr.bf16.mxu0 0
    %3066 = vmatpush2.bf16.msra.mxu0 0
    %3067 = vmatprep.subr.bf16.mxu0 0
    %3068 = vmatpush2.bf16.msra.mxu0 0
    %3069 = vmatprep.subr.bf16.mxu0 0
    %3070 = vmatpush2.bf16.msra.mxu0 0
    %3071 = vmatprep.subr.bf16.mxu0 0
    %3072 = vmatpush2.bf16.msra.mxu0 0
    %3073 = vmatprep.subr.bf16.mxu0 0
    %3074 = vmatpush2.bf16.msra.mxu0 0
    %3075 = vmatprep.subr.bf16.mxu0 0
    %3076 = vmatpush2.bf16.msra.mxu0 0
    %3077 = vmatprep.mubr.bf16.mxu0 0
    %3078 = vmatmul.mubr.bf16.gmra.mxu0 %v3043
    %v3079 = vpop.f32.mrf.mxu0
    %v3080 = vadd.f32 %v3027, %v3079
    %v3081 = vpop.f32.mrf.mxu0
    %v3082 = vpop.f32.mrf.mxu0
    %v3083 = vpop.f32.mrf.mxu0
    %3084 = vdwg.mxu0
    %v3085 = vlaneseq
    %v3086 = vand.u32 %v3085, 127
    %vm3087 = vcmp.lt.s32.totalorder %v3086, 2
    %v3088 = vmul.f32 %v3080, 0.5
    %v3089 = vmul.f32 %v3088, 1.442695
    %v3090 = vpow.pop %v3089
    %v3091 = vld [vmem:[%s1] sm:$0xff]
    %v3092 = vmul.f32 %v3090, %v3091
    %v3093 = vsel %vm3087, %v3080, %v3092
    %v3094 = vpack.c.bf16 %v3093, %v3093
    %v3095 = vld [vmem:[%s10] sm:$0x3]
    %v3096 = vld [vmem:[#allocation10] sm:$0x1]
    %v3098 = vlaneseq
    %v3099 = vshrl.u32 %v3098, 7
    %v3100 = vsub.s32 0, %v3099
    %v3101 = vrot.slane %v3096, %v3100
    %vm3103 = vcmask 31744
    %v3105 = vsel %vm3103, %v3094, 0
    %vm3107 = vcmask 1041408
    %v3109 = vsel %vm3107, %v3095, 0
    %3111 = vmatprep.subr.bf16.mxu0 0
    %3112 = vmatpush1.bf16.msra.mxu0 0
    %3113 = vmatprep.subr.bf16.mxu0 0
    %3114 = vmatpush1.bf16.msra.mxu0 0
    %3115 = vmatprep.subr.bf16.mxu0 0
    %3116 = vmatpush1.bf16.msra.mxu0 0
    %3117 = vmatprep.subr.bf16.mxu0 0
    %3118 = vmatpush1.bf16.msra.mxu0 0
    %3119 = vmatprep.subr.bf16.mxu0 0
    %3120 = vmatpush1.bf16.msra.mxu0 0
    %3121 = vmatprep.subr.bf16.mxu0 0
    %3122 = vmatpush1.bf16.msra.mxu0 0
    %3123 = vmatprep.subr.bf16.mxu0 0
    %3124 = vmatpush1.bf16.msra.mxu0 0
    %3125 = vmatprep.subr.bf16.mxu0 0
    %3126 = vmatpush1.bf16.msra.mxu0 %v3109
    %3127 = vmatprep.subr.bf16.mxu0 0
    %3128 = vmatpush2.bf16.msra.mxu0 0
    %3129 = vmatprep.subr.bf16.mxu0 0
    %3130 = vmatpush2.bf16.msra.mxu0 0
    %3131 = vmatprep.subr.bf16.mxu0 0
    %3132 = vmatpush2.bf16.msra.mxu0 0
    %3133 = vmatprep.subr.bf16.mxu0 0
    %3134 = vmatpush2.bf16.msra.mxu0 0
    %3135 = vmatprep.subr.bf16.mxu0 0
    %3136 = vmatpush2.bf16.msra.mxu0 0
    %3137 = vmatprep.subr.bf16.mxu0 0
    %3138 = vmatpush2.bf16.msra.mxu0 0
    %3139 = vmatprep.subr.bf16.mxu0 0
    %3140 = vmatpush2.bf16.msra.mxu0 0
    %3141 = vmatprep.subr.bf16.mxu0 0
    %3142 = vmatpush2.bf16.msra.mxu0 0
    %3143 = vmatprep.mubr.bf16.mxu0 0
    %3144 = vmatmul.mubr.bf16.gmra.mxu0 %v3105
    %v3145 = vpop.f32.mrf.mxu0
    %v3146 = vadd.f32 %v3101, %v3145
    %v3147 = vpop.f32.mrf.mxu0
    %v3148 = vpop.f32.mrf.mxu0
    %v3149 = vpop.f32.mrf.mxu0
    %3150 = vdwg.mxu0
    %v3151 = vmax.f32 %v3146, 0.0
    %v3152 = vpack.c.bf16 %v3151, %v3151
    %v3153 = vld [vmem:[#allocation12] sm:$0xff]
    %v3154 = vld [vmem:[#allocation12 + $0x8] sm:$0xff]
    %v3155 = vld [vmem:[#allocation12 + $0x10] sm:$0xff]
    %v3156 = vld [vmem:[#allocation12 + $0x18] sm:$0xff]
    %v3157 = vld [vmem:[#allocation12 + $0x20] sm:$0xff]
    %v3158 = vld [vmem:[#allocation12 + $0x28] sm:$0xff]
    %v3159 = vld [vmem:[#allocation12 + $0x30] sm:$0xff]
    %v3160 = vld [vmem:[#allocation12 + $0x38] sm:$0xff]
    %v3161 = vld [vmem:[#allocation12 + $0x40] sm:$0xff]
    %v3162 = vld [vmem:[#allocation12 + $0x48] sm:$0xff]
    %v3163 = vld [vmem:[#allocation12 + $0x50] sm:$0xff]
    %v3164 = vld [vmem:[#allocation12 + $0x58] sm:$0xff]
    %v3165 = vld [vmem:[#allocation12 + $0x60] sm:$0xff]
    %v3166 = vld [vmem:[#allocation12 + $0x68] sm:$0xff]
    %v3167 = vld [vmem:[#allocation12 + $0x70] sm:$0xff]
    %v3168 = vld [vmem:[#allocation12 + $0x78] sm:$0xff]
    %v3169 = vld [vmem:[#allocation12 + $0x80] sm:$0xff]
    %v3170 = vld [vmem:[#allocation12 + $0x88] sm:$0xff]
    %v3171 = vld [vmem:[#allocation12 + $0x90] sm:$0xff]
    %v3172 = vld [vmem:[#allocation12 + $0x98] sm:$0xff]
    %v3173 = vld [vmem:[#allocation12 + $0xa0] sm:$0xff]
    %v3174 = vld [vmem:[#allocation12 + $0xa8] sm:$0xff]
    %v3175 = vld [vmem:[#allocation12 + $0xb0] sm:$0xff]
    %v3176 = vld [vmem:[#allocation12 + $0xb8] sm:$0xff]
    %v3177 = vld [vmem:[#allocation12 + $0xc0] sm:$0xff]
    %v3178 = vld [vmem:[#allocation12 + $0xc8] sm:$0xff]
    %v3179 = vld [vmem:[#allocation12 + $0xd0] sm:$0xff]
    %v3180 = vld [vmem:[#allocation12 + $0xd8] sm:$0xff]
    %v3181 = vld [vmem:[#allocation12 + $0xe0] sm:$0xff]
    %v3182 = vld [vmem:[#allocation12 + $0xe8] sm:$0xff]
    %v3183 = vld [vmem:[#allocation12 + $0xf0] sm:$0xff]
    %v3184 = vld [vmem:[#allocation12 + $0xf8] sm:$0xff]
    %v3185 = vld [vmem:[#allocation13] sm:$0xf]
    %v3187 = vlaneseq
    %v3188 = vshrl.u32 %v3187, 7
    %v3189 = vsub.s32 0, %v3188
    %v3190 = vrot.slane %v3185, %v3189
    %v3191 = vlaneseq
    %v3192 = vshrl.u32 %v3191, 7
    %v3193 = vsub.s32 1, %v3192
    %v3194 = vrot.slane %v3185, %v3193
    %v3195 = vlaneseq
    %v3196 = vshrl.u32 %v3195, 7
    %v3197 = vsub.s32 2, %v3196
    %v3198 = vrot.slane %v3185, %v3197
    %v3199 = vlaneseq
    %v3200 = vshrl.u32 %v3199, 7
    %v3201 = vsub.s32 3, %v3200
    %v3202 = vrot.slane %v3185, %v3201
    %v3239 = vunpack.c.l.b16 %v3153
    %v3240 = vunpack.c.h.b16 %v3153
    %v3241 = vunpack.c.l.b16 %v3154
    %v3242 = vunpack.c.h.b16 %v3154
    %v3243 = vunpack.c.l.b16 %v3155
    %v3244 = vunpack.c.h.b16 %v3155
    %v3245 = vunpack.c.l.b16 %v3156
    %v3246 = vunpack.c.h.b16 %v3156
    %v3247 = vunpack.c.l.b16 %v3157
    %v3248 = vunpack.c.h.b16 %v3157
    %v3249 = vunpack.c.l.b16 %v3158
    %v3250 = vunpack.c.h.b16 %v3158
    %v3251 = vunpack.c.l.b16 %v3159
    %v3252 = vunpack.c.h.b16 %v3159
    %v3253 = vunpack.c.l.b16 %v3160
    %v3254 = vunpack.c.h.b16 %v3160
    %v3255 = vunpack.c.l.b16 %v3161
    %v3256 = vunpack.c.h.b16 %v3161
    %v3257 = vunpack.c.l.b16 %v3162
    %v3258 = vunpack.c.h.b16 %v3162
    %v3259 = vunpack.c.l.b16 %v3163
    %v3260 = vunpack.c.h.b16 %v3163
    %v3261 = vunpack.c.l.b16 %v3164
    %v3262 = vunpack.c.h.b16 %v3164
    %v3263 = vunpack.c.l.b16 %v3165
    %v3264 = vunpack.c.h.b16 %v3165
    %v3265 = vunpack.c.l.b16 %v3166
    %v3266 = vunpack.c.h.b16 %v3166
    %v3267 = vunpack.c.l.b16 %v3167
    %v3268 = vunpack.c.h.b16 %v3167
    %v3269 = vunpack.c.l.b16 %v3168
    %v3270 = vunpack.c.h.b16 %v3168
    %v3271 = vunpack.c.l.b16 %v3169
    %v3272 = vunpack.c.h.b16 %v3169
    %v3273 = vunpack.c.l.b16 %v3170
    %v3274 = vunpack.c.h.b16 %v3170
    %v3275 = vunpack.c.l.b16 %v3171
    %v3276 = vunpack.c.h.b16 %v3171
    %v3277 = vunpack.c.l.b16 %v3172
    %v3278 = vunpack.c.h.b16 %v3172
    %v3279 = vunpack.c.l.b16 %v3173
    %v3280 = vunpack.c.h.b16 %v3173
    %v3281 = vunpack.c.l.b16 %v3174
    %v3282 = vunpack.c.h.b16 %v3174
    %v3283 = vunpack.c.l.b16 %v3175
    %v3284 = vunpack.c.h.b16 %v3175
    %v3285 = vunpack.c.l.b16 %v3176
    %v3286 = vunpack.c.h.b16 %v3176
    %v3287 = vunpack.c.l.b16 %v3177
    %v3288 = vunpack.c.h.b16 %v3177
    %v3289 = vunpack.c.l.b16 %v3178
    %v3290 = vunpack.c.h.b16 %v3178
    %v3291 = vunpack.c.l.b16 %v3179
    %v3292 = vunpack.c.h.b16 %v3179
    %v3293 = vunpack.c.l.b16 %v3180
    %v3294 = vunpack.c.h.b16 %v3180
    %v3295 = vunpack.c.l.b16 %v3181
    %v3296 = vunpack.c.h.b16 %v3181
    %v3297 = vunpack.c.l.b16 %v3182
    %v3298 = vunpack.c.h.b16 %v3182
    %v3299 = vunpack.c.l.b16 %v3183
    %v3300 = vunpack.c.h.b16 %v3183
    %v3301 = vunpack.c.l.b16 %v3184
    %v3302 = vunpack.c.h.b16 %v3184
    %v3303 = vpack.c.b16 %v3243, %v3239
    %v3304 = vpack.c.b16 %v3244, %v3240
    %v3305 = vpack.c.b16 %v3245, %v3241
    %v3306 = vpack.c.b16 %v3246, %v3242
    %v3307 = vpack.c.b16 %v3251, %v3247
    %v3308 = vpack.c.b16 %v3252, %v3248
    %v3309 = vpack.c.b16 %v3253, %v3249
    %v3310 = vpack.c.b16 %v3254, %v3250
    %v3311 = vpack.c.b16 %v3259, %v3255
    %v3312 = vpack.c.b16 %v3260, %v3256
    %v3313 = vpack.c.b16 %v3261, %v3257
    %v3314 = vpack.c.b16 %v3262, %v3258
    %v3315 = vpack.c.b16 %v3267, %v3263
    %v3316 = vpack.c.b16 %v3268, %v3264
    %v3317 = vpack.c.b16 %v3269, %v3265
    %v3318 = vpack.c.b16 %v3270, %v3266
    %v3319 = vpack.c.b16 %v3275, %v3271
    %v3320 = vpack.c.b16 %v3276, %v3272
    %v3321 = vpack.c.b16 %v3277, %v3273
    %v3322 = vpack.c.b16 %v3278, %v3274
    %v3323 = vpack.c.b16 %v3283, %v3279
    %v3324 = vpack.c.b16 %v3284, %v3280
    %v3325 = vpack.c.b16 %v3285, %v3281
    %v3326 = vpack.c.b16 %v3286, %v3282
    %v3327 = vpack.c.b16 %v3291, %v3287
    %v3328 = vpack.c.b16 %v3292, %v3288
    %v3329 = vpack.c.b16 %v3293, %v3289
    %v3330 = vpack.c.b16 %v3294, %v3290
    %v3331 = vpack.c.b16 %v3299, %v3295
    %v3332 = vpack.c.b16 %v3300, %v3296
    %v3333 = vpack.c.b16 %v3301, %v3297
    %v3334 = vpack.c.b16 %v3302, %v3298
    %3367 = vmatprep.subr.bf16.mxu0 %v3332
    %3368 = vmatpush1.bf16.msra.mxu0 %v3331
    %3369 = vmatprep.subr.bf16.mxu0 %v3328
    %3370 = vmatpush1.bf16.msra.mxu0 %v3327
    %3371 = vmatprep.subr.bf16.mxu0 %v3324
    %3372 = vmatpush1.bf16.msra.mxu0 %v3323
    %3373 = vmatprep.subr.bf16.mxu0 %v3320
    %3374 = vmatpush1.bf16.msra.mxu0 %v3319
    %3375 = vmatprep.subr.bf16.mxu0 %v3316
    %3376 = vmatpush1.bf16.msra.mxu0 %v3315
    %3377 = vmatprep.subr.bf16.mxu0 %v3312
    %3378 = vmatpush1.bf16.msra.mxu0 %v3311
    %3379 = vmatprep.subr.bf16.mxu0 %v3308
    %3380 = vmatpush1.bf16.msra.mxu0 %v3307
    %3381 = vmatprep.subr.bf16.mxu0 %v3304
    %3382 = vmatpush1.bf16.msra.mxu0 %v3303
    %3383 = vmatprep.subr.bf16.mxu0 0
    %3384 = vmatpush2.bf16.msra.mxu0 0
    %3385 = vmatprep.subr.bf16.mxu0 0
    %3386 = vmatpush2.bf16.msra.mxu0 0
    %3387 = vmatprep.subr.bf16.mxu0 0
    %3388 = vmatpush2.bf16.msra.mxu0 0
    %3389 = vmatprep.subr.bf16.mxu0 0
    %3390 = vmatpush2.bf16.msra.mxu0 0
    %3391 = vmatprep.subr.bf16.mxu0 0
    %3392 = vmatpush2.bf16.msra.mxu0 0
    %3393 = vmatprep.subr.bf16.mxu0 0
    %3394 = vmatpush2.bf16.msra.mxu0 0
    %3395 = vmatprep.subr.bf16.mxu0 0
    %3396 = vmatpush2.bf16.msra.mxu0 0
    %3397 = vmatprep.subr.bf16.mxu0 0
    %3398 = vmatpush2.bf16.msra.mxu0 0
    %3399 = vmatprep.mubr.bf16.mxu0 0
    %3400 = vmatmul.mubr.bf16.gmra.mxu0 %v3152
    %v3401 = vpop.f32.mrf.mxu0
    %v3402 = vadd.f32 %v3190, %v3401
    %v3403 = vpop.f32.mrf.mxu0
    %v3404 = vadd.f32 %v3194, %v3403
    %v3405 = vpop.f32.mrf.mxu0
    %v3406 = vpop.f32.mrf.mxu0
    %3407 = vdwg.mxu0
    %3408 = vmatprep.subr.bf16.mxu0 %v3334
    %3409 = vmatpush1.bf16.msra.mxu0 %v3333
    %3410 = vmatprep.subr.bf16.mxu0 %v3330
    %3411 = vmatpush1.bf16.msra.mxu0 %v3329
    %3412 = vmatprep.subr.bf16.mxu0 %v3326
    %3413 = vmatpush1.bf16.msra.mxu0 %v3325
    %3414 = vmatprep.subr.bf16.mxu0 %v3322
    %3415 = vmatpush1.bf16.msra.mxu0 %v3321
    %3416 = vmatprep.subr.bf16.mxu0 %v3318
    %3417 = vmatpush1.bf16.msra.mxu0 %v3317
    %3418 = vmatprep.subr.bf16.mxu0 %v3314
    %3419 = vmatpush1.bf16.msra.mxu0 %v3313
    %3420 = vmatprep.subr.bf16.mxu0 %v3310
    %3421 = vmatpush1.bf16.msra.mxu0 %v3309
    %3422 = vmatprep.subr.bf16.mxu0 %v3306
    %3423 = vmatpush1.bf16.msra.mxu0 %v3305
    %3424 = vmatprep.subr.bf16.mxu0 0
    %3425 = vmatpush2.bf16.msra.mxu0 0
    %3426 = vmatprep.subr.bf16.mxu0 0
    %3427 = vmatpush2.bf16.msra.mxu0 0
    %3428 = vmatprep.subr.bf16.mxu0 0
    %3429 = vmatpush2.bf16.msra.mxu0 0
    %3430 = vmatprep.subr.bf16.mxu0 0
    %3431 = vmatpush2.bf16.msra.mxu0 0
    %3432 = vmatprep.subr.bf16.mxu0 0
    %3433 = vmatpush2.bf16.msra.mxu0 0
    %3434 = vmatprep.subr.bf16.mxu0 0
    %3435 = vmatpush2.bf16.msra.mxu0 0
    %3436 = vmatprep.subr.bf16.mxu0 0
    %3437 = vmatpush2.bf16.msra.mxu0 0
    %3438 = vmatprep.subr.bf16.mxu0 0
    %3439 = vmatpush2.bf16.msra.mxu0 0
    %3440 = vmatprep.mubr.bf16.mxu0 0
    %3441 = vmatmul.mubr.bf16.gmra.mxu0 %v3152
    %v3442 = vpop.f32.mrf.mxu0
    %v3443 = vadd.f32 %v3198, %v3442
    %v3444 = vpop.f32.mrf.mxu0
    %v3445 = vadd.f32 %v3202, %v3444
    %v3446 = vpop.f32.mrf.mxu0
    %v3447 = vpop.f32.mrf.mxu0
    %3448 = vdwg.mxu0
    %v3449 = vmax.f32 %v3402, 0.0
    %v3450 = vmax.f32 %v3404, 0.0
    %v3451 = vmax.f32 %v3443, 0.0
    %v3452 = vmax.f32 %v3445, 0.0
    %v3453 = vpack.c.bf16 %v3449, %v3449
    %v3454 = vpack.c.bf16 %v3450, %v3450
    %v3455 = vpack.c.bf16 %v3451, %v3451
    %v3456 = vpack.c.bf16 %v3452, %v3452
    %v3457 = vld [vmem:[#allocation15] sm:$0xff]
    %v3458 = vld [vmem:[#allocation15 + $0x8] sm:$0xff]
    %v3459 = vld [vmem:[#allocation15 + $0x10] sm:$0xff]
    %v3460 = vld [vmem:[#allocation15 + $0x18] sm:$0xff]
    %v3461 = vld [vmem:[#allocation15 + $0x20] sm:$0xff]
    %v3462 = vld [vmem:[#allocation15 + $0x28] sm:$0xff]
    %v3463 = vld [vmem:[#allocation15 + $0x30] sm:$0xff]
    %v3464 = vld [vmem:[#allocation15 + $0x38] sm:$0xff]
    %v3465 = vld [vmem:[#allocation15 + $0x40] sm:$0xff]
    %v3466 = vld [vmem:[#allocation15 + $0x48] sm:$0xff]
    %v3467 = vld [vmem:[#allocation15 + $0x50] sm:$0xff]
    %v3468 = vld [vmem:[#allocation15 + $0x58] sm:$0xff]
    %v3469 = vld [vmem:[#allocation15 + $0x60] sm:$0xff]
    %v3470 = vld [vmem:[#allocation15 + $0x68] sm:$0xff]
    %v3471 = vld [vmem:[#allocation15 + $0x70] sm:$0xff]
    %v3472 = vld [vmem:[#allocation15 + $0x78] sm:$0xff]
    %v3473 = vld [vmem:[#allocation15 + $0x80] sm:$0xff]
    %v3474 = vld [vmem:[#allocation15 + $0x88] sm:$0xff]
    %v3475 = vld [vmem:[#allocation15 + $0x90] sm:$0xff]
    %v3476 = vld [vmem:[#allocation15 + $0x98] sm:$0xff]
    %v3477 = vld [vmem:[#allocation15 + $0xa0] sm:$0xff]
    %v3478 = vld [vmem:[#allocation15 + $0xa8] sm:$0xff]
    %v3479 = vld [vmem:[#allocation15 + $0xb0] sm:$0xff]
    %v3480 = vld [vmem:[#allocation15 + $0xb8] sm:$0xff]
    %v3481 = vld [vmem:[#allocation15 + $0xc0] sm:$0xff]
    %v3482 = vld [vmem:[#allocation15 + $0xc8] sm:$0xff]
    %v3483 = vld [vmem:[#allocation15 + $0xd0] sm:$0xff]
    %v3484 = vld [vmem:[#allocation15 + $0xd8] sm:$0xff]
    %v3485 = vld [vmem:[#allocation15 + $0xe0] sm:$0xff]
    %v3486 = vld [vmem:[#allocation15 + $0xe8] sm:$0xff]
    %v3487 = vld [vmem:[#allocation15 + $0xf0] sm:$0xff]
    %v3488 = vld [vmem:[#allocation15 + $0xf8] sm:$0xff]
    %v3489 = vld [vmem:[#allocation15 + $0x100] sm:$0xff]
    %v3490 = vld [vmem:[#allocation15 + $0x108] sm:$0xff]
    %v3491 = vld [vmem:[#allocation15 + $0x110] sm:$0xff]
    %v3492 = vld [vmem:[#allocation15 + $0x118] sm:$0xff]
    %v3493 = vld [vmem:[#allocation15 + $0x120] sm:$0xff]
    %v3494 = vld [vmem:[#allocation15 + $0x128] sm:$0xff]
    %v3495 = vld [vmem:[#allocation15 + $0x130] sm:$0xff]
    %v3496 = vld [vmem:[#allocation15 + $0x138] sm:$0xff]
    %v3497 = vld [vmem:[#allocation15 + $0x140] sm:$0xff]
    %v3498 = vld [vmem:[#allocation15 + $0x148] sm:$0xff]
    %v3499 = vld [vmem:[#allocation15 + $0x150] sm:$0xff]
    %v3500 = vld [vmem:[#allocation15 + $0x158] sm:$0xff]
    %v3501 = vld [vmem:[#allocation15 + $0x160] sm:$0xff]
    %v3502 = vld [vmem:[#allocation15 + $0x168] sm:$0xff]
    %v3503 = vld [vmem:[#allocation15 + $0x170] sm:$0xff]
    %v3504 = vld [vmem:[#allocation15 + $0x178] sm:$0xff]
    %v3505 = vld [vmem:[#allocation15 + $0x180] sm:$0xff]
    %v3506 = vld [vmem:[#allocation15 + $0x188] sm:$0xff]
    %v3507 = vld [vmem:[#allocation15 + $0x190] sm:$0xff]
    %v3508 = vld [vmem:[#allocation15 + $0x198] sm:$0xff]
    %v3509 = vld [vmem:[#allocation15 + $0x1a0] sm:$0xff]
    %v3510 = vld [vmem:[#allocation15 + $0x1a8] sm:$0xff]
    %v3511 = vld [vmem:[#allocation15 + $0x1b0] sm:$0xff]
    %v3512 = vld [vmem:[#allocation15 + $0x1b8] sm:$0xff]
    %v3513 = vld [vmem:[#allocation15 + $0x1c0] sm:$0xff]
    %v3514 = vld [vmem:[#allocation15 + $0x1c8] sm:$0xff]
    %v3515 = vld [vmem:[#allocation15 + $0x1d0] sm:$0xff]
    %v3516 = vld [vmem:[#allocation15 + $0x1d8] sm:$0xff]
    %v3517 = vld [vmem:[#allocation15 + $0x1e0] sm:$0xff]
    %v3518 = vld [vmem:[#allocation15 + $0x1e8] sm:$0xff]
    %v3519 = vld [vmem:[#allocation15 + $0x1f0] sm:$0xff]
    %v3520 = vld [vmem:[#allocation15 + $0x1f8] sm:$0xff]
    %v3521 = vld [vmem:[#allocation15 + $0x200] sm:$0xff]
    %v3522 = vld [vmem:[#allocation15 + $0x208] sm:$0xff]
    %v3523 = vld [vmem:[#allocation15 + $0x210] sm:$0xff]
    %v3524 = vld [vmem:[#allocation15 + $0x218] sm:$0xff]
    %v3525 = vld [vmem:[#allocation15 + $0x220] sm:$0xff]
    %v3526 = vld [vmem:[#allocation15 + $0x228] sm:$0xff]
    %v3527 = vld [vmem:[#allocation15 + $0x230] sm:$0xff]
    %v3528 = vld [vmem:[#allocation15 + $0x238] sm:$0xff]
    %v3529 = vld [vmem:[#allocation15 + $0x240] sm:$0xff]
    %v3530 = vld [vmem:[#allocation15 + $0x248] sm:$0xff]
    %v3531 = vld [vmem:[#allocation15 + $0x250] sm:$0xff]
    %v3532 = vld [vmem:[#allocation15 + $0x258] sm:$0xff]
    %v3533 = vld [vmem:[#allocation15 + $0x260] sm:$0xff]
    %v3534 = vld [vmem:[#allocation15 + $0x268] sm:$0xff]
    %v3535 = vld [vmem:[#allocation15 + $0x270] sm:$0xff]
    %v3536 = vld [vmem:[#allocation15 + $0x278] sm:$0xff]
    %v3537 = vld [vmem:[#allocation15 + $0x280] sm:$0xff]
    %v3538 = vld [vmem:[#allocation15 + $0x288] sm:$0xff]
    %v3539 = vld [vmem:[#allocation15 + $0x290] sm:$0xff]
    %v3540 = vld [vmem:[#allocation15 + $0x298] sm:$0xff]
    %v3541 = vld [vmem:[#allocation15 + $0x2a0] sm:$0xff]
    %v3542 = vld [vmem:[#allocation15 + $0x2a8] sm:$0xff]
    %v3543 = vld [vmem:[#allocation15 + $0x2b0] sm:$0xff]
    %v3544 = vld [vmem:[#allocation15 + $0x2b8] sm:$0xff]
    %v3545 = vld [vmem:[#allocation15 + $0x2c0] sm:$0xff]
    %v3546 = vld [vmem:[#allocation15 + $0x2c8] sm:$0xff]
    %v3547 = vld [vmem:[#allocation15 + $0x2d0] sm:$0xff]
    %v3548 = vld [vmem:[#allocation15 + $0x2d8] sm:$0xff]
    %v3549 = vld [vmem:[#allocation15 + $0x2e0] sm:$0xff]
    %v3550 = vld [vmem:[#allocation15 + $0x2e8] sm:$0xff]
    %v3551 = vld [vmem:[#allocation15 + $0x2f0] sm:$0xff]
    %v3552 = vld [vmem:[#allocation15 + $0x2f8] sm:$0xff]
    %v3553 = vld [vmem:[#allocation15 + $0x300] sm:$0xff]
    %v3554 = vld [vmem:[#allocation15 + $0x308] sm:$0xff]
    %v3555 = vld [vmem:[#allocation15 + $0x310] sm:$0xff]
    %v3556 = vld [vmem:[#allocation15 + $0x318] sm:$0xff]
    %v3557 = vld [vmem:[#allocation15 + $0x320] sm:$0xff]
    %v3558 = vld [vmem:[#allocation15 + $0x328] sm:$0xff]
    %v3559 = vld [vmem:[#allocation15 + $0x330] sm:$0xff]
    %v3560 = vld [vmem:[#allocation15 + $0x338] sm:$0xff]
    %v3561 = vld [vmem:[#allocation15 + $0x340] sm:$0xff]
    %v3562 = vld [vmem:[#allocation15 + $0x348] sm:$0xff]
    %v3563 = vld [vmem:[#allocation15 + $0x350] sm:$0xff]
    %v3564 = vld [vmem:[#allocation15 + $0x358] sm:$0xff]
    %v3565 = vld [vmem:[#allocation15 + $0x360] sm:$0xff]
    %v3566 = vld [vmem:[#allocation15 + $0x368] sm:$0xff]
    %v3567 = vld [vmem:[#allocation15 + $0x370] sm:$0xff]
    %v3568 = vld [vmem:[#allocation15 + $0x378] sm:$0xff]
    %v3569 = vld [vmem:[#allocation15 + $0x380] sm:$0xff]
    %v3570 = vld [vmem:[#allocation15 + $0x388] sm:$0xff]
    %v3571 = vld [vmem:[#allocation15 + $0x390] sm:$0xff]
    %v3572 = vld [vmem:[#allocation15 + $0x398] sm:$0xff]
    %v3573 = vld [vmem:[#allocation15 + $0x3a0] sm:$0xff]
    %v3574 = vld [vmem:[#allocation15 + $0x3a8] sm:$0xff]
    %v3575 = vld [vmem:[#allocation15 + $0x3b0] sm:$0xff]
    %v3576 = vld [vmem:[#allocation15 + $0x3b8] sm:$0xff]
    %v3577 = vld [vmem:[#allocation15 + $0x3c0] sm:$0xff]
    %v3578 = vld [vmem:[#allocation15 + $0x3c8] sm:$0xff]
    %v3579 = vld [vmem:[#allocation15 + $0x3d0] sm:$0xff]
    %v3580 = vld [vmem:[#allocation15 + $0x3d8] sm:$0xff]
    %v3581 = vld [vmem:[#allocation15 + $0x3e0] sm:$0xff]
    %v3582 = vld [vmem:[#allocation15 + $0x3e8] sm:$0xff]
    %v3583 = vld [vmem:[#allocation15 + $0x3f0] sm:$0xff]
    %v3584 = vld [vmem:[#allocation15 + $0x3f8] sm:$0xff]
    %v3585 = vld [vmem:[#allocation15 + $0x400] sm:$0xff]
    %v3586 = vld [vmem:[#allocation15 + $0x408] sm:$0xff]
    %v3587 = vld [vmem:[#allocation15 + $0x410] sm:$0xff]
    %v3588 = vld [vmem:[#allocation15 + $0x418] sm:$0xff]
    %v3589 = vld [vmem:[#allocation15 + $0x420] sm:$0xff]
    %v3590 = vld [vmem:[#allocation15 + $0x428] sm:$0xff]
    %v3591 = vld [vmem:[#allocation15 + $0x430] sm:$0xff]
    %v3592 = vld [vmem:[#allocation15 + $0x438] sm:$0xff]
    %v3593 = vld [vmem:[#allocation15 + $0x440] sm:$0xff]
    %v3594 = vld [vmem:[#allocation15 + $0x448] sm:$0xff]
    %v3595 = vld [vmem:[#allocation15 + $0x450] sm:$0xff]
    %v3596 = vld [vmem:[#allocation15 + $0x458] sm:$0xff]
    %v3597 = vld [vmem:[#allocation15 + $0x460] sm:$0xff]
    %v3598 = vld [vmem:[#allocation15 + $0x468] sm:$0xff]
    %v3599 = vld [vmem:[#allocation15 + $0x470] sm:$0xff]
    %v3600 = vld [vmem:[#allocation15 + $0x478] sm:$0xff]
    %v3601 = vld [vmem:[#allocation15 + $0x480] sm:$0xff]
    %v3602 = vld [vmem:[#allocation15 + $0x488] sm:$0xff]
    %v3603 = vld [vmem:[#allocation15 + $0x490] sm:$0xff]
    %v3604 = vld [vmem:[#allocation15 + $0x498] sm:$0xff]
    %v3605 = vld [vmem:[#allocation15 + $0x4a0] sm:$0xff]
    %v3606 = vld [vmem:[#allocation15 + $0x4a8] sm:$0xff]
    %v3607 = vld [vmem:[#allocation15 + $0x4b0] sm:$0xff]
    %v3608 = vld [vmem:[#allocation15 + $0x4b8] sm:$0xff]
    %v3609 = vld [vmem:[#allocation15 + $0x4c0] sm:$0xff]
    %v3610 = vld [vmem:[#allocation15 + $0x4c8] sm:$0xff]
    %v3611 = vld [vmem:[#allocation15 + $0x4d0] sm:$0xff]
    %v3612 = vld [vmem:[#allocation15 + $0x4d8] sm:$0xff]
    %v3613 = vld [vmem:[#allocation15 + $0x4e0] sm:$0xff]
    %v3614 = vld [vmem:[#allocation15 + $0x4e8] sm:$0xff]
    %v3615 = vld [vmem:[#allocation15 + $0x4f0] sm:$0xff]
    %v3616 = vld [vmem:[#allocation15 + $0x4f8] sm:$0xff]
    %v3617 = vld [vmem:[#allocation15 + $0x500] sm:$0xff]
    %v3618 = vld [vmem:[#allocation15 + $0x508] sm:$0xff]
    %v3619 = vld [vmem:[#allocation15 + $0x510] sm:$0xff]
    %v3620 = vld [vmem:[#allocation15 + $0x518] sm:$0xff]
    %v3621 = vld [vmem:[#allocation15 + $0x520] sm:$0xff]
    %v3622 = vld [vmem:[#allocation15 + $0x528] sm:$0xff]
    %v3623 = vld [vmem:[#allocation15 + $0x530] sm:$0xff]
    %v3624 = vld [vmem:[#allocation15 + $0x538] sm:$0xff]
    %v3625 = vld [vmem:[#allocation15 + $0x540] sm:$0xff]
    %v3626 = vld [vmem:[#allocation15 + $0x548] sm:$0xff]
    %v3627 = vld [vmem:[#allocation15 + $0x550] sm:$0xff]
    %v3628 = vld [vmem:[#allocation15 + $0x558] sm:$0xff]
    %v3629 = vld [vmem:[#allocation15 + $0x560] sm:$0xff]
    %v3630 = vld [vmem:[#allocation15 + $0x568] sm:$0xff]
    %v3631 = vld [vmem:[#allocation15 + $0x570] sm:$0xff]
    %v3632 = vld [vmem:[#allocation15 + $0x578] sm:$0xff]
    %v3633 = vld [vmem:[#allocation15 + $0x580] sm:$0xff]
    %v3634 = vld [vmem:[#allocation15 + $0x588] sm:$0xff]
    %v3635 = vld [vmem:[#allocation15 + $0x590] sm:$0xff]
    %v3636 = vld [vmem:[#allocation15 + $0x598] sm:$0xff]
    %v3637 = vld [vmem:[#allocation15 + $0x5a0] sm:$0xff]
    %v3638 = vld [vmem:[#allocation15 + $0x5a8] sm:$0xff]
    %v3639 = vld [vmem:[#allocation15 + $0x5b0] sm:$0xff]
    %v3640 = vld [vmem:[#allocation15 + $0x5b8] sm:$0xff]
    %v3641 = vld [vmem:[#allocation15 + $0x5c0] sm:$0xff]
    %v3642 = vld [vmem:[#allocation15 + $0x5c8] sm:$0xff]
    %v3643 = vld [vmem:[#allocation15 + $0x5d0] sm:$0xff]
    %v3644 = vld [vmem:[#allocation15 + $0x5d8] sm:$0xff]
    %v3645 = vld [vmem:[#allocation15 + $0x5e0] sm:$0xff]
    %v3646 = vld [vmem:[#allocation15 + $0x5e8] sm:$0xff]
    %v3647 = vld [vmem:[#allocation15 + $0x5f0] sm:$0xff]
    %v3648 = vld [vmem:[#allocation15 + $0x5f8] sm:$0xff]
    %v3649 = vld [vmem:[#allocation15 + $0x600] sm:$0xff]
    %v3650 = vld [vmem:[#allocation15 + $0x608] sm:$0xff]
    %v3651 = vld [vmem:[#allocation15 + $0x610] sm:$0xff]
    %v3652 = vld [vmem:[#allocation15 + $0x618] sm:$0xff]
    %v3653 = vld [vmem:[#allocation15 + $0x620] sm:$0xff]
    %v3654 = vld [vmem:[#allocation15 + $0x628] sm:$0xff]
    %v3655 = vld [vmem:[#allocation15 + $0x630] sm:$0xff]
    %v3656 = vld [vmem:[#allocation15 + $0x638] sm:$0xff]
    %v3657 = vld [vmem:[#allocation15 + $0x640] sm:$0xff]
    %v3658 = vld [vmem:[#allocation15 + $0x648] sm:$0xff]
    %v3659 = vld [vmem:[#allocation15 + $0x650] sm:$0xff]
    %v3660 = vld [vmem:[#allocation15 + $0x658] sm:$0xff]
    %v3661 = vld [vmem:[#allocation15 + $0x660] sm:$0xff]
    %v3662 = vld [vmem:[#allocation15 + $0x668] sm:$0xff]
    %v3663 = vld [vmem:[#allocation15 + $0x670] sm:$0xff]
    %v3664 = vld [vmem:[#allocation15 + $0x678] sm:$0xff]
    %v3665 = vld [vmem:[#allocation15 + $0x680] sm:$0xff]
    %v3666 = vld [vmem:[#allocation15 + $0x688] sm:$0xff]
    %v3667 = vld [vmem:[#allocation15 + $0x690] sm:$0xff]
    %v3668 = vld [vmem:[#allocation15 + $0x698] sm:$0xff]
    %v3669 = vld [vmem:[#allocation15 + $0x6a0] sm:$0xff]
    %v3670 = vld [vmem:[#allocation15 + $0x6a8] sm:$0xff]
    %v3671 = vld [vmem:[#allocation15 + $0x6b0] sm:$0xff]
    %v3672 = vld [vmem:[#allocation15 + $0x6b8] sm:$0xff]
    %v3673 = vld [vmem:[#allocation15 + $0x6c0] sm:$0xff]
    %v3674 = vld [vmem:[#allocation15 + $0x6c8] sm:$0xff]
    %v3675 = vld [vmem:[#allocation15 + $0x6d0] sm:$0xff]
    %v3676 = vld [vmem:[#allocation15 + $0x6d8] sm:$0xff]
    %v3677 = vld [vmem:[#allocation15 + $0x6e0] sm:$0xff]
    %v3678 = vld [vmem:[#allocation15 + $0x6e8] sm:$0xff]
    %v3679 = vld [vmem:[#allocation15 + $0x6f0] sm:$0xff]
    %v3680 = vld [vmem:[#allocation15 + $0x6f8] sm:$0xff]
    %v3681 = vld [vmem:[#allocation15 + $0x700] sm:$0xff]
    %v3682 = vld [vmem:[#allocation15 + $0x708] sm:$0xff]
    %v3683 = vld [vmem:[#allocation15 + $0x710] sm:$0xff]
    %v3684 = vld [vmem:[#allocation15 + $0x718] sm:$0xff]
    %v3685 = vld [vmem:[#allocation15 + $0x720] sm:$0xff]
    %v3686 = vld [vmem:[#allocation15 + $0x728] sm:$0xff]
    %v3687 = vld [vmem:[#allocation15 + $0x730] sm:$0xff]
    %v3688 = vld [vmem:[#allocation15 + $0x738] sm:$0xff]
    %v3689 = vld [vmem:[#allocation15 + $0x740] sm:$0xff]
    %v3690 = vld [vmem:[#allocation15 + $0x748] sm:$0xff]
    %v3691 = vld [vmem:[#allocation15 + $0x750] sm:$0xff]
    %v3692 = vld [vmem:[#allocation15 + $0x758] sm:$0xff]
    %v3693 = vld [vmem:[#allocation15 + $0x760] sm:$0xff]
    %v3694 = vld [vmem:[#allocation15 + $0x768] sm:$0xff]
    %v3695 = vld [vmem:[#allocation15 + $0x770] sm:$0xff]
    %v3696 = vld [vmem:[#allocation15 + $0x778] sm:$0xff]
    %v3697 = vld [vmem:[#allocation15 + $0x780] sm:$0xff]
    %v3698 = vld [vmem:[#allocation15 + $0x788] sm:$0xff]
    %v3699 = vld [vmem:[#allocation15 + $0x790] sm:$0xff]
    %v3700 = vld [vmem:[#allocation15 + $0x798] sm:$0xff]
    %v3701 = vld [vmem:[#allocation15 + $0x7a0] sm:$0xff]
    %v3702 = vld [vmem:[#allocation15 + $0x7a8] sm:$0xff]
    %v3703 = vld [vmem:[#allocation15 + $0x7b0] sm:$0xff]
    %v3704 = vld [vmem:[#allocation15 + $0x7b8] sm:$0xff]
    %v3705 = vld [vmem:[#allocation15 + $0x7c0] sm:$0xff]
    %v3706 = vld [vmem:[#allocation15 + $0x7c8] sm:$0xff]
    %v3707 = vld [vmem:[#allocation15 + $0x7d0] sm:$0xff]
    %v3708 = vld [vmem:[#allocation15 + $0x7d8] sm:$0xff]
    %v3709 = vld [vmem:[#allocation15 + $0x7e0] sm:$0xff]
    %v3710 = vld [vmem:[#allocation15 + $0x7e8] sm:$0xff]
    %v3711 = vld [vmem:[#allocation15 + $0x7f0] sm:$0xff]
    %v3712 = vld [vmem:[#allocation15 + $0x7f8] sm:$0xff]
    %v3713 = vld [vmem:[#allocation15 + $0x800] sm:$0xff]
    %v3714 = vld [vmem:[#allocation15 + $0x808] sm:$0xff]
    %v3715 = vld [vmem:[#allocation15 + $0x810] sm:$0xff]
    %v3716 = vld [vmem:[#allocation15 + $0x818] sm:$0xff]
    %v3717 = vld [vmem:[#allocation15 + $0x820] sm:$0xff]
    %v3718 = vld [vmem:[#allocation15 + $0x828] sm:$0xff]
    %v3719 = vld [vmem:[#allocation15 + $0x830] sm:$0xff]
    %v3720 = vld [vmem:[#allocation15 + $0x838] sm:$0xff]
    %v3721 = vld [vmem:[#allocation15 + $0x840] sm:$0xff]
    %v3722 = vld [vmem:[#allocation15 + $0x848] sm:$0xff]
    %v3723 = vld [vmem:[#allocation15 + $0x850] sm:$0xff]
    %v3724 = vld [vmem:[#allocation15 + $0x858] sm:$0xff]
    %v3725 = vld [vmem:[#allocation15 + $0x860] sm:$0xff]
    %v3726 = vld [vmem:[#allocation15 + $0x868] sm:$0xff]
    %v3727 = vld [vmem:[#allocation15 + $0x870] sm:$0xff]
    %v3728 = vld [vmem:[#allocation15 + $0x878] sm:$0xff]
    %v3729 = vld [vmem:[#allocation15 + $0x880] sm:$0xff]
    %v3730 = vld [vmem:[#allocation15 + $0x888] sm:$0xff]
    %v3731 = vld [vmem:[#allocation15 + $0x890] sm:$0xff]
    %v3732 = vld [vmem:[#allocation15 + $0x898] sm:$0xff]
    %v3733 = vld [vmem:[#allocation15 + $0x8a0] sm:$0xff]
    %v3734 = vld [vmem:[#allocation15 + $0x8a8] sm:$0xff]
    %v3735 = vld [vmem:[#allocation15 + $0x8b0] sm:$0xff]
    %v3736 = vld [vmem:[#allocation15 + $0x8b8] sm:$0xff]
    %v3737 = vld [vmem:[#allocation15 + $0x8c0] sm:$0xff]
    %v3738 = vld [vmem:[#allocation15 + $0x8c8] sm:$0xff]
    %v3739 = vld [vmem:[#allocation15 + $0x8d0] sm:$0xff]
    %v3740 = vld [vmem:[#allocation15 + $0x8d8] sm:$0xff]
    %v3741 = vld [vmem:[#allocation15 + $0x8e0] sm:$0xff]
    %v3742 = vld [vmem:[#allocation15 + $0x8e8] sm:$0xff]
    %v3743 = vld [vmem:[#allocation15 + $0x8f0] sm:$0xff]
    %v3744 = vld [vmem:[#allocation15 + $0x8f8] sm:$0xff]
    %v3745 = vld [vmem:[#allocation15 + $0x900] sm:$0xff]
    %v3746 = vld [vmem:[#allocation15 + $0x908] sm:$0xff]
    %v3747 = vld [vmem:[#allocation15 + $0x910] sm:$0xff]
    %v3748 = vld [vmem:[#allocation15 + $0x918] sm:$0xff]
    %v3749 = vld [vmem:[#allocation15 + $0x920] sm:$0xff]
    %v3750 = vld [vmem:[#allocation15 + $0x928] sm:$0xff]
    %v3751 = vld [vmem:[#allocation15 + $0x930] sm:$0xff]
    %v3752 = vld [vmem:[#allocation15 + $0x938] sm:$0xff]
    %v3753 = vld [vmem:[#allocation15 + $0x940] sm:$0xff]
    %v3754 = vld [vmem:[#allocation15 + $0x948] sm:$0xff]
    %v3755 = vld [vmem:[#allocation15 + $0x950] sm:$0xff]
    %v3756 = vld [vmem:[#allocation15 + $0x958] sm:$0xff]
    %v3757 = vld [vmem:[#allocation15 + $0x960] sm:$0xff]
    %v3758 = vld [vmem:[#allocation15 + $0x968] sm:$0xff]
    %v3759 = vld [vmem:[#allocation15 + $0x970] sm:$0xff]
    %v3760 = vld [vmem:[#allocation15 + $0x978] sm:$0xff]
    %v3761 = vld [vmem:[#allocation15 + $0x980] sm:$0xff]
    %v3762 = vld [vmem:[#allocation15 + $0x988] sm:$0xff]
    %v3763 = vld [vmem:[#allocation15 + $0x990] sm:$0xff]
    %v3764 = vld [vmem:[#allocation15 + $0x998] sm:$0xff]
    %v3765 = vld [vmem:[#allocation15 + $0x9a0] sm:$0xff]
    %v3766 = vld [vmem:[#allocation15 + $0x9a8] sm:$0xff]
    %v3767 = vld [vmem:[#allocation15 + $0x9b0] sm:$0xff]
    %v3768 = vld [vmem:[#allocation15 + $0x9b8] sm:$0xff]
    %v3769 = vld [vmem:[#allocation15 + $0x9c0] sm:$0xff]
    %v3770 = vld [vmem:[#allocation15 + $0x9c8] sm:$0xff]
    %v3771 = vld [vmem:[#allocation15 + $0x9d0] sm:$0xff]
    %v3772 = vld [vmem:[#allocation15 + $0x9d8] sm:$0xff]
    %v3773 = vld [vmem:[#allocation15 + $0x9e0] sm:$0xff]
    %v3774 = vld [vmem:[#allocation15 + $0x9e8] sm:$0xff]
    %v3775 = vld [vmem:[#allocation15 + $0x9f0] sm:$0xff]
    %v3776 = vld [vmem:[#allocation15 + $0x9f8] sm:$0xff]
    %v3777 = vld [vmem:[#allocation16] sm:$0xff]
    %v3778 = vld [vmem:[#allocation16 + $0x8] sm:$0x3]
    %v3781 = vlaneseq
    %v3782 = vshrl.u32 %v3781, 7
    %v3783 = vsub.s32 0, %v3782
    %v3784 = vrot.slane %v3777, %v3783
    %v3785 = vlaneseq
    %v3786 = vshrl.u32 %v3785, 7
    %v3787 = vsub.s32 1, %v3786
    %v3788 = vrot.slane %v3777, %v3787
    %v3789 = vlaneseq
    %v3790 = vshrl.u32 %v3789, 7
    %v3791 = vsub.s32 2, %v3790
    %v3792 = vrot.slane %v3777, %v3791
    %v3793 = vlaneseq
    %v3794 = vshrl.u32 %v3793, 7
    %v3795 = vsub.s32 3, %v3794
    %v3796 = vrot.slane %v3777, %v3795
    %v3797 = vlaneseq
    %v3798 = vshrl.u32 %v3797, 7
    %v3799 = vsub.s32 4, %v3798
    %v3800 = vrot.slane %v3777, %v3799
    %v3801 = vlaneseq
    %v3802 = vshrl.u32 %v3801, 7
    %v3803 = vsub.s32 5, %v3802
    %v3804 = vrot.slane %v3777, %v3803
    %v3805 = vlaneseq
    %v3806 = vshrl.u32 %v3805, 7
    %v3807 = vsub.s32 6, %v3806
    %v3808 = vrot.slane %v3777, %v3807
    %v3809 = vlaneseq
    %v3810 = vshrl.u32 %v3809, 7
    %v3811 = vsub.s32 7, %v3810
    %v3812 = vrot.slane %v3777, %v3811
    %v3813 = vlaneseq
    %v3814 = vshrl.u32 %v3813, 7
    %v3815 = vsub.s32 0, %v3814
    %v3816 = vrot.slane %v3778, %v3815
    %v3817 = vlaneseq
    %v3818 = vshrl.u32 %v3817, 7
    %v3819 = vsub.s32 1, %v3818
    %v3820 = vrot.slane %v3778, %v3819
    %v4151 = vunpack.c.l.b16 %v3457
    %v4152 = vunpack.c.h.b16 %v3457
    %v4153 = vunpack.c.l.b16 %v3458
    %v4154 = vunpack.c.h.b16 %v3458
    %v4155 = vunpack.c.l.b16 %v3459
    %v4156 = vunpack.c.h.b16 %v3459
    %v4157 = vunpack.c.l.b16 %v3460
    %v4158 = vunpack.c.h.b16 %v3460
    %v4159 = vunpack.c.l.b16 %v3461
    %v4160 = vunpack.c.h.b16 %v3461
    %v4161 = vunpack.c.l.b16 %v3462
    %v4162 = vunpack.c.h.b16 %v3462
    %v4163 = vunpack.c.l.b16 %v3463
    %v4164 = vunpack.c.h.b16 %v3463
    %v4165 = vunpack.c.l.b16 %v3464
    %v4166 = vunpack.c.h.b16 %v3464
    %v4167 = vunpack.c.l.b16 %v3465
    %v4168 = vunpack.c.h.b16 %v3465
    %v4169 = vunpack.c.l.b16 %v3466
    %v4170 = vunpack.c.h.b16 %v3466
    %v4171 = vunpack.c.l.b16 %v3467
    %v4172 = vunpack.c.h.b16 %v3467
    %v4173 = vunpack.c.l.b16 %v3468
    %v4174 = vunpack.c.h.b16 %v3468
    %v4175 = vunpack.c.l.b16 %v3469
    %v4176 = vunpack.c.h.b16 %v3469
    %v4177 = vunpack.c.l.b16 %v3470
    %v4178 = vunpack.c.h.b16 %v3470
    %v4179 = vunpack.c.l.b16 %v3471
    %v4180 = vunpack.c.h.b16 %v3471
    %v4181 = vunpack.c.l.b16 %v3472
    %v4182 = vunpack.c.h.b16 %v3472
    %v4183 = vunpack.c.l.b16 %v3473
    %v4184 = vunpack.c.h.b16 %v3473
    %v4185 = vunpack.c.l.b16 %v3474
    %v4186 = vunpack.c.h.b16 %v3474
    %v4187 = vunpack.c.l.b16 %v3475
    %v4188 = vunpack.c.h.b16 %v3475
    %v4189 = vunpack.c.l.b16 %v3476
    %v4190 = vunpack.c.h.b16 %v3476
    %v4191 = vunpack.c.l.b16 %v3477
    %v4192 = vunpack.c.h.b16 %v3477
    %v4193 = vunpack.c.l.b16 %v3478
    %v4194 = vunpack.c.h.b16 %v3478
    %v4195 = vunpack.c.l.b16 %v3479
    %v4196 = vunpack.c.h.b16 %v3479
    %v4197 = vunpack.c.l.b16 %v3480
    %v4198 = vunpack.c.h.b16 %v3480
    %v4199 = vunpack.c.l.b16 %v3481
    %v4200 = vunpack.c.h.b16 %v3481
    %v4201 = vunpack.c.l.b16 %v3482
    %v4202 = vunpack.c.h.b16 %v3482
    %v4203 = vunpack.c.l.b16 %v3483
    %v4204 = vunpack.c.h.b16 %v3483
    %v4205 = vunpack.c.l.b16 %v3484
    %v4206 = vunpack.c.h.b16 %v3484
    %v4207 = vunpack.c.l.b16 %v3485
    %v4208 = vunpack.c.h.b16 %v3485
    %v4209 = vunpack.c.l.b16 %v3486
    %v4210 = vunpack.c.h.b16 %v3486
    %v4211 = vunpack.c.l.b16 %v3487
    %v4212 = vunpack.c.h.b16 %v3487
    %v4213 = vunpack.c.l.b16 %v3488
    %v4214 = vunpack.c.h.b16 %v3488
    %v4215 = vunpack.c.l.b16 %v3489
    %v4216 = vunpack.c.h.b16 %v3489
    %v4217 = vunpack.c.l.b16 %v3490
    %v4218 = vunpack.c.h.b16 %v3490
    %v4219 = vunpack.c.l.b16 %v3491
    %v4220 = vunpack.c.h.b16 %v3491
    %v4221 = vunpack.c.l.b16 %v3492
    %v4222 = vunpack.c.h.b16 %v3492
    %v4223 = vunpack.c.l.b16 %v3493
    %v4224 = vunpack.c.h.b16 %v3493
    %v4225 = vunpack.c.l.b16 %v3494
    %v4226 = vunpack.c.h.b16 %v3494
    %v4227 = vunpack.c.l.b16 %v3495
    %v4228 = vunpack.c.h.b16 %v3495
    %v4229 = vunpack.c.l.b16 %v3496
    %v4230 = vunpack.c.h.b16 %v3496
    %v4231 = vunpack.c.l.b16 %v3497
    %v4232 = vunpack.c.h.b16 %v3497
    %v4233 = vunpack.c.l.b16 %v3498
    %v4234 = vunpack.c.h.b16 %v3498
    %v4235 = vunpack.c.l.b16 %v3499
    %v4236 = vunpack.c.h.b16 %v3499
    %v4237 = vunpack.c.l.b16 %v3500
    %v4238 = vunpack.c.h.b16 %v3500
    %v4239 = vunpack.c.l.b16 %v3501
    %v4240 = vunpack.c.h.b16 %v3501
    %v4241 = vunpack.c.l.b16 %v3502
    %v4242 = vunpack.c.h.b16 %v3502
    %v4243 = vunpack.c.l.b16 %v3503
    %v4244 = vunpack.c.h.b16 %v3503
    %v4245 = vunpack.c.l.b16 %v3504
    %v4246 = vunpack.c.h.b16 %v3504
    %v4247 = vunpack.c.l.b16 %v3505
    %v4248 = vunpack.c.h.b16 %v3505
    %v4249 = vunpack.c.l.b16 %v3506
    %v4250 = vunpack.c.h.b16 %v3506
    %v4251 = vunpack.c.l.b16 %v3507
    %v4252 = vunpack.c.h.b16 %v3507
    %v4253 = vunpack.c.l.b16 %v3508
    %v4254 = vunpack.c.h.b16 %v3508
    %v4255 = vunpack.c.l.b16 %v3509
    %v4256 = vunpack.c.h.b16 %v3509
    %v4257 = vunpack.c.l.b16 %v3510
    %v4258 = vunpack.c.h.b16 %v3510
    %v4259 = vunpack.c.l.b16 %v3511
    %v4260 = vunpack.c.h.b16 %v3511
    %v4261 = vunpack.c.l.b16 %v3512
    %v4262 = vunpack.c.h.b16 %v3512
    %v4263 = vunpack.c.l.b16 %v3513
    %v4264 = vunpack.c.h.b16 %v3513
    %v4265 = vunpack.c.l.b16 %v3514
    %v4266 = vunpack.c.h.b16 %v3514
    %v4267 = vunpack.c.l.b16 %v3515
    %v4268 = vunpack.c.h.b16 %v3515
    %v4269 = vunpack.c.l.b16 %v3516
    %v4270 = vunpack.c.h.b16 %v3516
    %v4271 = vunpack.c.l.b16 %v3517
    %v4272 = vunpack.c.h.b16 %v3517
    %v4273 = vunpack.c.l.b16 %v3518
    %v4274 = vunpack.c.h.b16 %v3518
    %v4275 = vunpack.c.l.b16 %v3519
    %v4276 = vunpack.c.h.b16 %v3519
    %v4277 = vunpack.c.l.b16 %v3520
    %v4278 = vunpack.c.h.b16 %v3520
    %v4279 = vunpack.c.l.b16 %v3521
    %v4280 = vunpack.c.h.b16 %v3521
    %v4281 = vunpack.c.l.b16 %v3522
    %v4282 = vunpack.c.h.b16 %v3522
    %v4283 = vunpack.c.l.b16 %v3523
    %v4284 = vunpack.c.h.b16 %v3523
    %v4285 = vunpack.c.l.b16 %v3524
    %v4286 = vunpack.c.h.b16 %v3524
    %v4287 = vunpack.c.l.b16 %v3525
    %v4288 = vunpack.c.h.b16 %v3525
    %v4289 = vunpack.c.l.b16 %v3526
    %v4290 = vunpack.c.h.b16 %v3526
    %v4291 = vunpack.c.l.b16 %v3527
    %v4292 = vunpack.c.h.b16 %v3527
    %v4293 = vunpack.c.l.b16 %v3528
    %v4294 = vunpack.c.h.b16 %v3528
    %v4295 = vunpack.c.l.b16 %v3529
    %v4296 = vunpack.c.h.b16 %v3529
    %v4297 = vunpack.c.l.b16 %v3530
    %v4298 = vunpack.c.h.b16 %v3530
    %v4299 = vunpack.c.l.b16 %v3531
    %v4300 = vunpack.c.h.b16 %v3531
    %v4301 = vunpack.c.l.b16 %v3532
    %v4302 = vunpack.c.h.b16 %v3532
    %v4303 = vunpack.c.l.b16 %v3533
    %v4304 = vunpack.c.h.b16 %v3533
    %v4305 = vunpack.c.l.b16 %v3534
    %v4306 = vunpack.c.h.b16 %v3534
    %v4307 = vunpack.c.l.b16 %v3535
    %v4308 = vunpack.c.h.b16 %v3535
    %v4309 = vunpack.c.l.b16 %v3536
    %v4310 = vunpack.c.h.b16 %v3536
    %v4311 = vunpack.c.l.b16 %v3537
    %v4312 = vunpack.c.h.b16 %v3537
    %v4313 = vunpack.c.l.b16 %v3538
    %v4314 = vunpack.c.h.b16 %v3538
    %v4315 = vunpack.c.l.b16 %v3539
    %v4316 = vunpack.c.h.b16 %v3539
    %v4317 = vunpack.c.l.b16 %v3540
    %v4318 = vunpack.c.h.b16 %v3540
    %v4319 = vunpack.c.l.b16 %v3541
    %v4320 = vunpack.c.h.b16 %v3541
    %v4321 = vunpack.c.l.b16 %v3542
    %v4322 = vunpack.c.h.b16 %v3542
    %v4323 = vunpack.c.l.b16 %v3543
    %v4324 = vunpack.c.h.b16 %v3543
    %v4325 = vunpack.c.l.b16 %v3544
    %v4326 = vunpack.c.h.b16 %v3544
    %v4327 = vunpack.c.l.b16 %v3545
    %v4328 = vunpack.c.h.b16 %v3545
    %v4329 = vunpack.c.l.b16 %v3546
    %v4330 = vunpack.c.h.b16 %v3546
    %v4331 = vunpack.c.l.b16 %v3547
    %v4332 = vunpack.c.h.b16 %v3547
    %v4333 = vunpack.c.l.b16 %v3548
    %v4334 = vunpack.c.h.b16 %v3548
    %v4335 = vunpack.c.l.b16 %v3549
    %v4336 = vunpack.c.h.b16 %v3549
    %v4337 = vunpack.c.l.b16 %v3550
    %v4338 = vunpack.c.h.b16 %v3550
    %v4339 = vunpack.c.l.b16 %v3551
    %v4340 = vunpack.c.h.b16 %v3551
    %v4341 = vunpack.c.l.b16 %v3552
    %v4342 = vunpack.c.h.b16 %v3552
    %v4343 = vunpack.c.l.b16 %v3553
    %v4344 = vunpack.c.h.b16 %v3553
    %v4345 = vunpack.c.l.b16 %v3554
    %v4346 = vunpack.c.h.b16 %v3554
    %v4347 = vunpack.c.l.b16 %v3555
    %v4348 = vunpack.c.h.b16 %v3555
    %v4349 = vunpack.c.l.b16 %v3556
    %v4350 = vunpack.c.h.b16 %v3556
    %v4351 = vunpack.c.l.b16 %v3557
    %v4352 = vunpack.c.h.b16 %v3557
    %v4353 = vunpack.c.l.b16 %v3558
    %v4354 = vunpack.c.h.b16 %v3558
    %v4355 = vunpack.c.l.b16 %v3559
    %v4356 = vunpack.c.h.b16 %v3559
    %v4357 = vunpack.c.l.b16 %v3560
    %v4358 = vunpack.c.h.b16 %v3560
    %v4359 = vunpack.c.l.b16 %v3561
    %v4360 = vunpack.c.h.b16 %v3561
    %v4361 = vunpack.c.l.b16 %v3562
    %v4362 = vunpack.c.h.b16 %v3562
    %v4363 = vunpack.c.l.b16 %v3563
    %v4364 = vunpack.c.h.b16 %v3563
    %v4365 = vunpack.c.l.b16 %v3564
    %v4366 = vunpack.c.h.b16 %v3564
    %v4367 = vunpack.c.l.b16 %v3565
    %v4368 = vunpack.c.h.b16 %v3565
    %v4369 = vunpack.c.l.b16 %v3566
    %v4370 = vunpack.c.h.b16 %v3566
    %v4371 = vunpack.c.l.b16 %v3567
    %v4372 = vunpack.c.h.b16 %v3567
    %v4373 = vunpack.c.l.b16 %v3568
    %v4374 = vunpack.c.h.b16 %v3568
    %v4375 = vunpack.c.l.b16 %v3569
    %v4376 = vunpack.c.h.b16 %v3569
    %v4377 = vunpack.c.l.b16 %v3570
    %v4378 = vunpack.c.h.b16 %v3570
    %v4379 = vunpack.c.l.b16 %v3571
    %v4380 = vunpack.c.h.b16 %v3571
    %v4381 = vunpack.c.l.b16 %v3572
    %v4382 = vunpack.c.h.b16 %v3572
    %v4383 = vunpack.c.l.b16 %v3573
    %v4384 = vunpack.c.h.b16 %v3573
    %v4385 = vunpack.c.l.b16 %v3574
    %v4386 = vunpack.c.h.b16 %v3574
    %v4387 = vunpack.c.l.b16 %v3575
    %v4388 = vunpack.c.h.b16 %v3575
    %v4389 = vunpack.c.l.b16 %v3576
    %v4390 = vunpack.c.h.b16 %v3576
    %v4391 = vunpack.c.l.b16 %v3577
    %v4392 = vunpack.c.h.b16 %v3577
    %v4393 = vunpack.c.l.b16 %v3578
    %v4394 = vunpack.c.h.b16 %v3578
    %v4395 = vunpack.c.l.b16 %v3579
    %v4396 = vunpack.c.h.b16 %v3579
    %v4397 = vunpack.c.l.b16 %v3580
    %v4398 = vunpack.c.h.b16 %v3580
    %v4399 = vunpack.c.l.b16 %v3581
    %v4400 = vunpack.c.h.b16 %v3581
    %v4401 = vunpack.c.l.b16 %v3582
    %v4402 = vunpack.c.h.b16 %v3582
    %v4403 = vunpack.c.l.b16 %v3583
    %v4404 = vunpack.c.h.b16 %v3583
    %v4405 = vunpack.c.l.b16 %v3584
    %v4406 = vunpack.c.h.b16 %v3584
    %v4407 = vunpack.c.l.b16 %v3585
    %v4408 = vunpack.c.h.b16 %v3585
    %v4409 = vunpack.c.l.b16 %v3586
    %v4410 = vunpack.c.h.b16 %v3586
    %v4411 = vunpack.c.l.b16 %v3587
    %v4412 = vunpack.c.h.b16 %v3587
    %v4413 = vunpack.c.l.b16 %v3588
    %v4414 = vunpack.c.h.b16 %v3588
    %v4415 = vunpack.c.l.b16 %v3589
    %v4416 = vunpack.c.h.b16 %v3589
    %v4417 = vunpack.c.l.b16 %v3590
    %v4418 = vunpack.c.h.b16 %v3590
    %v4419 = vunpack.c.l.b16 %v3591
    %v4420 = vunpack.c.h.b16 %v3591
    %v4421 = vunpack.c.l.b16 %v3592
    %v4422 = vunpack.c.h.b16 %v3592
    %v4423 = vunpack.c.l.b16 %v3593
    %v4424 = vunpack.c.h.b16 %v3593
    %v4425 = vunpack.c.l.b16 %v3594
    %v4426 = vunpack.c.h.b16 %v3594
    %v4427 = vunpack.c.l.b16 %v3595
    %v4428 = vunpack.c.h.b16 %v3595
    %v4429 = vunpack.c.l.b16 %v3596
    %v4430 = vunpack.c.h.b16 %v3596
    %v4431 = vunpack.c.l.b16 %v3597
    %v4432 = vunpack.c.h.b16 %v3597
    %v4433 = vunpack.c.l.b16 %v3598
    %v4434 = vunpack.c.h.b16 %v3598
    %v4435 = vunpack.c.l.b16 %v3599
    %v4436 = vunpack.c.h.b16 %v3599
    %v4437 = vunpack.c.l.b16 %v3600
    %v4438 = vunpack.c.h.b16 %v3600
    %v4439 = vunpack.c.l.b16 %v3601
    %v4440 = vunpack.c.h.b16 %v3601
    %v4441 = vunpack.c.l.b16 %v3602
    %v4442 = vunpack.c.h.b16 %v3602
    %v4443 = vunpack.c.l.b16 %v3603
    %v4444 = vunpack.c.h.b16 %v3603
    %v4445 = vunpack.c.l.b16 %v3604
    %v4446 = vunpack.c.h.b16 %v3604
    %v4447 = vunpack.c.l.b16 %v3605
    %v4448 = vunpack.c.h.b16 %v3605
    %v4449 = vunpack.c.l.b16 %v3606
    %v4450 = vunpack.c.h.b16 %v3606
    %v4451 = vunpack.c.l.b16 %v3607
    %v4452 = vunpack.c.h.b16 %v3607
    %v4453 = vunpack.c.l.b16 %v3608
    %v4454 = vunpack.c.h.b16 %v3608
    %v4455 = vunpack.c.l.b16 %v3609
    %v4456 = vunpack.c.h.b16 %v3609
    %v4457 = vunpack.c.l.b16 %v3610
    %v4458 = vunpack.c.h.b16 %v3610
    %v4459 = vunpack.c.l.b16 %v3611
    %v4460 = vunpack.c.h.b16 %v3611
    %v4461 = vunpack.c.l.b16 %v3612
    %v4462 = vunpack.c.h.b16 %v3612
    %v4463 = vunpack.c.l.b16 %v3613
    %v4464 = vunpack.c.h.b16 %v3613
    %v4465 = vunpack.c.l.b16 %v3614
    %v4466 = vunpack.c.h.b16 %v3614
    %v4467 = vunpack.c.l.b16 %v3615
    %v4468 = vunpack.c.h.b16 %v3615
    %v4469 = vunpack.c.l.b16 %v3616
    %v4470 = vunpack.c.h.b16 %v3616
    %v4471 = vunpack.c.l.b16 %v3617
    %v4472 = vunpack.c.h.b16 %v3617
    %v4473 = vunpack.c.l.b16 %v3618
    %v4474 = vunpack.c.h.b16 %v3618
    %v4475 = vunpack.c.l.b16 %v3619
    %v4476 = vunpack.c.h.b16 %v3619
    %v4477 = vunpack.c.l.b16 %v3620
    %v4478 = vunpack.c.h.b16 %v3620
    %v4479 = vunpack.c.l.b16 %v3621
    %v4480 = vunpack.c.h.b16 %v3621
    %v4481 = vunpack.c.l.b16 %v3622
    %v4482 = vunpack.c.h.b16 %v3622
    %v4483 = vunpack.c.l.b16 %v3623
    %v4484 = vunpack.c.h.b16 %v3623
    %v4485 = vunpack.c.l.b16 %v3624
    %v4486 = vunpack.c.h.b16 %v3624
    %v4487 = vunpack.c.l.b16 %v3625
    %v4488 = vunpack.c.h.b16 %v3625
    %v4489 = vunpack.c.l.b16 %v3626
    %v4490 = vunpack.c.h.b16 %v3626
    %v4491 = vunpack.c.l.b16 %v3627
    %v4492 = vunpack.c.h.b16 %v3627
    %v4493 = vunpack.c.l.b16 %v3628
    %v4494 = vunpack.c.h.b16 %v3628
    %v4495 = vunpack.c.l.b16 %v3629
    %v4496 = vunpack.c.h.b16 %v3629
    %v4497 = vunpack.c.l.b16 %v3630
    %v4498 = vunpack.c.h.b16 %v3630
    %v4499 = vunpack.c.l.b16 %v3631
    %v4500 = vunpack.c.h.b16 %v3631
    %v4501 = vunpack.c.l.b16 %v3632
    %v4502 = vunpack.c.h.b16 %v3632
    %v4503 = vunpack.c.l.b16 %v3633
    %v4504 = vunpack.c.h.b16 %v3633
    %v4505 = vunpack.c.l.b16 %v3634
    %v4506 = vunpack.c.h.b16 %v3634
    %v4507 = vunpack.c.l.b16 %v3635
    %v4508 = vunpack.c.h.b16 %v3635
    %v4509 = vunpack.c.l.b16 %v3636
    %v4510 = vunpack.c.h.b16 %v3636
    %v4511 = vunpack.c.l.b16 %v3637
    %v4512 = vunpack.c.h.b16 %v3637
    %v4513 = vunpack.c.l.b16 %v3638
    %v4514 = vunpack.c.h.b16 %v3638
    %v4515 = vunpack.c.l.b16 %v3639
    %v4516 = vunpack.c.h.b16 %v3639
    %v4517 = vunpack.c.l.b16 %v3640
    %v4518 = vunpack.c.h.b16 %v3640
    %v4519 = vunpack.c.l.b16 %v3641
    %v4520 = vunpack.c.h.b16 %v3641
    %v4521 = vunpack.c.l.b16 %v3642
    %v4522 = vunpack.c.h.b16 %v3642
    %v4523 = vunpack.c.l.b16 %v3643
    %v4524 = vunpack.c.h.b16 %v3643
    %v4525 = vunpack.c.l.b16 %v3644
    %v4526 = vunpack.c.h.b16 %v3644
    %v4527 = vunpack.c.l.b16 %v3645
    %v4528 = vunpack.c.h.b16 %v3645
    %v4529 = vunpack.c.l.b16 %v3646
    %v4530 = vunpack.c.h.b16 %v3646
    %v4531 = vunpack.c.l.b16 %v3647
    %v4532 = vunpack.c.h.b16 %v3647
    %v4533 = vunpack.c.l.b16 %v3648
    %v4534 = vunpack.c.h.b16 %v3648
    %v4535 = vunpack.c.l.b16 %v3649
    %v4536 = vunpack.c.h.b16 %v3649
    %v4537 = vunpack.c.l.b16 %v3650
    %v4538 = vunpack.c.h.b16 %v3650
    %v4539 = vunpack.c.l.b16 %v3651
    %v4540 = vunpack.c.h.b16 %v3651
    %v4541 = vunpack.c.l.b16 %v3652
    %v4542 = vunpack.c.h.b16 %v3652
    %v4543 = vunpack.c.l.b16 %v3653
    %v4544 = vunpack.c.h.b16 %v3653
    %v4545 = vunpack.c.l.b16 %v3654
    %v4546 = vunpack.c.h.b16 %v3654
    %v4547 = vunpack.c.l.b16 %v3655
    %v4548 = vunpack.c.h.b16 %v3655
    %v4549 = vunpack.c.l.b16 %v3656
    %v4550 = vunpack.c.h.b16 %v3656
    %v4551 = vunpack.c.l.b16 %v3657
    %v4552 = vunpack.c.h.b16 %v3657
    %v4553 = vunpack.c.l.b16 %v3658
    %v4554 = vunpack.c.h.b16 %v3658
    %v4555 = vunpack.c.l.b16 %v3659
    %v4556 = vunpack.c.h.b16 %v3659
    %v4557 = vunpack.c.l.b16 %v3660
    %v4558 = vunpack.c.h.b16 %v3660
    %v4559 = vunpack.c.l.b16 %v3661
    %v4560 = vunpack.c.h.b16 %v3661
    %v4561 = vunpack.c.l.b16 %v3662
    %v4562 = vunpack.c.h.b16 %v3662
    %v4563 = vunpack.c.l.b16 %v3663
    %v4564 = vunpack.c.h.b16 %v3663
    %v4565 = vunpack.c.l.b16 %v3664
    %v4566 = vunpack.c.h.b16 %v3664
    %v4567 = vunpack.c.l.b16 %v3665
    %v4568 = vunpack.c.h.b16 %v3665
    %v4569 = vunpack.c.l.b16 %v3666
    %v4570 = vunpack.c.h.b16 %v3666
    %v4571 = vunpack.c.l.b16 %v3667
    %v4572 = vunpack.c.h.b16 %v3667
    %v4573 = vunpack.c.l.b16 %v3668
    %v4574 = vunpack.c.h.b16 %v3668
    %v4575 = vunpack.c.l.b16 %v3669
    %v4576 = vunpack.c.h.b16 %v3669
    %v4577 = vunpack.c.l.b16 %v3670
    %v4578 = vunpack.c.h.b16 %v3670
    %v4579 = vunpack.c.l.b16 %v3671
    %v4580 = vunpack.c.h.b16 %v3671
    %v4581 = vunpack.c.l.b16 %v3672
    %v4582 = vunpack.c.h.b16 %v3672
    %v4583 = vunpack.c.l.b16 %v3673
    %v4584 = vunpack.c.h.b16 %v3673
    %v4585 = vunpack.c.l.b16 %v3674
    %v4586 = vunpack.c.h.b16 %v3674
    %v4587 = vunpack.c.l.b16 %v3675
    %v4588 = vunpack.c.h.b16 %v3675
    %v4589 = vunpack.c.l.b16 %v3676
    %v4590 = vunpack.c.h.b16 %v3676
    %v4591 = vunpack.c.l.b16 %v3677
    %v4592 = vunpack.c.h.b16 %v3677
    %v4593 = vunpack.c.l.b16 %v3678
    %v4594 = vunpack.c.h.b16 %v3678
    %v4595 = vunpack.c.l.b16 %v3679
    %v4596 = vunpack.c.h.b16 %v3679
    %v4597 = vunpack.c.l.b16 %v3680
    %v4598 = vunpack.c.h.b16 %v3680
    %v4599 = vunpack.c.l.b16 %v3681
    %v4600 = vunpack.c.h.b16 %v3681
    %v4601 = vunpack.c.l.b16 %v3682
    %v4602 = vunpack.c.h.b16 %v3682
    %v4603 = vunpack.c.l.b16 %v3683
    %v4604 = vunpack.c.h.b16 %v3683
    %v4605 = vunpack.c.l.b16 %v3684
    %v4606 = vunpack.c.h.b16 %v3684
    %v4607 = vunpack.c.l.b16 %v3685
    %v4608 = vunpack.c.h.b16 %v3685
    %v4609 = vunpack.c.l.b16 %v3686
    %v4610 = vunpack.c.h.b16 %v3686
    %v4611 = vunpack.c.l.b16 %v3687
    %v4612 = vunpack.c.h.b16 %v3687
    %v4613 = vunpack.c.l.b16 %v3688
    %v4614 = vunpack.c.h.b16 %v3688
    %v4615 = vunpack.c.l.b16 %v3689
    %v4616 = vunpack.c.h.b16 %v3689
    %v4617 = vunpack.c.l.b16 %v3690
    %v4618 = vunpack.c.h.b16 %v3690
    %v4619 = vunpack.c.l.b16 %v3691
    %v4620 = vunpack.c.h.b16 %v3691
    %v4621 = vunpack.c.l.b16 %v3692
    %v4622 = vunpack.c.h.b16 %v3692
    %v4623 = vunpack.c.l.b16 %v3693
    %v4624 = vunpack.c.h.b16 %v3693
    %v4625 = vunpack.c.l.b16 %v3694
    %v4626 = vunpack.c.h.b16 %v3694
    %v4627 = vunpack.c.l.b16 %v3695
    %v4628 = vunpack.c.h.b16 %v3695
    %v4629 = vunpack.c.l.b16 %v3696
    %v4630 = vunpack.c.h.b16 %v3696
    %v4631 = vunpack.c.l.b16 %v3697
    %v4632 = vunpack.c.h.b16 %v3697
    %v4633 = vunpack.c.l.b16 %v3698
    %v4634 = vunpack.c.h.b16 %v3698
    %v4635 = vunpack.c.l.b16 %v3699
    %v4636 = vunpack.c.h.b16 %v3699
    %v4637 = vunpack.c.l.b16 %v3700
    %v4638 = vunpack.c.h.b16 %v3700
    %v4639 = vunpack.c.l.b16 %v3701
    %v4640 = vunpack.c.h.b16 %v3701
    %v4641 = vunpack.c.l.b16 %v3702
    %v4642 = vunpack.c.h.b16 %v3702
    %v4643 = vunpack.c.l.b16 %v3703
    %v4644 = vunpack.c.h.b16 %v3703
    %v4645 = vunpack.c.l.b16 %v3704
    %v4646 = vunpack.c.h.b16 %v3704
    %v4647 = vunpack.c.l.b16 %v3705
    %v4648 = vunpack.c.h.b16 %v3705
    %v4649 = vunpack.c.l.b16 %v3706
    %v4650 = vunpack.c.h.b16 %v3706
    %v4651 = vunpack.c.l.b16 %v3707
    %v4652 = vunpack.c.h.b16 %v3707
    %v4653 = vunpack.c.l.b16 %v3708
    %v4654 = vunpack.c.h.b16 %v3708
    %v4655 = vunpack.c.l.b16 %v3709
    %v4656 = vunpack.c.h.b16 %v3709
    %v4657 = vunpack.c.l.b16 %v3710
    %v4658 = vunpack.c.h.b16 %v3710
    %v4659 = vunpack.c.l.b16 %v3711
    %v4660 = vunpack.c.h.b16 %v3711
    %v4661 = vunpack.c.l.b16 %v3712
    %v4662 = vunpack.c.h.b16 %v3712
    %v4663 = vunpack.c.l.b16 %v3713
    %v4664 = vunpack.c.h.b16 %v3713
    %v4665 = vunpack.c.l.b16 %v3714
    %v4666 = vunpack.c.h.b16 %v3714
    %v4667 = vunpack.c.l.b16 %v3715
    %v4668 = vunpack.c.h.b16 %v3715
    %v4669 = vunpack.c.l.b16 %v3716
    %v4670 = vunpack.c.h.b16 %v3716
    %v4671 = vunpack.c.l.b16 %v3717
    %v4672 = vunpack.c.h.b16 %v3717
    %v4673 = vunpack.c.l.b16 %v3718
    %v4674 = vunpack.c.h.b16 %v3718
    %v4675 = vunpack.c.l.b16 %v3719
    %v4676 = vunpack.c.h.b16 %v3719
    %v4677 = vunpack.c.l.b16 %v3720
    %v4678 = vunpack.c.h.b16 %v3720
    %v4679 = vunpack.c.l.b16 %v3721
    %v4680 = vunpack.c.h.b16 %v3721
    %v4681 = vunpack.c.l.b16 %v3722
    %v4682 = vunpack.c.h.b16 %v3722
    %v4683 = vunpack.c.l.b16 %v3723
    %v4684 = vunpack.c.h.b16 %v3723
    %v4685 = vunpack.c.l.b16 %v3724
    %v4686 = vunpack.c.h.b16 %v3724
    %v4687 = vunpack.c.l.b16 %v3725
    %v4688 = vunpack.c.h.b16 %v3725
    %v4689 = vunpack.c.l.b16 %v3726
    %v4690 = vunpack.c.h.b16 %v3726
    %v4691 = vunpack.c.l.b16 %v3727
    %v4692 = vunpack.c.h.b16 %v3727
    %v4693 = vunpack.c.l.b16 %v3728
    %v4694 = vunpack.c.h.b16 %v3728
    %v4695 = vunpack.c.l.b16 %v3729
    %v4696 = vunpack.c.h.b16 %v3729
    %v4697 = vunpack.c.l.b16 %v3730
    %v4698 = vunpack.c.h.b16 %v3730
    %v4699 = vunpack.c.l.b16 %v3731
    %v4700 = vunpack.c.h.b16 %v3731
    %v4701 = vunpack.c.l.b16 %v3732
    %v4702 = vunpack.c.h.b16 %v3732
    %v4703 = vunpack.c.l.b16 %v3733
    %v4704 = vunpack.c.h.b16 %v3733
    %v4705 = vunpack.c.l.b16 %v3734
    %v4706 = vunpack.c.h.b16 %v3734
    %v4707 = vunpack.c.l.b16 %v3735
    %v4708 = vunpack.c.h.b16 %v3735
    %v4709 = vunpack.c.l.b16 %v3736
    %v4710 = vunpack.c.h.b16 %v3736
    %v4711 = vunpack.c.l.b16 %v3737
    %v4712 = vunpack.c.h.b16 %v3737
    %v4713 = vunpack.c.l.b16 %v3738
    %v4714 = vunpack.c.h.b16 %v3738
    %v4715 = vunpack.c.l.b16 %v3739
    %v4716 = vunpack.c.h.b16 %v3739
    %v4717 = vunpack.c.l.b16 %v3740
    %v4718 = vunpack.c.h.b16 %v3740
    %v4719 = vunpack.c.l.b16 %v3741
    %v4720 = vunpack.c.h.b16 %v3741
    %v4721 = vunpack.c.l.b16 %v3742
    %v4722 = vunpack.c.h.b16 %v3742
    %v4723 = vunpack.c.l.b16 %v3743
    %v4724 = vunpack.c.h.b16 %v3743
    %v4725 = vunpack.c.l.b16 %v3744
    %v4726 = vunpack.c.h.b16 %v3744
    %v4727 = vunpack.c.l.b16 %v3745
    %v4728 = vunpack.c.h.b16 %v3745
    %v4729 = vunpack.c.l.b16 %v3746
    %v4730 = vunpack.c.h.b16 %v3746
    %v4731 = vunpack.c.l.b16 %v3747
    %v4732 = vunpack.c.h.b16 %v3747
    %v4733 = vunpack.c.l.b16 %v3748
    %v4734 = vunpack.c.h.b16 %v3748
    %v4735 = vunpack.c.l.b16 %v3749
    %v4736 = vunpack.c.h.b16 %v3749
    %v4737 = vunpack.c.l.b16 %v3750
    %v4738 = vunpack.c.h.b16 %v3750
    %v4739 = vunpack.c.l.b16 %v3751
    %v4740 = vunpack.c.h.b16 %v3751
    %v4741 = vunpack.c.l.b16 %v3752
    %v4742 = vunpack.c.h.b16 %v3752
    %v4743 = vunpack.c.l.b16 %v3753
    %v4744 = vunpack.c.h.b16 %v3753
    %v4745 = vunpack.c.l.b16 %v3754
    %v4746 = vunpack.c.h.b16 %v3754
    %v4747 = vunpack.c.l.b16 %v3755
    %v4748 = vunpack.c.h.b16 %v3755
    %v4749 = vunpack.c.l.b16 %v3756
    %v4750 = vunpack.c.h.b16 %v3756
    %v4751 = vunpack.c.l.b16 %v3757
    %v4752 = vunpack.c.h.b16 %v3757
    %v4753 = vunpack.c.l.b16 %v3758
    %v4754 = vunpack.c.h.b16 %v3758
    %v4755 = vunpack.c.l.b16 %v3759
    %v4756 = vunpack.c.h.b16 %v3759
    %v4757 = vunpack.c.l.b16 %v3760
    %v4758 = vunpack.c.h.b16 %v3760
    %v4759 = vunpack.c.l.b16 %v3761
    %v4760 = vunpack.c.h.b16 %v3761
    %v4761 = vunpack.c.l.b16 %v3762
    %v4762 = vunpack.c.h.b16 %v3762
    %v4763 = vunpack.c.l.b16 %v3763
    %v4764 = vunpack.c.h.b16 %v3763
    %v4765 = vunpack.c.l.b16 %v3764
    %v4766 = vunpack.c.h.b16 %v3764
    %v4767 = vunpack.c.l.b16 %v3765
    %v4768 = vunpack.c.h.b16 %v3765
    %v4769 = vunpack.c.l.b16 %v3766
    %v4770 = vunpack.c.h.b16 %v3766
    %v4771 = vunpack.c.l.b16 %v3767
    %v4772 = vunpack.c.h.b16 %v3767
    %v4773 = vunpack.c.l.b16 %v3768
    %v4774 = vunpack.c.h.b16 %v3768
    %v4775 = vunpack.c.l.b16 %v3769
    %v4776 = vunpack.c.h.b16 %v3769
    %v4777 = vunpack.c.l.b16 %v3770
    %v4778 = vunpack.c.h.b16 %v3770
    %v4779 = vunpack.c.l.b16 %v3771
    %v4780 = vunpack.c.h.b16 %v3771
    %v4781 = vunpack.c.l.b16 %v3772
    %v4782 = vunpack.c.h.b16 %v3772
    %v4783 = vunpack.c.l.b16 %v3773
    %v4784 = vunpack.c.h.b16 %v3773
    %v4785 = vunpack.c.l.b16 %v3774
    %v4786 = vunpack.c.h.b16 %v3774
    %v4787 = vunpack.c.l.b16 %v3775
    %v4788 = vunpack.c.h.b16 %v3775
    %v4789 = vunpack.c.l.b16 %v3776
    %v4790 = vunpack.c.h.b16 %v3776
    %v4791 = vpack.c.b16 %v4161, %v4151
    %v4792 = vpack.c.b16 %v4162, %v4152
    %v4793 = vpack.c.b16 %v4163, %v4153
    %v4794 = vpack.c.b16 %v4164, %v4154
    %v4795 = vpack.c.b16 %v4165, %v4155
    %v4796 = vpack.c.b16 %v4166, %v4156
    %v4797 = vpack.c.b16 %v4167, %v4157
    %v4798 = vpack.c.b16 %v4168, %v4158
    %v4799 = vpack.c.b16 %v4169, %v4159
    %v4800 = vpack.c.b16 %v4170, %v4160
    %v4801 = vpack.c.b16 %v4181, %v4171
    %v4802 = vpack.c.b16 %v4182, %v4172
    %v4803 = vpack.c.b16 %v4183, %v4173
    %v4804 = vpack.c.b16 %v4184, %v4174
    %v4805 = vpack.c.b16 %v4185, %v4175
    %v4806 = vpack.c.b16 %v4186, %v4176
    %v4807 = vpack.c.b16 %v4187, %v4177
    %v4808 = vpack.c.b16 %v4188, %v4178
    %v4809 = vpack.c.b16 %v4189, %v4179
    %v4810 = vpack.c.b16 %v4190, %v4180
    %v4811 = vpack.c.b16 %v4201, %v4191
    %v4812 = vpack.c.b16 %v4202, %v4192
    %v4813 = vpack.c.b16 %v4203, %v4193
    %v4814 = vpack.c.b16 %v4204, %v4194
    %v4815 = vpack.c.b16 %v4205, %v4195
    %v4816 = vpack.c.b16 %v4206, %v4196
    %v4817 = vpack.c.b16 %v4207, %v4197
    %v4818 = vpack.c.b16 %v4208, %v4198
    %v4819 = vpack.c.b16 %v4209, %v4199
    %v4820 = vpack.c.b16 %v4210, %v4200
    %v4821 = vpack.c.b16 %v4221, %v4211
    %v4822 = vpack.c.b16 %v4222, %v4212
    %v4823 = vpack.c.b16 %v4223, %v4213
    %v4824 = vpack.c.b16 %v4224, %v4214
    %v4825 = vpack.c.b16 %v4225, %v4215
    %v4826 = vpack.c.b16 %v4226, %v4216
    %v4827 = vpack.c.b16 %v4227, %v4217
    %v4828 = vpack.c.b16 %v4228, %v4218
    %v4829 = vpack.c.b16 %v4229, %v4219
    %v4830 = vpack.c.b16 %v4230, %v4220
    %v4831 = vpack.c.b16 %v4241, %v4231
    %v4832 = vpack.c.b16 %v4242, %v4232
    %v4833 = vpack.c.b16 %v4243, %v4233
    %v4834 = vpack.c.b16 %v4244, %v4234
    %v4835 = vpack.c.b16 %v4245, %v4235
    %v4836 = vpack.c.b16 %v4246, %v4236
    %v4837 = vpack.c.b16 %v4247, %v4237
    %v4838 = vpack.c.b16 %v4248, %v4238
    %v4839 = vpack.c.b16 %v4249, %v4239
    %v4840 = vpack.c.b16 %v4250, %v4240
    %v4841 = vpack.c.b16 %v4261, %v4251
    %v4842 = vpack.c.b16 %v4262, %v4252
    %v4843 = vpack.c.b16 %v4263, %v4253
    %v4844 = vpack.c.b16 %v4264, %v4254
    %v4845 = vpack.c.b16 %v4265, %v4255
    %v4846 = vpack.c.b16 %v4266, %v4256
    %v4847 = vpack.c.b16 %v4267, %v4257
    %v4848 = vpack.c.b16 %v4268, %v4258
    %v4849 = vpack.c.b16 %v4269, %v4259
    %v4850 = vpack.c.b16 %v4270, %v4260
    %v4851 = vpack.c.b16 %v4281, %v4271
    %v4852 = vpack.c.b16 %v4282, %v4272
    %v4853 = vpack.c.b16 %v4283, %v4273
    %v4854 = vpack.c.b16 %v4284, %v4274
    %v4855 = vpack.c.b16 %v4285, %v4275
    %v4856 = vpack.c.b16 %v4286, %v4276
    %v4857 = vpack.c.b16 %v4287, %v4277
    %v4858 = vpack.c.b16 %v4288, %v4278
    %v4859 = vpack.c.b16 %v4289, %v4279
    %v4860 = vpack.c.b16 %v4290, %v4280
    %v4861 = vpack.c.b16 %v4301, %v4291
    %v4862 = vpack.c.b16 %v4302, %v4292
    %v4863 = vpack.c.b16 %v4303, %v4293
    %v4864 = vpack.c.b16 %v4304, %v4294
    %v4865 = vpack.c.b16 %v4305, %v4295
    %v4866 = vpack.c.b16 %v4306, %v4296
    %v4867 = vpack.c.b16 %v4307, %v4297
    %v4868 = vpack.c.b16 %v4308, %v4298
    %v4869 = vpack.c.b16 %v4309, %v4299
    %v4870 = vpack.c.b16 %v4310, %v4300
    %v4871 = vpack.c.b16 %v4321, %v4311
    %v4872 = vpack.c.b16 %v4322, %v4312
    %v4873 = vpack.c.b16 %v4323, %v4313
    %v4874 = vpack.c.b16 %v4324, %v4314
    %v4875 = vpack.c.b16 %v4325, %v4315
    %v4876 = vpack.c.b16 %v4326, %v4316
    %v4877 = vpack.c.b16 %v4327, %v4317
    %v4878 = vpack.c.b16 %v4328, %v4318
    %v4879 = vpack.c.b16 %v4329, %v4319
    %v4880 = vpack.c.b16 %v4330, %v4320
    %v4881 = vpack.c.b16 %v4341, %v4331
    %v4882 = vpack.c.b16 %v4342, %v4332
    %v4883 = vpack.c.b16 %v4343, %v4333
    %v4884 = vpack.c.b16 %v4344, %v4334
    %v4885 = vpack.c.b16 %v4345, %v4335
    %v4886 = vpack.c.b16 %v4346, %v4336
    %v4887 = vpack.c.b16 %v4347, %v4337
    %v4888 = vpack.c.b16 %v4348, %v4338
    %v4889 = vpack.c.b16 %v4349, %v4339
    %v4890 = vpack.c.b16 %v4350, %v4340
    %v4891 = vpack.c.b16 %v4361, %v4351
    %v4892 = vpack.c.b16 %v4362, %v4352
    %v4893 = vpack.c.b16 %v4363, %v4353
    %v4894 = vpack.c.b16 %v4364, %v4354
    %v4895 = vpack.c.b16 %v4365, %v4355
    %v4896 = vpack.c.b16 %v4366, %v4356
    %v4897 = vpack.c.b16 %v4367, %v4357
    %v4898 = vpack.c.b16 %v4368, %v4358
    %v4899 = vpack.c.b16 %v4369, %v4359
    %v4900 = vpack.c.b16 %v4370, %v4360
    %v4901 = vpack.c.b16 %v4381, %v4371
    %v4902 = vpack.c.b16 %v4382, %v4372
    %v4903 = vpack.c.b16 %v4383, %v4373
    %v4904 = vpack.c.b16 %v4384, %v4374
    %v4905 = vpack.c.b16 %v4385, %v4375
    %v4906 = vpack.c.b16 %v4386, %v4376
    %v4907 = vpack.c.b16 %v4387, %v4377
    %v4908 = vpack.c.b16 %v4388, %v4378
    %v4909 = vpack.c.b16 %v4389, %v4379
    %v4910 = vpack.c.b16 %v4390, %v4380
    %v4911 = vpack.c.b16 %v4401, %v4391
    %v4912 = vpack.c.b16 %v4402, %v4392
    %v4913 = vpack.c.b16 %v4403, %v4393
    %v4914 = vpack.c.b16 %v4404, %v4394
    %v4915 = vpack.c.b16 %v4405, %v4395
    %v4916 = vpack.c.b16 %v4406, %v4396
    %v4917 = vpack.c.b16 %v4407, %v4397
    %v4918 = vpack.c.b16 %v4408, %v4398
    %v4919 = vpack.c.b16 %v4409, %v4399
    %v4920 = vpack.c.b16 %v4410, %v4400
    %v4921 = vpack.c.b16 %v4421, %v4411
    %v4922 = vpack.c.b16 %v4422, %v4412
    %v4923 = vpack.c.b16 %v4423, %v4413
    %v4924 = vpack.c.b16 %v4424, %v4414
    %v4925 = vpack.c.b16 %v4425, %v4415
    %v4926 = vpack.c.b16 %v4426, %v4416
    %v4927 = vpack.c.b16 %v4427, %v4417
    %v4928 = vpack.c.b16 %v4428, %v4418
    %v4929 = vpack.c.b16 %v4429, %v4419
    %v4930 = vpack.c.b16 %v4430, %v4420
    %v4931 = vpack.c.b16 %v4441, %v4431
    %v4932 = vpack.c.b16 %v4442, %v4432
    %v4933 = vpack.c.b16 %v4443, %v4433
    %v4934 = vpack.c.b16 %v4444, %v4434
    %v4935 = vpack.c.b16 %v4445, %v4435
    %v4936 = vpack.c.b16 %v4446, %v4436
    %v4937 = vpack.c.b16 %v4447, %v4437
    %v4938 = vpack.c.b16 %v4448, %v4438
    %v4939 = vpack.c.b16 %v4449, %v4439
    %v4940 = vpack.c.b16 %v4450, %v4440
    %v4941 = vpack.c.b16 %v4461, %v4451
    %v4942 = vpack.c.b16 %v4462, %v4452
    %v4943 = vpack.c.b16 %v4463, %v4453
    %v4944 = vpack.c.b16 %v4464, %v4454
    %v4945 = vpack.c.b16 %v4465, %v4455
    %v4946 = vpack.c.b16 %v4466, %v4456
    %v4947 = vpack.c.b16 %v4467, %v4457
    %v4948 = vpack.c.b16 %v4468, %v4458
    %v4949 = vpack.c.b16 %v4469, %v4459
    %v4950 = vpack.c.b16 %v4470, %v4460
    %v4951 = vpack.c.b16 %v4481, %v4471
    %v4952 = vpack.c.b16 %v4482, %v4472
    %v4953 = vpack.c.b16 %v4483, %v4473
    %v4954 = vpack.c.b16 %v4484, %v4474
    %v4955 = vpack.c.b16 %v4485, %v4475
    %v4956 = vpack.c.b16 %v4486, %v4476
    %v4957 = vpack.c.b16 %v4487, %v4477
    %v4958 = vpack.c.b16 %v4488, %v4478
    %v4959 = vpack.c.b16 %v4489, %v4479
    %v4960 = vpack.c.b16 %v4490, %v4480
    %v4961 = vpack.c.b16 %v4501, %v4491
    %v4962 = vpack.c.b16 %v4502, %v4492
    %v4963 = vpack.c.b16 %v4503, %v4493
    %v4964 = vpack.c.b16 %v4504, %v4494
    %v4965 = vpack.c.b16 %v4505, %v4495
    %v4966 = vpack.c.b16 %v4506, %v4496
    %v4967 = vpack.c.b16 %v4507, %v4497
    %v4968 = vpack.c.b16 %v4508, %v4498
    %v4969 = vpack.c.b16 %v4509, %v4499
    %v4970 = vpack.c.b16 %v4510, %v4500
    %v4971 = vpack.c.b16 %v4521, %v4511
    %v4972 = vpack.c.b16 %v4522, %v4512
    %v4973 = vpack.c.b16 %v4523, %v4513
    %v4974 = vpack.c.b16 %v4524, %v4514
    %v4975 = vpack.c.b16 %v4525, %v4515
    %v4976 = vpack.c.b16 %v4526, %v4516
    %v4977 = vpack.c.b16 %v4527, %v4517
    %v4978 = vpack.c.b16 %v4528, %v4518
    %v4979 = vpack.c.b16 %v4529, %v4519
    %v4980 = vpack.c.b16 %v4530, %v4520
    %v4981 = vpack.c.b16 %v4541, %v4531
    %v4982 = vpack.c.b16 %v4542, %v4532
    %v4983 = vpack.c.b16 %v4543, %v4533
    %v4984 = vpack.c.b16 %v4544, %v4534
    %v4985 = vpack.c.b16 %v4545, %v4535
    %v4986 = vpack.c.b16 %v4546, %v4536
    %v4987 = vpack.c.b16 %v4547, %v4537
    %v4988 = vpack.c.b16 %v4548, %v4538
    %v4989 = vpack.c.b16 %v4549, %v4539
    %v4990 = vpack.c.b16 %v4550, %v4540
    %v4991 = vpack.c.b16 %v4561, %v4551
    %v4992 = vpack.c.b16 %v4562, %v4552
    %v4993 = vpack.c.b16 %v4563, %v4553
    %v4994 = vpack.c.b16 %v4564, %v4554
    %v4995 = vpack.c.b16 %v4565, %v4555
    %v4996 = vpack.c.b16 %v4566, %v4556
    %v4997 = vpack.c.b16 %v4567, %v4557
    %v4998 = vpack.c.b16 %v4568, %v4558
    %v4999 = vpack.c.b16 %v4569, %v4559
    %v5000 = vpack.c.b16 %v4570, %v4560
    %v5001 = vpack.c.b16 %v4581, %v4571
    %v5002 = vpack.c.b16 %v4582, %v4572
    %v5003 = vpack.c.b16 %v4583, %v4573
    %v5004 = vpack.c.b16 %v4584, %v4574
    %v5005 = vpack.c.b16 %v4585, %v4575
    %v5006 = vpack.c.b16 %v4586, %v4576
    %v5007 = vpack.c.b16 %v4587, %v4577
    %v5008 = vpack.c.b16 %v4588, %v4578
    %v5009 = vpack.c.b16 %v4589, %v4579
    %v5010 = vpack.c.b16 %v4590, %v4580
    %v5011 = vpack.c.b16 %v4601, %v4591
    %v5012 = vpack.c.b16 %v4602, %v4592
    %v5013 = vpack.c.b16 %v4603, %v4593
    %v5014 = vpack.c.b16 %v4604, %v4594
    %v5015 = vpack.c.b16 %v4605, %v4595
    %v5016 = vpack.c.b16 %v4606, %v4596
    %v5017 = vpack.c.b16 %v4607, %v4597
    %v5018 = vpack.c.b16 %v4608, %v4598
    %v5019 = vpack.c.b16 %v4609, %v4599
    %v5020 = vpack.c.b16 %v4610, %v4600
    %v5021 = vpack.c.b16 %v4621, %v4611
    %v5022 = vpack.c.b16 %v4622, %v4612
    %v5023 = vpack.c.b16 %v4623, %v4613
    %v5024 = vpack.c.b16 %v4624, %v4614
    %v5025 = vpack.c.b16 %v4625, %v4615
    %v5026 = vpack.c.b16 %v4626, %v4616
    %v5027 = vpack.c.b16 %v4627, %v4617
    %v5028 = vpack.c.b16 %v4628, %v4618
    %v5029 = vpack.c.b16 %v4629, %v4619
    %v5030 = vpack.c.b16 %v4630, %v4620
    %v5031 = vpack.c.b16 %v4641, %v4631
    %v5032 = vpack.c.b16 %v4642, %v4632
    %v5033 = vpack.c.b16 %v4643, %v4633
    %v5034 = vpack.c.b16 %v4644, %v4634
    %v5035 = vpack.c.b16 %v4645, %v4635
    %v5036 = vpack.c.b16 %v4646, %v4636
    %v5037 = vpack.c.b16 %v4647, %v4637
    %v5038 = vpack.c.b16 %v4648, %v4638
    %v5039 = vpack.c.b16 %v4649, %v4639
    %v5040 = vpack.c.b16 %v4650, %v4640
    %v5041 = vpack.c.b16 %v4661, %v4651
    %v5042 = vpack.c.b16 %v4662, %v4652
    %v5043 = vpack.c.b16 %v4663, %v4653
    %v5044 = vpack.c.b16 %v4664, %v4654
    %v5045 = vpack.c.b16 %v4665, %v4655
    %v5046 = vpack.c.b16 %v4666, %v4656
    %v5047 = vpack.c.b16 %v4667, %v4657
    %v5048 = vpack.c.b16 %v4668, %v4658
    %v5049 = vpack.c.b16 %v4669, %v4659
    %v5050 = vpack.c.b16 %v4670, %v4660
    %v5051 = vpack.c.b16 %v4681, %v4671
    %v5052 = vpack.c.b16 %v4682, %v4672
    %v5053 = vpack.c.b16 %v4683, %v4673
    %v5054 = vpack.c.b16 %v4684, %v4674
    %v5055 = vpack.c.b16 %v4685, %v4675
    %v5056 = vpack.c.b16 %v4686, %v4676
    %v5057 = vpack.c.b16 %v4687, %v4677
    %v5058 = vpack.c.b16 %v4688, %v4678
    %v5059 = vpack.c.b16 %v4689, %v4679
    %v5060 = vpack.c.b16 %v4690, %v4680
    %v5061 = vpack.c.b16 %v4701, %v4691
    %v5062 = vpack.c.b16 %v4702, %v4692
    %v5063 = vpack.c.b16 %v4703, %v4693
    %v5064 = vpack.c.b16 %v4704, %v4694
    %v5065 = vpack.c.b16 %v4705, %v4695
    %v5066 = vpack.c.b16 %v4706, %v4696
    %v5067 = vpack.c.b16 %v4707, %v4697
    %v5068 = vpack.c.b16 %v4708, %v4698
    %v5069 = vpack.c.b16 %v4709, %v4699
    %v5070 = vpack.c.b16 %v4710, %v4700
    %v5071 = vpack.c.b16 %v4721, %v4711
    %v5072 = vpack.c.b16 %v4722, %v4712
    %v5073 = vpack.c.b16 %v4723, %v4713
    %v5074 = vpack.c.b16 %v4724, %v4714
    %v5075 = vpack.c.b16 %v4725, %v4715
    %v5076 = vpack.c.b16 %v4726, %v4716
    %v5077 = vpack.c.b16 %v4727, %v4717
    %v5078 = vpack.c.b16 %v4728, %v4718
    %v5079 = vpack.c.b16 %v4729, %v4719
    %v5080 = vpack.c.b16 %v4730, %v4720
    %v5081 = vpack.c.b16 %v4741, %v4731
    %v5082 = vpack.c.b16 %v4742, %v4732
    %v5083 = vpack.c.b16 %v4743, %v4733
    %v5084 = vpack.c.b16 %v4744, %v4734
    %v5085 = vpack.c.b16 %v4745, %v4735
    %v5086 = vpack.c.b16 %v4746, %v4736
    %v5087 = vpack.c.b16 %v4747, %v4737
    %v5088 = vpack.c.b16 %v4748, %v4738
    %v5089 = vpack.c.b16 %v4749, %v4739
    %v5090 = vpack.c.b16 %v4750, %v4740
    %v5091 = vpack.c.b16 %v4761, %v4751
    %v5092 = vpack.c.b16 %v4762, %v4752
    %v5093 = vpack.c.b16 %v4763, %v4753
    %v5094 = vpack.c.b16 %v4764, %v4754
    %v5095 = vpack.c.b16 %v4765, %v4755
    %v5096 = vpack.c.b16 %v4766, %v4756
    %v5097 = vpack.c.b16 %v4767, %v4757
    %v5098 = vpack.c.b16 %v4768, %v4758
    %v5099 = vpack.c.b16 %v4769, %v4759
    %v5100 = vpack.c.b16 %v4770, %v4760
    %v5101 = vpack.c.b16 %v4781, %v4771
    %v5102 = vpack.c.b16 %v4782, %v4772
    %v5103 = vpack.c.b16 %v4783, %v4773
    %v5104 = vpack.c.b16 %v4784, %v4774
    %v5105 = vpack.c.b16 %v4785, %v4775
    %v5106 = vpack.c.b16 %v4786, %v4776
    %v5107 = vpack.c.b16 %v4787, %v4777
    %v5108 = vpack.c.b16 %v4788, %v4778
    %v5109 = vpack.c.b16 %v4789, %v4779
    %v5110 = vpack.c.b16 %v4790, %v4780
    %5431 = vmatprep.subr.bf16.mxu0 %v4862
    %5432 = vmatpush1.bf16.msra.mxu0 %v4861
    %5433 = vmatprep.subr.bf16.mxu0 %v4852
    %5434 = vmatpush1.bf16.msra.mxu0 %v4851
    %5435 = vmatprep.subr.bf16.mxu0 %v4842
    %5436 = vmatpush1.bf16.msra.mxu0 %v4841
    %5437 = vmatprep.subr.bf16.mxu0 %v4832
    %5438 = vmatpush1.bf16.msra.mxu0 %v4831
    %5439 = vmatprep.subr.bf16.mxu0 %v4822
    %5440 = vmatpush1.bf16.msra.mxu0 %v4821
    %5441 = vmatprep.subr.bf16.mxu0 %v4812
    %5442 = vmatpush1.bf16.msra.mxu0 %v4811
    %5443 = vmatprep.subr.bf16.mxu0 %v4802
    %5444 = vmatpush1.bf16.msra.mxu0 %v4801
    %5445 = vmatprep.subr.bf16.mxu0 %v4792
    %5446 = vmatpush1.bf16.msra.mxu0 %v4791
    %5447 = vmatprep.subr.bf16.mxu0 %v4942
    %5448 = vmatpush2.bf16.msra.mxu0 %v4941
    %5449 = vmatprep.subr.bf16.mxu0 %v4932
    %5450 = vmatpush2.bf16.msra.mxu0 %v4931
    %5451 = vmatprep.subr.bf16.mxu0 %v4922
    %5452 = vmatpush2.bf16.msra.mxu0 %v4921
    %5453 = vmatprep.subr.bf16.mxu0 %v4912
    %5454 = vmatpush2.bf16.msra.mxu0 %v4911
    %5455 = vmatprep.subr.bf16.mxu0 %v4902
    %5456 = vmatpush2.bf16.msra.mxu0 %v4901
    %5457 = vmatprep.subr.bf16.mxu0 %v4892
    %5458 = vmatpush2.bf16.msra.mxu0 %v4891
    %5459 = vmatprep.subr.bf16.mxu0 %v4882
    %5460 = vmatpush2.bf16.msra.mxu0 %v4881
    %5461 = vmatprep.subr.bf16.mxu0 %v4872
    %5462 = vmatpush2.bf16.msra.mxu0 %v4871
    %5463 = vmatprep.mubr.bf16.mxu0 %v3454
    %5464 = vmatmul.mubr.bf16.gmra.mxu0 %v3453
    %v5465 = vpop.f32.mrf.mxu0
    %v5466 = vadd.f32 %v3784, %v5465
    %v5467 = vpop.f32.mrf.mxu0
    %v5468 = vadd.f32 %v3788, %v5467
    %v5469 = vpop.f32.mrf.mxu0
    %v5470 = vpop.f32.mrf.mxu0
    %5471 = vdwg.mxu0
    %5472 = vmatprep.subr.bf16.mxu0 %v5022
    %5473 = vmatpush1.bf16.msra.mxu0 %v5021
    %5474 = vmatprep.subr.bf16.mxu0 %v5012
    %5475 = vmatpush1.bf16.msra.mxu0 %v5011
    %5476 = vmatprep.subr.bf16.mxu0 %v5002
    %5477 = vmatpush1.bf16.msra.mxu0 %v5001
    %5478 = vmatprep.subr.bf16.mxu0 %v4992
    %5479 = vmatpush1.bf16.msra.mxu0 %v4991
    %5480 = vmatprep.subr.bf16.mxu0 %v4982
    %5481 = vmatpush1.bf16.msra.mxu0 %v4981
    %5482 = vmatprep.subr.bf16.mxu0 %v4972
    %5483 = vmatpush1.bf16.msra.mxu0 %v4971
    %5484 = vmatprep.subr.bf16.mxu0 %v4962
    %5485 = vmatpush1.bf16.msra.mxu0 %v4961
    %5486 = vmatprep.subr.bf16.mxu0 %v4952
    %5487 = vmatpush1.bf16.msra.mxu0 %v4951
    %5488 = vmatprep.subr.bf16.mxu0 %v5102
    %5489 = vmatpush2.bf16.msra.mxu0 %v5101
    %5490 = vmatprep.subr.bf16.mxu0 %v5092
    %5491 = vmatpush2.bf16.msra.mxu0 %v5091
    %5492 = vmatprep.subr.bf16.mxu0 %v5082
    %5493 = vmatpush2.bf16.msra.mxu0 %v5081
    %5494 = vmatprep.subr.bf16.mxu0 %v5072
    %5495 = vmatpush2.bf16.msra.mxu0 %v5071
    %5496 = vmatprep.subr.bf16.mxu0 %v5062
    %5497 = vmatpush2.bf16.msra.mxu0 %v5061
    %5498 = vmatprep.subr.bf16.mxu0 %v5052
    %5499 = vmatpush2.bf16.msra.mxu0 %v5051
    %5500 = vmatprep.subr.bf16.mxu0 %v5042
    %5501 = vmatpush2.bf16.msra.mxu0 %v5041
    %5502 = vmatprep.subr.bf16.mxu0 %v5032
    %5503 = vmatpush2.bf16.msra.mxu0 %v5031
    %5504 = vmatprep.mubr.bf16.mxu0 %v3456
    %5505 = vmatmul.mubr.bf16.gmra.mxu0 %v3455
    %v5506 = vpop.f32.mrf.mxu0
    %v5507 = vadd.f32 %v5466, %v5506
    %v5508 = vpop.f32.mrf.mxu0
    %v5509 = vadd.f32 %v5468, %v5508
    %v5510 = vpop.f32.mrf.mxu0
    %v5511 = vpop.f32.mrf.mxu0
    %5512 = vdwg.mxu0
    %5513 = vmatprep.subr.bf16.mxu0 %v4864
    %5514 = vmatpush1.bf16.msra.mxu0 %v4863
    %5515 = vmatprep.subr.bf16.mxu0 %v4854
    %5516 = vmatpush1.bf16.msra.mxu0 %v4853
    %5517 = vmatprep.subr.bf16.mxu0 %v4844
    %5518 = vmatpush1.bf16.msra.mxu0 %v4843
    %5519 = vmatprep.subr.bf16.mxu0 %v4834
    %5520 = vmatpush1.bf16.msra.mxu0 %v4833
    %5521 = vmatprep.subr.bf16.mxu0 %v4824
    %5522 = vmatpush1.bf16.msra.mxu0 %v4823
    %5523 = vmatprep.subr.bf16.mxu0 %v4814
    %5524 = vmatpush1.bf16.msra.mxu0 %v4813
    %5525 = vmatprep.subr.bf16.mxu0 %v4804
    %5526 = vmatpush1.bf16.msra.mxu0 %v4803
    %5527 = vmatprep.subr.bf16.mxu0 %v4794
    %5528 = vmatpush1.bf16.msra.mxu0 %v4793
    %5529 = vmatprep.subr.bf16.mxu0 %v4944
    %5530 = vmatpush2.bf16.msra.mxu0 %v4943
    %5531 = vmatprep.subr.bf16.mxu0 %v4934
    %5532 = vmatpush2.bf16.msra.mxu0 %v4933
    %5533 = vmatprep.subr.bf16.mxu0 %v4924
    %5534 = vmatpush2.bf16.msra.mxu0 %v4923
    %5535 = vmatprep.subr.bf16.mxu0 %v4914
    %5536 = vmatpush2.bf16.msra.mxu0 %v4913
    %5537 = vmatprep.subr.bf16.mxu0 %v4904
    %5538 = vmatpush2.bf16.msra.mxu0 %v4903
    %5539 = vmatprep.subr.bf16.mxu0 %v4894
    %5540 = vmatpush2.bf16.msra.mxu0 %v4893
    %5541 = vmatprep.subr.bf16.mxu0 %v4884
    %5542 = vmatpush2.bf16.msra.mxu0 %v4883
    %5543 = vmatprep.subr.bf16.mxu0 %v4874
    %5544 = vmatpush2.bf16.msra.mxu0 %v4873
    %5545 = vmatprep.mubr.bf16.mxu0 %v3454
    %5546 = vmatmul.mubr.bf16.gmra.mxu0 %v3453
    %v5547 = vpop.f32.mrf.mxu0
    %v5548 = vadd.f32 %v3792, %v5547
    %v5549 = vpop.f32.mrf.mxu0
    %v5550 = vadd.f32 %v3796, %v5549
    %v5551 = vpop.f32.mrf.mxu0
    %v5552 = vpop.f32.mrf.mxu0
    %5553 = vdwg.mxu0
    %5554 = vmatprep.subr.bf16.mxu0 %v5024
    %5555 = vmatpush1.bf16.msra.mxu0 %v5023
    %5556 = vmatprep.subr.bf16.mxu0 %v5014
    %5557 = vmatpush1.bf16.msra.mxu0 %v5013
    %5558 = vmatprep.subr.bf16.mxu0 %v5004
    %5559 = vmatpush1.bf16.msra.mxu0 %v5003
    %5560 = vmatprep.subr.bf16.mxu0 %v4994
    %5561 = vmatpush1.bf16.msra.mxu0 %v4993
    %5562 = vmatprep.subr.bf16.mxu0 %v4984
    %5563 = vmatpush1.bf16.msra.mxu0 %v4983
    %5564 = vmatprep.subr.bf16.mxu0 %v4974
    %5565 = vmatpush1.bf16.msra.mxu0 %v4973
    %5566 = vmatprep.subr.bf16.mxu0 %v4964
    %5567 = vmatpush1.bf16.msra.mxu0 %v4963
    %5568 = vmatprep.subr.bf16.mxu0 %v4954
    %5569 = vmatpush1.bf16.msra.mxu0 %v4953
    %5570 = vmatprep.subr.bf16.mxu0 %v5104
    %5571 = vmatpush2.bf16.msra.mxu0 %v5103
    %5572 = vmatprep.subr.bf16.mxu0 %v5094
    %5573 = vmatpush2.bf16.msra.mxu0 %v5093
    %5574 = vmatprep.subr.bf16.mxu0 %v5084
    %5575 = vmatpush2.bf16.msra.mxu0 %v5083
    %5576 = vmatprep.subr.bf16.mxu0 %v5074
    %5577 = vmatpush2.bf16.msra.mxu0 %v5073
    %5578 = vmatprep.subr.bf16.mxu0 %v5064
    %5579 = vmatpush2.bf16.msra.mxu0 %v5063
    %5580 = vmatprep.subr.bf16.mxu0 %v5054
    %5581 = vmatpush2.bf16.msra.mxu0 %v5053
    %5582 = vmatprep.subr.bf16.mxu0 %v5044
    %5583 = vmatpush2.bf16.msra.mxu0 %v5043
    %5584 = vmatprep.subr.bf16.mxu0 %v5034
    %5585 = vmatpush2.bf16.msra.mxu0 %v5033
    %5586 = vmatprep.mubr.bf16.mxu0 %v3456
    %5587 = vmatmul.mubr.bf16.gmra.mxu0 %v3455
    %v5588 = vpop.f32.mrf.mxu0
    %v5589 = vadd.f32 %v5548, %v5588
    %v5590 = vpop.f32.mrf.mxu0
    %v5591 = vadd.f32 %v5550, %v5590
    %v5592 = vpop.f32.mrf.mxu0
    %v5593 = vpop.f32.mrf.mxu0
    %5594 = vdwg.mxu0
    %5595 = vmatprep.subr.bf16.mxu0 %v4866
    %5596 = vmatpush1.bf16.msra.mxu0 %v4865
    %5597 = vmatprep.subr.bf16.mxu0 %v4856
    %5598 = vmatpush1.bf16.msra.mxu0 %v4855
    %5599 = vmatprep.subr.bf16.mxu0 %v4846
    %5600 = vmatpush1.bf16.msra.mxu0 %v4845
    %5601 = vmatprep.subr.bf16.mxu0 %v4836
    %5602 = vmatpush1.bf16.msra.mxu0 %v4835
    %5603 = vmatprep.subr.bf16.mxu0 %v4826
    %5604 = vmatpush1.bf16.msra.mxu0 %v4825
    %5605 = vmatprep.subr.bf16.mxu0 %v4816
    %5606 = vmatpush1.bf16.msra.mxu0 %v4815
    %5607 = vmatprep.subr.bf16.mxu0 %v4806
    %5608 = vmatpush1.bf16.msra.mxu0 %v4805
    %5609 = vmatprep.subr.bf16.mxu0 %v4796
    %5610 = vmatpush1.bf16.msra.mxu0 %v4795
    %5611 = vmatprep.subr.bf16.mxu0 %v4946
    %5612 = vmatpush2.bf16.msra.mxu0 %v4945
    %5613 = vmatprep.subr.bf16.mxu0 %v4936
    %5614 = vmatpush2.bf16.msra.mxu0 %v4935
    %5615 = vmatprep.subr.bf16.mxu0 %v4926
    %5616 = vmatpush2.bf16.msra.mxu0 %v4925
    %5617 = vmatprep.subr.bf16.mxu0 %v4916
    %5618 = vmatpush2.bf16.msra.mxu0 %v4915
    %5619 = vmatprep.subr.bf16.mxu0 %v4906
    %5620 = vmatpush2.bf16.msra.mxu0 %v4905
    %5621 = vmatprep.subr.bf16.mxu0 %v4896
    %5622 = vmatpush2.bf16.msra.mxu0 %v4895
    %5623 = vmatprep.subr.bf16.mxu0 %v4886
    %5624 = vmatpush2.bf16.msra.mxu0 %v4885
    %5625 = vmatprep.subr.bf16.mxu0 %v4876
    %5626 = vmatpush2.bf16.msra.mxu0 %v4875
    %5627 = vmatprep.mubr.bf16.mxu0 %v3454
    %5628 = vmatmul.mubr.bf16.gmra.mxu0 %v3453
    %v5629 = vpop.f32.mrf.mxu0
    %v5630 = vadd.f32 %v3800, %v5629
    %v5631 = vpop.f32.mrf.mxu0
    %v5632 = vadd.f32 %v3804, %v5631
    %v5633 = vpop.f32.mrf.mxu0
    %v5634 = vpop.f32.mrf.mxu0
    %5635 = vdwg.mxu0
    %5636 = vmatprep.subr.bf16.mxu0 %v5026
    %5637 = vmatpush1.bf16.msra.mxu0 %v5025
    %5638 = vmatprep.subr.bf16.mxu0 %v5016
    %5639 = vmatpush1.bf16.msra.mxu0 %v5015
    %5640 = vmatprep.subr.bf16.mxu0 %v5006
    %5641 = vmatpush1.bf16.msra.mxu0 %v5005
    %5642 = vmatprep.subr.bf16.mxu0 %v4996
    %5643 = vmatpush1.bf16.msra.mxu0 %v4995
    %5644 = vmatprep.subr.bf16.mxu0 %v4986
    %5645 = vmatpush1.bf16.msra.mxu0 %v4985
    %5646 = vmatprep.subr.bf16.mxu0 %v4976
    %5647 = vmatpush1.bf16.msra.mxu0 %v4975
    %5648 = vmatprep.subr.bf16.mxu0 %v4966
    %5649 = vmatpush1.bf16.msra.mxu0 %v4965
    %5650 = vmatprep.subr.bf16.mxu0 %v4956
    %5651 = vmatpush1.bf16.msra.mxu0 %v4955
    %5652 = vmatprep.subr.bf16.mxu0 %v5106
    %5653 = vmatpush2.bf16.msra.mxu0 %v5105
    %5654 = vmatprep.subr.bf16.mxu0 %v5096
    %5655 = vmatpush2.bf16.msra.mxu0 %v5095
    %5656 = vmatprep.subr.bf16.mxu0 %v5086
    %5657 = vmatpush2.bf16.msra.mxu0 %v5085
    %5658 = vmatprep.subr.bf16.mxu0 %v5076
    %5659 = vmatpush2.bf16.msra.mxu0 %v5075
    %5660 = vmatprep.subr.bf16.mxu0 %v5066
    %5661 = vmatpush2.bf16.msra.mxu0 %v5065
    %5662 = vmatprep.subr.bf16.mxu0 %v5056
    %5663 = vmatpush2.bf16.msra.mxu0 %v5055
    %5664 = vmatprep.subr.bf16.mxu0 %v5046
    %5665 = vmatpush2.bf16.msra.mxu0 %v5045
    %5666 = vmatprep.subr.bf16.mxu0 %v5036
    %5667 = vmatpush2.bf16.msra.mxu0 %v5035
    %5668 = vmatprep.mubr.bf16.mxu0 %v3456
    %5669 = vmatmul.mubr.bf16.gmra.mxu0 %v3455
    %v5670 = vpop.f32.mrf.mxu0
    %v5671 = vadd.f32 %v5630, %v5670
    %v5672 = vpop.f32.mrf.mxu0
    %v5673 = vadd.f32 %v5632, %v5672
    %v5674 = vpop.f32.mrf.mxu0
    %v5675 = vpop.f32.mrf.mxu0
    %5676 = vdwg.mxu0
    %5677 = vmatprep.subr.bf16.mxu0 %v4868
    %5678 = vmatpush1.bf16.msra.mxu0 %v4867
    %5679 = vmatprep.subr.bf16.mxu0 %v4858
    %5680 = vmatpush1.bf16.msra.mxu0 %v4857
    %5681 = vmatprep.subr.bf16.mxu0 %v4848
    %5682 = vmatpush1.bf16.msra.mxu0 %v4847
    %5683 = vmatprep.subr.bf16.mxu0 %v4838
    %5684 = vmatpush1.bf16.msra.mxu0 %v4837
    %5685 = vmatprep.subr.bf16.mxu0 %v4828
    %5686 = vmatpush1.bf16.msra.mxu0 %v4827
    %5687 = vmatprep.subr.bf16.mxu0 %v4818
    %5688 = vmatpush1.bf16.msra.mxu0 %v4817
    %5689 = vmatprep.subr.bf16.mxu0 %v4808
    %5690 = vmatpush1.bf16.msra.mxu0 %v4807
    %5691 = vmatprep.subr.bf16.mxu0 %v4798
    %5692 = vmatpush1.bf16.msra.mxu0 %v4797
    %5693 = vmatprep.subr.bf16.mxu0 %v4948
    %5694 = vmatpush2.bf16.msra.mxu0 %v4947
    %5695 = vmatprep.subr.bf16.mxu0 %v4938
    %5696 = vmatpush2.bf16.msra.mxu0 %v4937
    %5697 = vmatprep.subr.bf16.mxu0 %v4928
    %5698 = vmatpush2.bf16.msra.mxu0 %v4927
    %5699 = vmatprep.subr.bf16.mxu0 %v4918
    %5700 = vmatpush2.bf16.msra.mxu0 %v4917
    %5701 = vmatprep.subr.bf16.mxu0 %v4908
    %5702 = vmatpush2.bf16.msra.mxu0 %v4907
    %5703 = vmatprep.subr.bf16.mxu0 %v4898
    %5704 = vmatpush2.bf16.msra.mxu0 %v4897
    %5705 = vmatprep.subr.bf16.mxu0 %v4888
    %5706 = vmatpush2.bf16.msra.mxu0 %v4887
    %5707 = vmatprep.subr.bf16.mxu0 %v4878
    %5708 = vmatpush2.bf16.msra.mxu0 %v4877
    %5709 = vmatprep.mubr.bf16.mxu0 %v3454
    %5710 = vmatmul.mubr.bf16.gmra.mxu0 %v3453
    %v5711 = vpop.f32.mrf.mxu0
    %v5712 = vadd.f32 %v3808, %v5711
    %v5713 = vpop.f32.mrf.mxu0
    %v5714 = vadd.f32 %v3812, %v5713
    %v5715 = vpop.f32.mrf.mxu0
    %v5716 = vpop.f32.mrf.mxu0
    %5717 = vdwg.mxu0
    %5718 = vmatprep.subr.bf16.mxu0 %v5028
    %5719 = vmatpush1.bf16.msra.mxu0 %v5027
    %5720 = vmatprep.subr.bf16.mxu0 %v5018
    %5721 = vmatpush1.bf16.msra.mxu0 %v5017
    %5722 = vmatprep.subr.bf16.mxu0 %v5008
    %5723 = vmatpush1.bf16.msra.mxu0 %v5007
    %5724 = vmatprep.subr.bf16.mxu0 %v4998
    %5725 = vmatpush1.bf16.msra.mxu0 %v4997
    %5726 = vmatprep.subr.bf16.mxu0 %v4988
    %5727 = vmatpush1.bf16.msra.mxu0 %v4987
    %5728 = vmatprep.subr.bf16.mxu0 %v4978
    %5729 = vmatpush1.bf16.msra.mxu0 %v4977
    %5730 = vmatprep.subr.bf16.mxu0 %v4968
    %5731 = vmatpush1.bf16.msra.mxu0 %v4967
    %5732 = vmatprep.subr.bf16.mxu0 %v4958
    %5733 = vmatpush1.bf16.msra.mxu0 %v4957
    %5734 = vmatprep.subr.bf16.mxu0 %v5108
    %5735 = vmatpush2.bf16.msra.mxu0 %v5107
    %5736 = vmatprep.subr.bf16.mxu0 %v5098
    %5737 = vmatpush2.bf16.msra.mxu0 %v5097
    %5738 = vmatprep.subr.bf16.mxu0 %v5088
    %5739 = vmatpush2.bf16.msra.mxu0 %v5087
    %5740 = vmatprep.subr.bf16.mxu0 %v5078
    %5741 = vmatpush2.bf16.msra.mxu0 %v5077
    %5742 = vmatprep.subr.bf16.mxu0 %v5068
    %5743 = vmatpush2.bf16.msra.mxu0 %v5067
    %5744 = vmatprep.subr.bf16.mxu0 %v5058
    %5745 = vmatpush2.bf16.msra.mxu0 %v5057
    %5746 = vmatprep.subr.bf16.mxu0 %v5048
    %5747 = vmatpush2.bf16.msra.mxu0 %v5047
    %5748 = vmatprep.subr.bf16.mxu0 %v5038
    %5749 = vmatpush2.bf16.msra.mxu0 %v5037
    %5750 = vmatprep.mubr.bf16.mxu0 %v3456
    %5751 = vmatmul.mubr.bf16.gmra.mxu0 %v3455
    %v5752 = vpop.f32.mrf.mxu0
    %v5753 = vadd.f32 %v5712, %v5752
    %v5754 = vpop.f32.mrf.mxu0
    %v5755 = vadd.f32 %v5714, %v5754
    %v5756 = vpop.f32.mrf.mxu0
    %v5757 = vpop.f32.mrf.mxu0
    %5758 = vdwg.mxu0
    %5759 = vmatprep.subr.bf16.mxu0 %v4870
    %5760 = vmatpush1.bf16.msra.mxu0 %v4869
    %5761 = vmatprep.subr.bf16.mxu0 %v4860
    %5762 = vmatpush1.bf16.msra.mxu0 %v4859
    %5763 = vmatprep.subr.bf16.mxu0 %v4850
    %5764 = vmatpush1.bf16.msra.mxu0 %v4849
    %5765 = vmatprep.subr.bf16.mxu0 %v4840
    %5766 = vmatpush1.bf16.msra.mxu0 %v4839
    %5767 = vmatprep.subr.bf16.mxu0 %v4830
    %5768 = vmatpush1.bf16.msra.mxu0 %v4829
    %5769 = vmatprep.subr.bf16.mxu0 %v4820
    %5770 = vmatpush1.bf16.msra.mxu0 %v4819
    %5771 = vmatprep.subr.bf16.mxu0 %v4810
    %5772 = vmatpush1.bf16.msra.mxu0 %v4809
    %5773 = vmatprep.subr.bf16.mxu0 %v4800
    %5774 = vmatpush1.bf16.msra.mxu0 %v4799
    %5775 = vmatprep.subr.bf16.mxu0 %v4950
    %5776 = vmatpush2.bf16.msra.mxu0 %v4949
    %5777 = vmatprep.subr.bf16.mxu0 %v4940
    %5778 = vmatpush2.bf16.msra.mxu0 %v4939
    %5779 = vmatprep.subr.bf16.mxu0 %v4930
    %5780 = vmatpush2.bf16.msra.mxu0 %v4929
    %5781 = vmatprep.subr.bf16.mxu0 %v4920
    %5782 = vmatpush2.bf16.msra.mxu0 %v4919
    %5783 = vmatprep.subr.bf16.mxu0 %v4910
    %5784 = vmatpush2.bf16.msra.mxu0 %v4909
    %5785 = vmatprep.subr.bf16.mxu0 %v4900
    %5786 = vmatpush2.bf16.msra.mxu0 %v4899
    %5787 = vmatprep.subr.bf16.mxu0 %v4890
    %5788 = vmatpush2.bf16.msra.mxu0 %v4889
    %5789 = vmatprep.subr.bf16.mxu0 %v4880
    %5790 = vmatpush2.bf16.msra.mxu0 %v4879
    %5791 = vmatprep.mubr.bf16.mxu0 %v3454
    %5792 = vmatmul.mubr.bf16.gmra.mxu0 %v3453
    %v5793 = vpop.f32.mrf.mxu0
    %v5794 = vadd.f32 %v3816, %v5793
    %v5795 = vpop.f32.mrf.mxu0
    %v5796 = vadd.f32 %v3820, %v5795
    %v5797 = vpop.f32.mrf.mxu0
    %v5798 = vpop.f32.mrf.mxu0
    %5799 = vdwg.mxu0
    %5800 = vmatprep.subr.bf16.mxu0 %v5030
    %5801 = vmatpush1.bf16.msra.mxu0 %v5029
    %5802 = vmatprep.subr.bf16.mxu0 %v5020
    %5803 = vmatpush1.bf16.msra.mxu0 %v5019
    %5804 = vmatprep.subr.bf16.mxu0 %v5010
    %5805 = vmatpush1.bf16.msra.mxu0 %v5009
    %5806 = vmatprep.subr.bf16.mxu0 %v5000
    %5807 = vmatpush1.bf16.msra.mxu0 %v4999
    %5808 = vmatprep.subr.bf16.mxu0 %v4990
    %5809 = vmatpush1.bf16.msra.mxu0 %v4989
    %5810 = vmatprep.subr.bf16.mxu0 %v4980
    %5811 = vmatpush1.bf16.msra.mxu0 %v4979
    %5812 = vmatprep.subr.bf16.mxu0 %v4970
    %5813 = vmatpush1.bf16.msra.mxu0 %v4969
    %5814 = vmatprep.subr.bf16.mxu0 %v4960
    %5815 = vmatpush1.bf16.msra.mxu0 %v4959
    %5816 = vmatprep.subr.bf16.mxu0 %v5110
    %5817 = vmatpush2.bf16.msra.mxu0 %v5109
    %5818 = vmatprep.subr.bf16.mxu0 %v5100
    %5819 = vmatpush2.bf16.msra.mxu0 %v5099
    %5820 = vmatprep.subr.bf16.mxu0 %v5090
    %5821 = vmatpush2.bf16.msra.mxu0 %v5089
    %5822 = vmatprep.subr.bf16.mxu0 %v5080
    %5823 = vmatpush2.bf16.msra.mxu0 %v5079
    %5824 = vmatprep.subr.bf16.mxu0 %v5070
    %5825 = vmatpush2.bf16.msra.mxu0 %v5069
    %5826 = vmatprep.subr.bf16.mxu0 %v5060
    %5827 = vmatpush2.bf16.msra.mxu0 %v5059
    %5828 = vmatprep.subr.bf16.mxu0 %v5050
    %5829 = vmatpush2.bf16.msra.mxu0 %v5049
    %5830 = vmatprep.subr.bf16.mxu0 %v5040
    %5831 = vmatpush2.bf16.msra.mxu0 %v5039
    %5832 = vmatprep.mubr.bf16.mxu0 %v3456
    %5833 = vmatmul.mubr.bf16.gmra.mxu0 %v3455
    %v5834 = vpop.f32.mrf.mxu0
    %v5835 = vadd.f32 %v5794, %v5834
    %v5836 = vpop.f32.mrf.mxu0
    %v5837 = vadd.f32 %v5796, %v5836
    %v5838 = vpop.f32.mrf.mxu0
    %v5839 = vpop.f32.mrf.mxu0
    %5840 = vdwg.mxu0
    %5841 = vst [vmem:[%s16] sm:$0xff] %v5507
    %5842 = vst [vmem:[%s16 + $0x8] sm:$0xff] %v5509
    %5843 = vst [vmem:[%s16 + $0x10] sm:$0xff] %v5589
    %5844 = vst [vmem:[%s16 + $0x18] sm:$0xff] %v5591
    %5845 = vst [vmem:[%s16 + $0x20] sm:$0xff] %v5671
    %5846 = vst [vmem:[%s16 + $0x28] sm:$0xff] %v5673
    %5847 = vst [vmem:[%s16 + $0x30] sm:$0xff] %v5753
    %5848 = vst [vmem:[%s16 + $0x38] sm:$0xff] %v5755
    %5849 = vst [vmem:[%s16 + $0x40] sm:$0xff] %v5835
    %5850 = vst [vmem:[%s16 + $0x48] sm:$0xff] %v5837
    // Predicated region
    $region106: #{vae_forward.1} parent=1 // pred_check
      _
    $region107: #{vae_forward.1} parent=1 // pred_check_branch
      %5852 = sbr.rel (0) target = $region109
    $region108: #{vae_forward.1} parent=1 // pred_region
      _
    $region109: #{vae_forward.1} parent=1 // pred_fallthru
      _
    // Predicated region
    $region110: #{vae_forward.1} parent=1 // pred_check
      _
    $region111: #{vae_forward.1} parent=1 // pred_check_branch
      %5854 = sbr.rel (0) target = $region113
    $region112: #{vae_forward.1} parent=1 // pred_region
      _
    $region113: #{vae_forward.1} parent=1 // pred_fallthru
      _
    %5855 = vsyncpa [#allocation3], 1
    %5856 = vsyncpa [#allocation5], 1
    %5857 = vsyncpa [#allocation8], 1
    %5858 = vsyncpa [#allocation11], 1
    %5859 = vsyncpa [#allocation14], 1
    %5860 = vsyncpa [#allocation17], 1

</llo_original>
